<compile_context>
chip_gen: v6e
topology: v6e:2x2x1
jax: 0.10.0
libtpu: 0.0.40
codegen_flags: <defaults>
</compile_context>

<pallas_src>
import functools

import jax
import jax.numpy as jnp
import numpy as np
from jax.experimental import pallas as pl
from jax.experimental.pallas import tpu as pltpu


# ----------------------------------------------------------------------------
# Layout constants (the classifier hard-codes 28x28 inputs -> 7x7 features).
# ----------------------------------------------------------------------------
H1 = 28                       # block-1 spatial size
HP1, WP1 = H1 + 2, H1 + 2     # padded ("same" conv padding baked into the layout)
S1 = HP1 * WP1                # 900 flat padded positions / sample (block 1)
H2 = 14
HP2, WP2 = H2 + 2, H2 + 2
S2 = HP2 * WP2                # 256 (block 2)
H3 = 7
Q3 = H3 * H3                  # 49 pooled features / channel / sample


def _pad_mask(nb, hp, wp, h):
    """(1, nb*hp*wp) 0/1 mask of the interior (non-padding) positions."""
    m = np.zeros((hp, wp), np.float32)
    m[1:1 + h, 1:1 + h] = 1.0
    return np.tile(m.reshape(-1), nb).reshape(1, nb * hp * wp)


def _pool_select_to_padded(hp_in, wp_in, hp_out, wp_out, h_out):
    """(S_in, S_out) 0/1 matrix: column (r2,c2) of the NEXT padded layout picks the
    top-left anchor (2*r2-1, 2*c2-1) of its 2x2 pooling window; padding columns
    are all-zero, so the next conv's zero padding comes for free."""
    P = np.zeros((hp_in * wp_in, hp_out * wp_out), np.float32)
    for r in range(1, 1 + h_out):
        for c in range(1, 1 + h_out):
            P[(2 * r - 1) * wp_in + (2 * c - 1), r * wp_out + c] = 1.0
    return P


def _pool_select_to_dense(hp_in, wp_in, h_out):
    """(S_in, h_out*h_out) 0/1 matrix picking 2x2-window anchors, row-major."""
    P = np.zeros((hp_in * wp_in, h_out * h_out), np.float32)
    for i in range(h_out):
        for j in range(h_out):
            P[(1 + 2 * i) * wp_in + (1 + 2 * j), i * h_out + j] = 1.0
    return P


# ----------------------------------------------------------------------------
# Fused Pallas kernel: the whole network for one batch chunk.
# ----------------------------------------------------------------------------
def _fused_kernel(x_ref, w1a_ref, b1a_ref, w1b_ref, b1b_ref,
                  w2a_ref, b2a_ref, w2b_ref, b2b_ref,
                  m1_ref, m2_ref, p1_ref, p2_ref, fcw_ref, fcb_ref,
                  o_ref, *, nb, hu):
    f1 = nb * S1
    f2 = nb * S2

    def conv3x3(a, w_ref, b_ref, wp, flat, relu, mask):
        """3x3 'same' conv in the flat padded layout: (Cin, flat) -> (hu, flat)."""
        cin = a.shape[0]
        guard = wp + 1
        zg = jnp.zeros((cin, guard), a.dtype)
        ag = jnp.concatenate([zg, a, zg], axis=1)            # (cin, flat + 2*guard)
        taps = []
        for dy in range(3):
            for dx in range(3):
                off = guard + (dy - 1) * wp + (dx - 1)       # static lane shift
                taps.append(ag[:, off:off + flat])
        xcol = jnp.concatenate(taps, axis=0).astype(jnp.bfloat16)  # (9*cin, flat)
        y = jnp.dot(w_ref[...], xcol,                        # bf16 x bf16
                    preferred_element_type=jnp.float32)      # (hu, flat) f32 acc
        y = y + b_ref[...]                                   # (hu, 1) lane-broadcast
        if relu:
            y = jnp.maximum(y, 0.0)
        if mask is not None:
            y = y * mask                                     # re-zero per-sample padding
        return y

    def maxpool2x2(y, wp, s, flat, p_ref):
        """2x2/stride-2 pool + re-layout: (hu, flat) -> (hu, nb * P.shape[1])."""
        P = p_ref[...]                                       # hoisted constant load
        zg = jnp.zeros((y.shape[0], wp + 1), y.dtype)
        yg = jnp.concatenate([y, zg], axis=1)
        m = jnp.maximum(jnp.maximum(yg[:, 0:flat], yg[:, 1:flat + 1]),
                        jnp.maximum(yg[:, wp:flat + wp], yg[:, wp + 1:flat + wp + 1]))
        m = m.astype(P.dtype)                                # bf16 for block-1, f32 for block-2
        outs = [jnp.dot(m[:, n * s:(n + 1) * s], P,
                        preferred_element_type=jnp.float32) for n in range(nb)]
        return jnp.concatenate(outs, axis=1)

    x = x_ref[0]                                             # (Cin, nb*S1) f32, zero-padded

    # conv_block_1: Conv -> ReLU -> Conv -> MaxPool(2)  (no ReLU after 2nd conv, per spec)
    a = conv3x3(x, w1a_ref, b1a_ref, WP1, f1, relu=True, mask=m1_ref[...])
    a = conv3x3(a, w1b_ref, b1b_ref, WP1, f1, relu=False, mask=None)
    a = maxpool2x2(a, WP1, S1, f1, p1_ref)                   # (hu, nb*S2), padded layout

    # conv_block_2: Conv -> ReLU -> Conv -> MaxPool(2)
    a = conv3x3(a, w2a_ref, b2a_ref, WP2, f2, relu=True, mask=m2_ref[...])
    a = conv3x3(a, w2b_ref, b2b_ref, WP2, f2, relu=False, mask=None)
    a = maxpool2x2(a, WP2, S2, f2, p2_ref)                   # (hu, nb*49), dense 7x7

    # classifier: flatten in PyTorch NCHW order (n, c*49 + h*7 + w) -> Linear
    feats = []
    for n in range(nb):
        rows = [a[c:c + 1, n * Q3:(n + 1) * Q3] for c in range(hu)]
        feats.append(jnp.concatenate(rows, axis=1))          # (1, hu*49)
    feat = jnp.concatenate(feats, axis=0)                    # (nb, hu*49)
    logits = jnp.dot(feat, fcw_ref[...],
                     preferred_element_type=jnp.float32) + fcb_ref[...]
    o_ref[0] = logits.astype(o_ref.dtype)


# ----------------------------------------------------------------------------
# Wrapper: one-time layout prep (input / weights / constant selection matrices)
# and a single pallas_call over batch chunks.
# ----------------------------------------------------------------------------
def mnist_model_v1_forward(x_nchw, params, *, samples_per_step=None):
    N, cin, H, W = x_nchw.shape
    assert (H, W) == (H1, H1), "MNISTModelV1 classifier requires 28x28 inputs"
    hu = params["conv1a_w"].shape[0]
    ncls = params["fc_w"].shape[0]
    assert params["fc_w"].shape[1] == hu * Q3

    nb = samples_per_step
    if nb is None:
        nb = N if N <= 8 else (8 if N % 8 == 0 else N)
    assert N % nb == 0
    g = N // nb
    f1, f2 = nb * S1, nb * S2

    # Input: NCHW -> (chunks, Cin, nb*S1) flat, spatially zero-padded (trace-time glue, tiny).
    xt = jnp.transpose(x_nchw.astype(jnp.float32), (1, 0, 2, 3))      # (Cin, N, 28, 28)
    xp = jnp.pad(xt, ((0, 0), (0, 0), (1, 1), (1, 1)))                # (Cin, N, 30, 30)
    xf = xp.reshape(cin, g, nb, S1).transpose(1, 0, 2, 3).reshape(g, cin, f1)

    def wcol(w):   # (Cout, Cin, 3, 3) -> (Cout, 9*Cin) bf16, tap-major rows
        co, ci = w.shape[0], w.shape[1]
        return jnp.transpose(w, (0, 2, 3, 1)).reshape(co, 9 * ci).astype(jnp.bfloat16)

    def bcol(b):
        return b.reshape(-1, 1).astype(jnp.float32)

    # Constant 0/1 pooling-selection matrices and padding masks (numpy -> baked constants).
    m1 = jnp.asarray(_pad_mask(nb, HP1, WP1, H1))
    m2 = jnp.asarray(_pad_mask(nb, HP2, WP2, H2))
    p1 = jnp.asarray(_pool_select_to_padded(HP1, WP1, HP2, WP2, H2)).astype(jnp.bfloat16)
    p2 = jnp.asarray(_pool_select_to_dense(HP2, WP2, H3))             # f32: feeds the FC
    fcw = params["fc_w"].T.astype(jnp.float32)                        # (hu*49, ncls)
    fcb = params["fc_b"].reshape(1, ncls).astype(jnp.float32)

    kernel = functools.partial(_fused_kernel, nb=nb, hu=hu)

    def full(shape):
        return pl.BlockSpec(shape, lambda i: (0,) * len(shape))

    out = pl.pallas_call(
        kernel,
        out_shape=jax.ShapeDtypeStruct((g, nb, ncls), jnp.float32),
        grid=(g,),
        in_specs=[
            pl.BlockSpec((1, cin, f1), lambda i: (i, 0, 0)),
            full((hu, 9 * cin)), full((hu, 1)),
            full((hu, 9 * hu)), full((hu, 1)),
            full((hu, 9 * hu)), full((hu, 1)),
            full((hu, 9 * hu)), full((hu, 1)),
            full((1, f1)), full((1, f2)),
            full((S1, S2)), full((S2, Q3)),
            full((hu * Q3, ncls)), full((1, ncls)),
        ],
        out_specs=pl.BlockSpec((1, nb, ncls), lambda i: (i, 0, 0)),
        compiler_params=pltpu.CompilerParams(
            dimension_semantics=("parallel",),
            vmem_limit_bytes=32 * 1024 * 1024),
    )(
        xf,
        wcol(params["conv1a_w"]), bcol(params["conv1a_b"]),
        wcol(params["conv1b_w"]), bcol(params["conv1b_b"]),
        wcol(params["conv2a_w"]), bcol(params["conv2a_b"]),
        wcol(params["conv2b_w"]), bcol(params["conv2b_b"]),
        m1, m2, p1, p2, fcw, fcb,
    )
    return out.reshape(N, ncls)


# ----------------------------------------------------------------------------
# Pure-JAX reference (for correctness) and parameter init
# ----------------------------------------------------------------------------
def ref_forward(x_nchw, p):
    hi = jax.lax.Precision.HIGHEST

    def conv(x, w, b):
        y = jax.lax.conv_general_dilated(
            x, w, (1, 1), ((1, 1), (1, 1)),
            dimension_numbers=("NCHW", "OIHW", "NCHW"), precision=hi)
        return y + b.reshape(1, -1, 1, 1)

    def pool(x):
        return jax.lax.reduce_window(
            x, -jnp.inf, jax.lax.max, (1, 1, 2, 2), (1, 1, 2, 2), "VALID")

    x = x_nchw.astype(jnp.float32)
    x = jnp.maximum(conv(x, p["conv1a_w"], p["conv1a_b"]), 0.0)
    x = conv(x, p["conv1b_w"], p["conv1b_b"])
    x = pool(x)
    x = jnp.maximum(conv(x, p["conv2a_w"], p["conv2a_b"]), 0.0)
    x = conv(x, p["conv2b_w"], p["conv2b_b"])
    x = pool(x)
    feat = x.reshape(x.shape[0], -1)
    return jnp.dot(feat, p["fc_w"].T, precision=hi) + p["fc_b"]


def init_params(key, input_shape, hidden_units, output_shape):
    ks = jax.random.split(key, 10)
    s = 0.05
    return {
        "conv1a_w": s * jax.random.normal(ks[0], (hidden_units, input_shape, 3, 3), jnp.float32),
        "conv1a_b": s * jax.random.normal(ks[1], (hidden_units,), jnp.float32),
        "conv1b_w": s * jax.random.normal(ks[2], (hidden_units, hidden_units, 3, 3), jnp.float32),
        "conv1b_b": s * jax.random.normal(ks[3], (hidden_units,), jnp.float32),
        "conv2a_w": s * jax.random.normal(ks[4], (hidden_units, hidden_units, 3, 3), jnp.float32),
        "conv2a_b": s * jax.random.normal(ks[5], (hidden_units,), jnp.float32),
        "conv2b_w": s * jax.random.normal(ks[6], (hidden_units, hidden_units, 3, 3), jnp.float32),
        "conv2b_b": s * jax.random.normal(ks[7], (hidden_units,), jnp.float32),
        "fc_w":     s * jax.random.normal(ks[8], (output_shape, hidden_units * 7 * 7), jnp.float32),
        "fc_b":     s * jax.random.normal(ks[9], (output_shape,), jnp.float32),
    }


if __name__ == "__main__":
    # MNIST-like sizes: batch=2, 1 channel, 28x28 (required by the hidden*7*7
    # classifier), hidden_units=8, 10 classes.
    batch, in_ch, hidden, n_cls, hw = 2, 1, 8, 10, 28

    key = jax.random.PRNGKey(0)
    k_x, k_p = jax.random.split(key)
    x = jax.random.normal(k_x, (batch, in_ch, hw, hw), jnp.float32)   # NCHW like PyTorch
    params = init_params(k_p, in_ch, hidden, n_cls)

    out = jax.jit(mnist_model_v1_forward)(x, params)
    out = jax.block_until_ready(out)
    assert out.shape == (batch, n_cls), out.shape

    ref = jax.block_until_ready(ref_forward(x, params))
    np.testing.assert_allclose(np.asarray(out), np.asarray(ref), atol=5e-3, rtol=5e-2)

    print("KERNEL_OK")
</pallas_src>

<mosaic_0001>
module attributes {stable_mosaic.version = 11 : i64} {
  func.func @_fused_kernel(%arg0: i32, %arg1: memref<1x1x1800xf32, #tpu.memory_space<vmem>>, %arg2: memref<8x9xbf16, #tpu.memory_space<vmem>>, %arg3: memref<8x1xf32, #tpu.memory_space<vmem>>, %arg4: memref<8x72xbf16, #tpu.memory_space<vmem>>, %arg5: memref<8x1xf32, #tpu.memory_space<vmem>>, %arg6: memref<8x72xbf16, #tpu.memory_space<vmem>>, %arg7: memref<8x1xf32, #tpu.memory_space<vmem>>, %arg8: memref<8x72xbf16, #tpu.memory_space<vmem>>, %arg9: memref<8x1xf32, #tpu.memory_space<vmem>>, %arg10: memref<1x1800xf32, #tpu.memory_space<vmem>>, %arg11: memref<1x512xf32, #tpu.memory_space<vmem>>, %arg12: memref<900x256xbf16, #tpu.memory_space<vmem>>, %arg13: memref<256x49xf32, #tpu.memory_space<vmem>>, %arg14: memref<392x10xf32, #tpu.memory_space<vmem>>, %arg15: memref<1x10xf32, #tpu.memory_space<vmem>>, %arg16: memref<1x2x10xf32, #tpu.memory_space<vmem>>) attributes {dimension_semantics = [#tpu.dimension_semantics<parallel>], iteration_bounds = array<i64: 1>, scalar_prefetch = 0 : i64, scratch_operands = 0 : i64, tpu.core_type = #tpu.core_type<tc>, window_params = [{transform_indices = @transform_0, window_bounds = array<i64: 1, 1, 1800>}, {pipeline_mode = #tpu.pipeline_mode<synchronous>, transform_indices = @transform_1, window_bounds = array<i64: 8, 9>}, {pipeline_mode = #tpu.pipeline_mode<synchronous>, transform_indices = @transform_2, window_bounds = array<i64: 8, 1>}, {pipeline_mode = #tpu.pipeline_mode<synchronous>, transform_indices = @transform_3, window_bounds = array<i64: 8, 72>}, {pipeline_mode = #tpu.pipeline_mode<synchronous>, transform_indices = @transform_4, window_bounds = array<i64: 8, 1>}, {pipeline_mode = #tpu.pipeline_mode<synchronous>, transform_indices = @transform_5, window_bounds = array<i64: 8, 72>}, {pipeline_mode = #tpu.pipeline_mode<synchronous>, transform_indices = @transform_6, window_bounds = array<i64: 8, 1>}, {pipeline_mode = #tpu.pipeline_mode<synchronous>, transform_indices = @transform_7, window_bounds = array<i64: 8, 72>}, {pipeline_mode = #tpu.pipeline_mode<synchronous>, transform_indices = @transform_8, window_bounds = array<i64: 8, 1>}, {pipeline_mode = #tpu.pipeline_mode<synchronous>, transform_indices = @transform_9, window_bounds = array<i64: 1, 1800>}, {pipeline_mode = #tpu.pipeline_mode<synchronous>, transform_indices = @transform_10, window_bounds = array<i64: 1, 512>}, {pipeline_mode = #tpu.pipeline_mode<synchronous>, transform_indices = @transform_11, window_bounds = array<i64: 900, 256>}, {pipeline_mode = #tpu.pipeline_mode<synchronous>, transform_indices = @transform_12, window_bounds = array<i64: 256, 49>}, {pipeline_mode = #tpu.pipeline_mode<synchronous>, transform_indices = @transform_13, window_bounds = array<i64: 392, 10>}, {pipeline_mode = #tpu.pipeline_mode<synchronous>, transform_indices = @transform_14, window_bounds = array<i64: 1, 10>}, {transform_indices = @transform_15, window_bounds = array<i64: 1, 2, 10>}]} {
    %c0 = arith.constant 0 : index
    %c0_0 = arith.constant 0 : index
    %c0_1 = arith.constant 0 : index
    %0 = vector.load %arg1[%c0, %c0_0, %c0_1] : memref<1x1x1800xf32, #tpu.memory_space<vmem>>, vector<1x1x1800xf32>
    %1 = vector.shape_cast %0 : vector<1x1x1800xf32> to vector<1x1800xf32>
    %c0_2 = arith.constant 0 : index
    %c0_3 = arith.constant 0 : index
    %2 = vector.load %arg10[%c0_2, %c0_3] : memref<1x1800xf32, #tpu.memory_space<vmem>>, vector<1x1800xf32>
    %cst = arith.constant 0.000000e+00 : f32
    %3 = vector.broadcast %cst : f32 to vector<1x31xf32>
    %4 = tpu.concatenate %3, %1, %3 in 1 : vector<1x31xf32>, vector<1x1800xf32>, vector<1x31xf32> -> vector<1x1862xf32>
    %5 = vector.extract_strided_slice %4 {offsets = [0, 0], sizes = [1, 1800], strides = [1, 1]} : vector<1x1862xf32> to vector<1x1800xf32>
    %6 = vector.extract_strided_slice %4 {offsets = [0, 1], sizes = [1, 1800], strides = [1, 1]} : vector<1x1862xf32> to vector<1x1800xf32>
    %7 = vector.extract_strided_slice %4 {offsets = [0, 2], sizes = [1, 1800], strides = [1, 1]} : vector<1x1862xf32> to vector<1x1800xf32>
    %8 = vector.extract_strided_slice %4 {offsets = [0, 30], sizes = [1, 1800], strides = [1, 1]} : vector<1x1862xf32> to vector<1x1800xf32>
    %9 = vector.extract_strided_slice %4 {offsets = [0, 31], sizes = [1, 1800], strides = [1, 1]} : vector<1x1862xf32> to vector<1x1800xf32>
    %10 = vector.extract_strided_slice %4 {offsets = [0, 32], sizes = [1, 1800], strides = [1, 1]} : vector<1x1862xf32> to vector<1x1800xf32>
    %11 = vector.extract_strided_slice %4 {offsets = [0, 60], sizes = [1, 1800], strides = [1, 1]} : vector<1x1862xf32> to vector<1x1800xf32>
    %12 = vector.extract_strided_slice %4 {offsets = [0, 61], sizes = [1, 1800], strides = [1, 1]} : vector<1x1862xf32> to vector<1x1800xf32>
    %13 = vector.extract_strided_slice %4 {offsets = [0, 62], sizes = [1, 1800], strides = [1, 1]} : vector<1x1862xf32> to vector<1x1800xf32>
    %14 = tpu.concatenate %5, %6, %7, %8, %9, %10, %11, %12, %13 in 0 : vector<1x1800xf32>, vector<1x1800xf32>, vector<1x1800xf32>, vector<1x1800xf32>, vector<1x1800xf32>, vector<1x1800xf32>, vector<1x1800xf32>, vector<1x1800xf32>, vector<1x1800xf32> -> vector<9x1800xf32>
    %15 = arith.truncf %14 : vector<9x1800xf32> to vector<9x1800xbf16>
    %c0_4 = arith.constant 0 : index
    %c0_5 = arith.constant 0 : index
    %16 = vector.load %arg2[%c0_4, %c0_5] : memref<8x9xbf16, #tpu.memory_space<vmem>>, vector<8x9xbf16>
    %cst_6 = arith.constant dense<0.000000e+00> : vector<8x1800xf32>
    %17 = tpu.matmul %16, %15, %cst_6 {dimension_numbers = #tpu.dot_dimension_numbers<[1], [0], [0], [1], [0, 0, 1, 1], [], []>} : vector<8x9xbf16>, vector<9x1800xbf16>, vector<8x1800xf32> -> vector<8x1800xf32>
    %c0_7 = arith.constant 0 : index
    %c0_8 = arith.constant 0 : index
    %18 = vector.load %arg3[%c0_7, %c0_8] : memref<8x1xf32, #tpu.memory_space<vmem>>, vector<8x1xf32>
    %19 = vector.broadcast %18 : vector<8x1xf32> to vector<8x1800xf32>
    %20 = arith.addf %17, %19 : vector<8x1800xf32>
    %cst_9 = arith.constant 0.000000e+00 : f32
    %21 = vector.broadcast %cst_9 : f32 to vector<8x1800xf32>
    %22 = arith.maximumf %20, %21 : vector<8x1800xf32>
    %23 = vector.broadcast %2 : vector<1x1800xf32> to vector<8x1800xf32>
    %24 = arith.mulf %22, %23 : vector<8x1800xf32>
    %cst_10 = arith.constant 0.000000e+00 : f32
    %25 = vector.broadcast %cst_10 : f32 to vector<8x31xf32>
    %26 = tpu.concatenate %25, %24, %25 in 1 : vector<8x31xf32>, vector<8x1800xf32>, vector<8x31xf32> -> vector<8x1862xf32>
    %27 = vector.extract_strided_slice %26 {offsets = [0, 0], sizes = [8, 1800], strides = [1, 1]} : vector<8x1862xf32> to vector<8x1800xf32>
    %28 = vector.extract_strided_slice %26 {offsets = [0, 1], sizes = [8, 1800], strides = [1, 1]} : vector<8x1862xf32> to vector<8x1800xf32>
    %29 = vector.extract_strided_slice %26 {offsets = [0, 2], sizes = [8, 1800], strides = [1, 1]} : vector<8x1862xf32> to vector<8x1800xf32>
    %30 = vector.extract_strided_slice %26 {offsets = [0, 30], sizes = [8, 1800], strides = [1, 1]} : vector<8x1862xf32> to vector<8x1800xf32>
    %31 = vector.extract_strided_slice %26 {offsets = [0, 31], sizes = [8, 1800], strides = [1, 1]} : vector<8x1862xf32> to vector<8x1800xf32>
    %32 = vector.extract_strided_slice %26 {offsets = [0, 32], sizes = [8, 1800], strides = [1, 1]} : vector<8x1862xf32> to vector<8x1800xf32>
    %33 = vector.extract_strided_slice %26 {offsets = [0, 60], sizes = [8, 1800], strides = [1, 1]} : vector<8x1862xf32> to vector<8x1800xf32>
    %34 = vector.extract_strided_slice %26 {offsets = [0, 61], sizes = [8, 1800], strides = [1, 1]} : vector<8x1862xf32> to vector<8x1800xf32>
    %35 = vector.extract_strided_slice %26 {offsets = [0, 62], sizes = [8, 1800], strides = [1, 1]} : vector<8x1862xf32> to vector<8x1800xf32>
    %36 = tpu.concatenate %27, %28, %29, %30, %31, %32, %33, %34, %35 in 0 : vector<8x1800xf32>, vector<8x1800xf32>, vector<8x1800xf32>, vector<8x1800xf32>, vector<8x1800xf32>, vector<8x1800xf32>, vector<8x1800xf32>, vector<8x1800xf32>, vector<8x1800xf32> -> vector<72x1800xf32>
    %37 = arith.truncf %36 : vector<72x1800xf32> to vector<72x1800xbf16>
    %c0_11 = arith.constant 0 : index
    %c0_12 = arith.constant 0 : index
    %38 = vector.load %arg4[%c0_11, %c0_12] : memref<8x72xbf16, #tpu.memory_space<vmem>>, vector<8x72xbf16>
    %cst_13 = arith.constant dense<0.000000e+00> : vector<8x1800xf32>
    %39 = tpu.matmul %38, %37, %cst_13 {dimension_numbers = #tpu.dot_dimension_numbers<[1], [0], [0], [1], [0, 0, 1, 1], [], []>} : vector<8x72xbf16>, vector<72x1800xbf16>, vector<8x1800xf32> -> vector<8x1800xf32>
    %c0_14 = arith.constant 0 : index
    %c0_15 = arith.constant 0 : index
    %40 = vector.load %arg5[%c0_14, %c0_15] : memref<8x1xf32, #tpu.memory_space<vmem>>, vector<8x1xf32>
    %41 = vector.broadcast %40 : vector<8x1xf32> to vector<8x1800xf32>
    %42 = arith.addf %39, %41 : vector<8x1800xf32>
    %c0_16 = arith.constant 0 : index
    %c0_17 = arith.constant 0 : index
    %43 = vector.load %arg12[%c0_16, %c0_17] : memref<900x256xbf16, #tpu.memory_space<vmem>>, vector<900x256xbf16>
    %cst_18 = arith.constant 0.000000e+00 : f32
    %44 = vector.broadcast %cst_18 : f32 to vector<8x31xf32>
    %45 = tpu.concatenate %42, %44 in 1 : vector<8x1800xf32>, vector<8x31xf32> -> vector<8x1831xf32>
    %46 = vector.extract_strided_slice %45 {offsets = [0, 0], sizes = [8, 1800], strides = [1, 1]} : vector<8x1831xf32> to vector<8x1800xf32>
    %47 = vector.extract_strided_slice %45 {offsets = [0, 1], sizes = [8, 1800], strides = [1, 1]} : vector<8x1831xf32> to vector<8x1800xf32>
    %48 = arith.maximumf %46, %47 : vector<8x1800xf32>
    %49 = vector.extract_strided_slice %45 {offsets = [0, 30], sizes = [8, 1800], strides = [1, 1]} : vector<8x1831xf32> to vector<8x1800xf32>
    %50 = vector.extract_strided_slice %45 {offsets = [0, 31], sizes = [8, 1800], strides = [1, 1]} : vector<8x1831xf32> to vector<8x1800xf32>
    %51 = arith.maximumf %49, %50 : vector<8x1800xf32>
    %52 = arith.maximumf %48, %51 : vector<8x1800xf32>
    %53 = arith.truncf %52 : vector<8x1800xf32> to vector<8x1800xbf16>
    %54 = vector.extract_strided_slice %53 {offsets = [0, 0], sizes = [8, 900], strides = [1, 1]} : vector<8x1800xbf16> to vector<8x900xbf16>
    %cst_19 = arith.constant dense<0.000000e+00> : vector<8x256xf32>
    %55 = tpu.matmul %54, %43, %cst_19 {dimension_numbers = #tpu.dot_dimension_numbers<[1], [0], [0], [1], [0, 0, 1, 1], [], []>} : vector<8x900xbf16>, vector<900x256xbf16>, vector<8x256xf32> -> vector<8x256xf32>
    %56 = vector.extract_strided_slice %53 {offsets = [0, 900], sizes = [8, 900], strides = [1, 1]} : vector<8x1800xbf16> to vector<8x900xbf16>
    %cst_20 = arith.constant dense<0.000000e+00> : vector<8x256xf32>
    %57 = tpu.matmul %56, %43, %cst_20 {dimension_numbers = #tpu.dot_dimension_numbers<[1], [0], [0], [1], [0, 0, 1, 1], [], []>} : vector<8x900xbf16>, vector<900x256xbf16>, vector<8x256xf32> -> vector<8x256xf32>
    %58 = tpu.concatenate %55, %57 in 1 : vector<8x256xf32>, vector<8x256xf32> -> vector<8x512xf32>
    %c0_21 = arith.constant 0 : index
    %c0_22 = arith.constant 0 : index
    %59 = vector.load %arg11[%c0_21, %c0_22] : memref<1x512xf32, #tpu.memory_space<vmem>>, vector<1x512xf32>
    %cst_23 = arith.constant 0.000000e+00 : f32
    %60 = vector.broadcast %cst_23 : f32 to vector<8x17xf32>
    %61 = tpu.concatenate %60, %58, %60 in 1 : vector<8x17xf32>, vector<8x512xf32>, vector<8x17xf32> -> vector<8x546xf32>
    %62 = vector.extract_strided_slice %61 {offsets = [0, 0], sizes = [8, 512], strides = [1, 1]} : vector<8x546xf32> to vector<8x512xf32>
    %63 = vector.extract_strided_slice %61 {offsets = [0, 1], sizes = [8, 512], strides = [1, 1]} : vector<8x546xf32> to vector<8x512xf32>
    %64 = vector.extract_strided_slice %61 {offsets = [0, 2], sizes = [8, 512], strides = [1, 1]} : vector<8x546xf32> to vector<8x512xf32>
    %65 = vector.extract_strided_slice %61 {offsets = [0, 16], sizes = [8, 512], strides = [1, 1]} : vector<8x546xf32> to vector<8x512xf32>
    %66 = vector.extract_strided_slice %61 {offsets = [0, 17], sizes = [8, 512], strides = [1, 1]} : vector<8x546xf32> to vector<8x512xf32>
    %67 = vector.extract_strided_slice %61 {offsets = [0, 18], sizes = [8, 512], strides = [1, 1]} : vector<8x546xf32> to vector<8x512xf32>
    %68 = vector.extract_strided_slice %61 {offsets = [0, 32], sizes = [8, 512], strides = [1, 1]} : vector<8x546xf32> to vector<8x512xf32>
    %69 = vector.extract_strided_slice %61 {offsets = [0, 33], sizes = [8, 512], strides = [1, 1]} : vector<8x546xf32> to vector<8x512xf32>
    %70 = vector.extract_strided_slice %61 {offsets = [0, 34], sizes = [8, 512], strides = [1, 1]} : vector<8x546xf32> to vector<8x512xf32>
    %71 = tpu.concatenate %62, %63, %64, %65, %66, %67, %68, %69, %70 in 0 : vector<8x512xf32>, vector<8x512xf32>, vector<8x512xf32>, vector<8x512xf32>, vector<8x512xf32>, vector<8x512xf32>, vector<8x512xf32>, vector<8x512xf32>, vector<8x512xf32> -> vector<72x512xf32>
    %72 = arith.truncf %71 : vector<72x512xf32> to vector<72x512xbf16>
    %c0_24 = arith.constant 0 : index
    %c0_25 = arith.constant 0 : index
    %73 = vector.load %arg6[%c0_24, %c0_25] : memref<8x72xbf16, #tpu.memory_space<vmem>>, vector<8x72xbf16>
    %cst_26 = arith.constant dense<0.000000e+00> : vector<8x512xf32>
    %74 = tpu.matmul %73, %72, %cst_26 {dimension_numbers = #tpu.dot_dimension_numbers<[1], [0], [0], [1], [0, 0, 1, 1], [], []>} : vector<8x72xbf16>, vector<72x512xbf16>, vector<8x512xf32> -> vector<8x512xf32>
    %c0_27 = arith.constant 0 : index
    %c0_28 = arith.constant 0 : index
    %75 = vector.load %arg7[%c0_27, %c0_28] : memref<8x1xf32, #tpu.memory_space<vmem>>, vector<8x1xf32>
    %76 = vector.broadcast %75 : vector<8x1xf32> to vector<8x512xf32>
    %77 = arith.addf %74, %76 : vector<8x512xf32>
    %cst_29 = arith.constant 0.000000e+00 : f32
    %78 = vector.broadcast %cst_29 : f32 to vector<8x512xf32>
    %79 = arith.maximumf %77, %78 : vector<8x512xf32>
    %80 = vector.broadcast %59 : vector<1x512xf32> to vector<8x512xf32>
    %81 = arith.mulf %79, %80 : vector<8x512xf32>
    %cst_30 = arith.constant 0.000000e+00 : f32
    %82 = vector.broadcast %cst_30 : f32 to vector<8x17xf32>
    %83 = tpu.concatenate %82, %81, %82 in 1 : vector<8x17xf32>, vector<8x512xf32>, vector<8x17xf32> -> vector<8x546xf32>
    %84 = vector.extract_strided_slice %83 {offsets = [0, 0], sizes = [8, 512], strides = [1, 1]} : vector<8x546xf32> to vector<8x512xf32>
    %85 = vector.extract_strided_slice %83 {offsets = [0, 1], sizes = [8, 512], strides = [1, 1]} : vector<8x546xf32> to vector<8x512xf32>
    %86 = vector.extract_strided_slice %83 {offsets = [0, 2], sizes = [8, 512], strides = [1, 1]} : vector<8x546xf32> to vector<8x512xf32>
    %87 = vector.extract_strided_slice %83 {offsets = [0, 16], sizes = [8, 512], strides = [1, 1]} : vector<8x546xf32> to vector<8x512xf32>
    %88 = vector.extract_strided_slice %83 {offsets = [0, 17], sizes = [8, 512], strides = [1, 1]} : vector<8x546xf32> to vector<8x512xf32>
    %89 = vector.extract_strided_slice %83 {offsets = [0, 18], sizes = [8, 512], strides = [1, 1]} : vector<8x546xf32> to vector<8x512xf32>
    %90 = vector.extract_strided_slice %83 {offsets = [0, 32], sizes = [8, 512], strides = [1, 1]} : vector<8x546xf32> to vector<8x512xf32>
    %91 = vector.extract_strided_slice %83 {offsets = [0, 33], sizes = [8, 512], strides = [1, 1]} : vector<8x546xf32> to vector<8x512xf32>
    %92 = vector.extract_strided_slice %83 {offsets = [0, 34], sizes = [8, 512], strides = [1, 1]} : vector<8x546xf32> to vector<8x512xf32>
    %93 = tpu.concatenate %84, %85, %86, %87, %88, %89, %90, %91, %92 in 0 : vector<8x512xf32>, vector<8x512xf32>, vector<8x512xf32>, vector<8x512xf32>, vector<8x512xf32>, vector<8x512xf32>, vector<8x512xf32>, vector<8x512xf32>, vector<8x512xf32> -> vector<72x512xf32>
    %94 = arith.truncf %93 : vector<72x512xf32> to vector<72x512xbf16>
    %c0_31 = arith.constant 0 : index
    %c0_32 = arith.constant 0 : index
    %95 = vector.load %arg8[%c0_31, %c0_32] : memref<8x72xbf16, #tpu.memory_space<vmem>>, vector<8x72xbf16>
    %cst_33 = arith.constant dense<0.000000e+00> : vector<8x512xf32>
    %96 = tpu.matmul %95, %94, %cst_33 {dimension_numbers = #tpu.dot_dimension_numbers<[1], [0], [0], [1], [0, 0, 1, 1], [], []>} : vector<8x72xbf16>, vector<72x512xbf16>, vector<8x512xf32> -> vector<8x512xf32>
    %c0_34 = arith.constant 0 : index
    %c0_35 = arith.constant 0 : index
    %97 = vector.load %arg9[%c0_34, %c0_35] : memref<8x1xf32, #tpu.memory_space<vmem>>, vector<8x1xf32>
    %98 = vector.broadcast %97 : vector<8x1xf32> to vector<8x512xf32>
    %99 = arith.addf %96, %98 : vector<8x512xf32>
    %c0_36 = arith.constant 0 : index
    %c0_37 = arith.constant 0 : index
    %100 = vector.load %arg13[%c0_36, %c0_37] : memref<256x49xf32, #tpu.memory_space<vmem>>, vector<256x49xf32>
    %cst_38 = arith.constant 0.000000e+00 : f32
    %101 = vector.broadcast %cst_38 : f32 to vector<8x17xf32>
    %102 = tpu.concatenate %99, %101 in 1 : vector<8x512xf32>, vector<8x17xf32> -> vector<8x529xf32>
    %103 = vector.extract_strided_slice %102 {offsets = [0, 0], sizes = [8, 512], strides = [1, 1]} : vector<8x529xf32> to vector<8x512xf32>
    %104 = vector.extract_strided_slice %102 {offsets = [0, 1], sizes = [8, 512], strides = [1, 1]} : vector<8x529xf32> to vector<8x512xf32>
    %105 = arith.maximumf %103, %104 : vector<8x512xf32>
    %106 = vector.extract_strided_slice %102 {offsets = [0, 16], sizes = [8, 512], strides = [1, 1]} : vector<8x529xf32> to vector<8x512xf32>
    %107 = vector.extract_strided_slice %102 {offsets = [0, 17], sizes = [8, 512], strides = [1, 1]} : vector<8x529xf32> to vector<8x512xf32>
    %108 = arith.maximumf %106, %107 : vector<8x512xf32>
    %109 = arith.maximumf %105, %108 : vector<8x512xf32>
    %110 = vector.extract_strided_slice %109 {offsets = [0, 0], sizes = [8, 256], strides = [1, 1]} : vector<8x512xf32> to vector<8x256xf32>
    %cst_39 = arith.constant dense<0.000000e+00> : vector<8x49xf32>
    %111 = tpu.matmul %110, %100, %cst_39 {dimension_numbers = #tpu.dot_dimension_numbers<[1], [0], [0], [1], [0, 0, 1, 1], [], []>} : vector<8x256xf32>, vector<256x49xf32>, vector<8x49xf32> -> vector<8x49xf32>
    %112 = vector.extract_strided_slice %109 {offsets = [0, 256], sizes = [8, 256], strides = [1, 1]} : vector<8x512xf32> to vector<8x256xf32>
    %cst_40 = arith.constant dense<0.000000e+00> : vector<8x49xf32>
    %113 = tpu.matmul %112, %100, %cst_40 {dimension_numbers = #tpu.dot_dimension_numbers<[1], [0], [0], [1], [0, 0, 1, 1], [], []>} : vector<8x256xf32>, vector<256x49xf32>, vector<8x49xf32> -> vector<8x49xf32>
    %114 = tpu.concatenate %111, %113 in 1 : vector<8x49xf32>, vector<8x49xf32> -> vector<8x98xf32>
    %115 = vector.extract_strided_slice %114 {offsets = [0, 0], sizes = [1, 49], strides = [1, 1]} : vector<8x98xf32> to vector<1x49xf32>
    %116 = vector.extract_strided_slice %114 {offsets = [1, 0], sizes = [1, 49], strides = [1, 1]} : vector<8x98xf32> to vector<1x49xf32>
    %117 = vector.extract_strided_slice %114 {offsets = [2, 0], sizes = [1, 49], strides = [1, 1]} : vector<8x98xf32> to vector<1x49xf32>
    %118 = vector.extract_strided_slice %114 {offsets = [3, 0], sizes = [1, 49], strides = [1, 1]} : vector<8x98xf32> to vector<1x49xf32>
    %119 = vector.extract_strided_slice %114 {offsets = [4, 0], sizes = [1, 49], strides = [1, 1]} : vector<8x98xf32> to vector<1x49xf32>
    %120 = vector.extract_strided_slice %114 {offsets = [5, 0], sizes = [1, 49], strides = [1, 1]} : vector<8x98xf32> to vector<1x49xf32>
    %121 = vector.extract_strided_slice %114 {offsets = [6, 0], sizes = [1, 49], strides = [1, 1]} : vector<8x98xf32> to vector<1x49xf32>
    %122 = vector.extract_strided_slice %114 {offsets = [7, 0], sizes = [1, 49], strides = [1, 1]} : vector<8x98xf32> to vector<1x49xf32>
    %123 = tpu.concatenate %115, %116, %117, %118, %119, %120, %121, %122 in 1 : vector<1x49xf32>, vector<1x49xf32>, vector<1x49xf32>, vector<1x49xf32>, vector<1x49xf32>, vector<1x49xf32>, vector<1x49xf32>, vector<1x49xf32> -> vector<1x392xf32>
    %124 = vector.extract_strided_slice %114 {offsets = [0, 49], sizes = [1, 49], strides = [1, 1]} : vector<8x98xf32> to vector<1x49xf32>
    %125 = vector.extract_strided_slice %114 {offsets = [1, 49], sizes = [1, 49], strides = [1, 1]} : vector<8x98xf32> to vector<1x49xf32>
    %126 = vector.extract_strided_slice %114 {offsets = [2, 49], sizes = [1, 49], strides = [1, 1]} : vector<8x98xf32> to vector<1x49xf32>
    %127 = vector.extract_strided_slice %114 {offsets = [3, 49], sizes = [1, 49], strides = [1, 1]} : vector<8x98xf32> to vector<1x49xf32>
    %128 = vector.extract_strided_slice %114 {offsets = [4, 49], sizes = [1, 49], strides = [1, 1]} : vector<8x98xf32> to vector<1x49xf32>
    %129 = vector.extract_strided_slice %114 {offsets = [5, 49], sizes = [1, 49], strides = [1, 1]} : vector<8x98xf32> to vector<1x49xf32>
    %130 = vector.extract_strided_slice %114 {offsets = [6, 49], sizes = [1, 49], strides = [1, 1]} : vector<8x98xf32> to vector<1x49xf32>
    %131 = vector.extract_strided_slice %114 {offsets = [7, 49], sizes = [1, 49], strides = [1, 1]} : vector<8x98xf32> to vector<1x49xf32>
    %132 = tpu.concatenate %124, %125, %126, %127, %128, %129, %130, %131 in 1 : vector<1x49xf32>, vector<1x49xf32>, vector<1x49xf32>, vector<1x49xf32>, vector<1x49xf32>, vector<1x49xf32>, vector<1x49xf32>, vector<1x49xf32> -> vector<1x392xf32>
    %133 = tpu.concatenate %123, %132 in 0 : vector<1x392xf32>, vector<1x392xf32> -> vector<2x392xf32>
    %c0_41 = arith.constant 0 : index
    %c0_42 = arith.constant 0 : index
    %134 = vector.load %arg14[%c0_41, %c0_42] : memref<392x10xf32, #tpu.memory_space<vmem>>, vector<392x10xf32>
    %cst_43 = arith.constant dense<0.000000e+00> : vector<2x10xf32>
    %135 = tpu.matmul %133, %134, %cst_43 {dimension_numbers = #tpu.dot_dimension_numbers<[1], [0], [0], [1], [0, 0, 1, 1], [], []>} : vector<2x392xf32>, vector<392x10xf32>, vector<2x10xf32> -> vector<2x10xf32>
    %c0_44 = arith.constant 0 : index
    %c0_45 = arith.constant 0 : index
    %136 = vector.load %arg15[%c0_44, %c0_45] : memref<1x10xf32, #tpu.memory_space<vmem>>, vector<1x10xf32>
    %137 = vector.broadcast %136 : vector<1x10xf32> to vector<2x10xf32>
    %138 = arith.addf %135, %137 : vector<2x10xf32>
    %c0_46 = arith.constant 0 : index
    %c0_47 = arith.constant 0 : index
    %c0_48 = arith.constant 0 : index
    %139 = vector.load %arg16[%c0_46, %c0_47, %c0_48] : memref<1x2x10xf32, #tpu.memory_space<vmem>>, vector<1x2x10xf32>
    %140 = vector.shape_cast %139 : vector<1x2x10xf32> to vector<2x10xf32>
    %141 = vector.shape_cast %138 : vector<2x10xf32> to vector<1x2x10xf32>
    tpu.vector_store %arg16[%c0_46, %c0_47, %c0_48], %141 {strides = array<i32>} : memref<1x2x10xf32, #tpu.memory_space<vmem>>, vector<1x2x10xf32>,
    return
  }
  func.func @transform_0(%arg0: i32) -> (i32, i32, i32) {
    %c0_i32 = arith.constant 0 : i32
    %c0_i32_0 = arith.constant 0 : i32
    %c0_i32_1 = arith.constant 0 : i32
    return %arg0, %c0_i32, %c0_i32_0 : i32, i32, i32
  }
  func.func @transform_1(%arg0: i32) -> (i32, i32) {
    %c0_i32 = arith.constant 0 : i32
    %c0_i32_0 = arith.constant 0 : i32
    %c0_i32_1 = arith.constant 0 : i32
    return %c0_i32, %c0_i32_0 : i32, i32
  }
  func.func @transform_2(%arg0: i32) -> (i32, i32) {
    %c0_i32 = arith.constant 0 : i32
    %c0_i32_0 = arith.constant 0 : i32
    %c0_i32_1 = arith.constant 0 : i32
    return %c0_i32, %c0_i32_0 : i32, i32
  }
  func.func @transform_3(%arg0: i32) -> (i32, i32) {
    %c0_i32 = arith.constant 0 : i32
    %c0_i32_0 = arith.constant 0 : i32
    %c0_i32_1 = arith.constant 0 : i32
    return %c0_i32, %c0_i32_0 : i32, i32
  }
  func.func @transform_4(%arg0: i32) -> (i32, i32) {
    %c0_i32 = arith.constant 0 : i32
    %c0_i32_0 = arith.constant 0 : i32
    %c0_i32_1 = arith.constant 0 : i32
    return %c0_i32, %c0_i32_0 : i32, i32
  }
  func.func @transform_5(%arg0: i32) -> (i32, i32) {
    %c0_i32 = arith.constant 0 : i32
    %c0_i32_0 = arith.constant 0 : i32
    %c0_i32_1 = arith.constant 0 : i32
    return %c0_i32, %c0_i32_0 : i32, i32
  }
  func.func @transform_6(%arg0: i32) -> (i32, i32) {
    %c0_i32 = arith.constant 0 : i32
    %c0_i32_0 = arith.constant 0 : i32
    %c0_i32_1 = arith.constant 0 : i32
    return %c0_i32, %c0_i32_0 : i32, i32
  }
  func.func @transform_7(%arg0: i32) -> (i32, i32) {
    %c0_i32 = arith.constant 0 : i32
    %c0_i32_0 = arith.constant 0 : i32
    %c0_i32_1 = arith.constant 0 : i32
    return %c0_i32, %c0_i32_0 : i32, i32
  }
  func.func @transform_8(%arg0: i32) -> (i32, i32) {
    %c0_i32 = arith.constant 0 : i32
    %c0_i32_0 = arith.constant 0 : i32
    %c0_i32_1 = arith.constant 0 : i32
    return %c0_i32, %c0_i32_0 : i32, i32
  }
  func.func @transform_9(%arg0: i32) -> (i32, i32) {
    %c0_i32 = arith.constant 0 : i32
    %c0_i32_0 = arith.constant 0 : i32
    %c0_i32_1 = arith.constant 0 : i32
    return %c0_i32, %c0_i32_0 : i32, i32
  }
  func.func @transform_10(%arg0: i32) -> (i32, i32) {
    %c0_i32 = arith.constant 0 : i32
    %c0_i32_0 = arith.constant 0 : i32
    %c0_i32_1 = arith.constant 0 : i32
    return %c0_i32, %c0_i32_0 : i32, i32
  }
  func.func @transform_11(%arg0: i32) -> (i32, i32) {
    %c0_i32 = arith.constant 0 : i32
    %c0_i32_0 = arith.constant 0 : i32
    %c0_i32_1 = arith.constant 0 : i32
    return %c0_i32, %c0_i32_0 : i32, i32
  }
  func.func @transform_12(%arg0: i32) -> (i32, i32) {
    %c0_i32 = arith.constant 0 : i32
    %c0_i32_0 = arith.constant 0 : i32
    %c0_i32_1 = arith.constant 0 : i32
    return %c0_i32, %c0_i32_0 : i32, i32
  }
  func.func @transform_13(%arg0: i32) -> (i32, i32) {
    %c0_i32 = arith.constant 0 : i32
    %c0_i32_0 = arith.constant 0 : i32
    %c0_i32_1 = arith.constant 0 : i32
    return %c0_i32, %c0_i32_0 : i32, i32
  }
  func.func @transform_14(%arg0: i32) -> (i32, i32) {
    %c0_i32 = arith.constant 0 : i32
    %c0_i32_0 = arith.constant 0 : i32
    %c0_i32_1 = arith.constant 0 : i32
    return %c0_i32, %c0_i32_0 : i32, i32
  }
  func.func @transform_15(%arg0: i32) -> (i32, i32, i32) {
    %c0_i32 = arith.constant 0 : i32
    %c0_i32_0 = arith.constant 0 : i32
    %c0_i32_1 = arith.constant 0 : i32
    return %arg0, %c0_i32, %c0_i32_0 : i32, i32, i32
  }
}

</mosaic_0001>

<llo_original>
// kernel: mnist_model_v1_forward.1
$region0: #{mnist_model_v1_forward.1}
  #allocation0 [shape = 'u32[]', space=smem, size = 0x4, offset = 0x4, fixed_abs, tag = 'smem constant byte address 0x4 - core index']
  #allocation1 [shape = 'u32[144,128]{1,0:T(1,128)}', space=vmem, size = 0x12000, scoped, tag = 'internal scratch']
  %s0 = inlined_call_operand.vmem [shape: f32[1,1,1800], index: 0, kind: input, shape index: {}]
  %s1 = inlined_call_operand.vmem [shape: bf16[8,9], index: 1, kind: input, shape index: {}]
  %s2 = inlined_call_operand.vmem [shape: f32[8,1], index: 2, kind: input, shape index: {}]
  %s3 = inlined_call_operand.vmem [shape: bf16[8,72], index: 3, kind: input, shape index: {}]
  %s4 = inlined_call_operand.vmem [shape: f32[8,1], index: 4, kind: input, shape index: {}]
  %s5 = inlined_call_operand.vmem [shape: bf16[8,72], index: 5, kind: input, shape index: {}]
  %s6 = inlined_call_operand.vmem [shape: f32[8,1], index: 6, kind: input, shape index: {}]
  %s7 = inlined_call_operand.vmem [shape: bf16[8,72], index: 7, kind: input, shape index: {}]
  %s8 = inlined_call_operand.vmem [shape: f32[8,1], index: 8, kind: input, shape index: {}]
  %s9 = inlined_call_operand.vmem [shape: f32[1,1800], index: 9, kind: input, shape index: {}]
  %s10 = inlined_call_operand.vmem [shape: f32[1,512], index: 10, kind: input, shape index: {}]
  %s11 = inlined_call_operand.vmem [shape: bf16[900,256], index: 11, kind: input, shape index: {}]
  %s12 = inlined_call_operand.vmem [shape: f32[256,49], index: 12, kind: input, shape index: {}]
  %s13 = inlined_call_operand.vmem [shape: f32[392,10], index: 13, kind: input, shape index: {}]
  %s14 = inlined_call_operand.vmem [shape: f32[1,10], index: 14, kind: input, shape index: {}]
  %s15 = inlined_call_operand.hbm [shape: f32[1,2,10], index: 15, kind: output, shape index: {}]
  %s16 = sld [smem:[#allocation0]]
  $region70: #{mnist_model_v1_forward.1} parent=0
    _
  %s18 = ssub.s32 1, %s16
  %s19 = scalar_select 0, %s18, %s16
  $region1: #{mnist_model_v1_forward.1} parent=0
    #allocation2 [shape = 'u8[1024]{0}', space=vmem, size = 0x400, scoped, tag = 'output window, operand 0, single buffered']
    #allocation3 [shape = 's32[1]{0}', space=sflag, size = 0x4, scoped, tag = 'scoped memory for mnist_model_v1_forward.1']
    %20 = vsyncpa [#allocation3], 0
    // Predicated region
    $region2: #{mnist_model_v1_forward.1} parent=1 // pred_check
      _
    $region3: #{mnist_model_v1_forward.1} parent=1 // pred_check_branch
      %22 = sbr.rel (0) target = $region5
    $region4: #{mnist_model_v1_forward.1} parent=1 // pred_region
      _
    $region5: #{mnist_model_v1_forward.1} parent=1 // pred_fallthru
      _
    // Predicated region
    $region6: #{mnist_model_v1_forward.1} parent=1 // pred_check
      _
    $region7: #{mnist_model_v1_forward.1} parent=1 // pred_check_branch
      %24 = sbr.rel (0) target = $region9
    $region8: #{mnist_model_v1_forward.1} parent=1 // pred_region
      _
    $region9: #{mnist_model_v1_forward.1} parent=1 // pred_fallthru
      _
    // Predicated region
    $region10: #{mnist_model_v1_forward.1} parent=1 // pred_check
      _
    $region11: #{mnist_model_v1_forward.1} parent=1 // pred_check_branch
      %26 = sbr.rel (0) target = $region13
    $region12: #{mnist_model_v1_forward.1} parent=1 // pred_region
      _
    $region13: #{mnist_model_v1_forward.1} parent=1 // pred_fallthru
      _
    // Predicated region
    $region14: #{mnist_model_v1_forward.1} parent=1 // pred_check
      _
    $region15: #{mnist_model_v1_forward.1} parent=1 // pred_check_branch
      %28 = sbr.rel (0) target = $region17
    $region16: #{mnist_model_v1_forward.1} parent=1 // pred_region
      _
    $region17: #{mnist_model_v1_forward.1} parent=1 // pred_fallthru
      _
    // Predicated region
    $region18: #{mnist_model_v1_forward.1} parent=1 // pred_check
      _
    $region19: #{mnist_model_v1_forward.1} parent=1 // pred_check_branch
      %30 = sbr.rel (0) target = $region21
    $region20: #{mnist_model_v1_forward.1} parent=1 // pred_region
      _
    $region21: #{mnist_model_v1_forward.1} parent=1 // pred_fallthru
      _
    // Predicated region
    $region22: #{mnist_model_v1_forward.1} parent=1 // pred_check
      _
    $region23: #{mnist_model_v1_forward.1} parent=1 // pred_check_branch
      %32 = sbr.rel (0) target = $region25
    $region24: #{mnist_model_v1_forward.1} parent=1 // pred_region
      _
    $region25: #{mnist_model_v1_forward.1} parent=1 // pred_fallthru
      _
    // Predicated region
    $region26: #{mnist_model_v1_forward.1} parent=1 // pred_check
      _
    $region27: #{mnist_model_v1_forward.1} parent=1 // pred_check_branch
      %34 = sbr.rel (0) target = $region29
    $region28: #{mnist_model_v1_forward.1} parent=1 // pred_region
      _
    $region29: #{mnist_model_v1_forward.1} parent=1 // pred_fallthru
      _
    // Predicated region
    $region30: #{mnist_model_v1_forward.1} parent=1 // pred_check
      _
    $region31: #{mnist_model_v1_forward.1} parent=1 // pred_check_branch
      %36 = sbr.rel (0) target = $region33
    $region32: #{mnist_model_v1_forward.1} parent=1 // pred_region
      _
    $region33: #{mnist_model_v1_forward.1} parent=1 // pred_fallthru
      _
    // Predicated region
    $region34: #{mnist_model_v1_forward.1} parent=1 // pred_check
      _
    $region35: #{mnist_model_v1_forward.1} parent=1 // pred_check_branch
      %38 = sbr.rel (0) target = $region37
    $region36: #{mnist_model_v1_forward.1} parent=1 // pred_region
      _
    $region37: #{mnist_model_v1_forward.1} parent=1 // pred_fallthru
      _
    // Predicated region
    $region38: #{mnist_model_v1_forward.1} parent=1 // pred_check
      _
    $region39: #{mnist_model_v1_forward.1} parent=1 // pred_check_branch
      %40 = sbr.rel (0) target = $region41
    $region40: #{mnist_model_v1_forward.1} parent=1 // pred_region
      _
    $region41: #{mnist_model_v1_forward.1} parent=1 // pred_fallthru
      _
    // Predicated region
    $region42: #{mnist_model_v1_forward.1} parent=1 // pred_check
      _
    $region43: #{mnist_model_v1_forward.1} parent=1 // pred_check_branch
      %42 = sbr.rel (0) target = $region45
    $region44: #{mnist_model_v1_forward.1} parent=1 // pred_region
      _
    $region45: #{mnist_model_v1_forward.1} parent=1 // pred_fallthru
      _
    // Predicated region
    $region46: #{mnist_model_v1_forward.1} parent=1 // pred_check
      _
    $region47: #{mnist_model_v1_forward.1} parent=1 // pred_check_branch
      %44 = sbr.rel (0) target = $region49
    $region48: #{mnist_model_v1_forward.1} parent=1 // pred_region
      _
    $region49: #{mnist_model_v1_forward.1} parent=1 // pred_fallthru
      _
    // Predicated region
    $region50: #{mnist_model_v1_forward.1} parent=1 // pred_check
      _
    $region51: #{mnist_model_v1_forward.1} parent=1 // pred_check_branch
      %46 = sbr.rel (0) target = $region53
    $region52: #{mnist_model_v1_forward.1} parent=1 // pred_region
      _
    $region53: #{mnist_model_v1_forward.1} parent=1 // pred_fallthru
      _
    // Predicated region
    $region54: #{mnist_model_v1_forward.1} parent=1 // pred_check
      _
    $region55: #{mnist_model_v1_forward.1} parent=1 // pred_check_branch
      %48 = sbr.rel (0) target = $region57
    $region56: #{mnist_model_v1_forward.1} parent=1 // pred_region
      _
    $region57: #{mnist_model_v1_forward.1} parent=1 // pred_fallthru
      _
    // Predicated region
    $region58: #{mnist_model_v1_forward.1} parent=1 // pred_check
      _
    $region59: #{mnist_model_v1_forward.1} parent=1 // pred_check_branch
      %50 = sbr.rel (0) target = $region61
    $region60: #{mnist_model_v1_forward.1} parent=1 // pred_region
      _
    $region61: #{mnist_model_v1_forward.1} parent=1 // pred_fallthru
      _
    %v52 = vld [vmem:[%s0] sm:$0xff]
    %v53 = vld [vmem:[%s0 + $0x8] sm:$0x7f]
    %v54 = vld [vmem:[%s9] sm:$0xff]
    %v55 = vld [vmem:[%s9 + $0x8] sm:$0x7f]
    %v58 = vlaneseq
    %v59 = vshrl.u32 %v58, 7
    %v60 = vsub.s32 0, %v59
    %v61 = vrot.slane %v52, %v60
    %v62 = vlaneseq
    %v63 = vshrl.u32 %v62, 7
    %v64 = vsub.s32 1, %v63
    %v65 = vrot.slane %v52, %v64
    %v66 = vlaneseq
    %v67 = vshrl.u32 %v66, 7
    %v68 = vsub.s32 2, %v67
    %v69 = vrot.slane %v52, %v68
    %v70 = vlaneseq
    %v71 = vshrl.u32 %v70, 7
    %v72 = vsub.s32 3, %v71
    %v73 = vrot.slane %v52, %v72
    %v74 = vlaneseq
    %v75 = vshrl.u32 %v74, 7
    %v76 = vsub.s32 4, %v75
    %v77 = vrot.slane %v52, %v76
    %v78 = vlaneseq
    %v79 = vshrl.u32 %v78, 7
    %v80 = vsub.s32 5, %v79
    %v81 = vrot.slane %v52, %v80
    %v82 = vlaneseq
    %v83 = vshrl.u32 %v82, 7
    %v84 = vsub.s32 6, %v83
    %v85 = vrot.slane %v52, %v84
    %v86 = vlaneseq
    %v87 = vshrl.u32 %v86, 7
    %v88 = vsub.s32 7, %v87
    %v89 = vrot.slane %v52, %v88
    %v90 = vlaneseq
    %v91 = vshrl.u32 %v90, 7
    %v92 = vsub.s32 0, %v91
    %v93 = vrot.slane %v53, %v92
    %v94 = vlaneseq
    %v95 = vshrl.u32 %v94, 7
    %v96 = vsub.s32 1, %v95
    %v97 = vrot.slane %v53, %v96
    %v98 = vlaneseq
    %v99 = vshrl.u32 %v98, 7
    %v100 = vsub.s32 2, %v99
    %v101 = vrot.slane %v53, %v100
    %v102 = vlaneseq
    %v103 = vshrl.u32 %v102, 7
    %v104 = vsub.s32 3, %v103
    %v105 = vrot.slane %v53, %v104
    %v106 = vlaneseq
    %v107 = vshrl.u32 %v106, 7
    %v108 = vsub.s32 4, %v107
    %v109 = vrot.slane %v53, %v108
    %v110 = vlaneseq
    %v111 = vshrl.u32 %v110, 7
    %v112 = vsub.s32 5, %v111
    %v113 = vrot.slane %v53, %v112
    %v114 = vlaneseq
    %v115 = vshrl.u32 %v114, 7
    %v116 = vsub.s32 6, %v115
    %v117 = vrot.slane %v53, %v116
    %118 = vrot.lane.b32.xlu0 %v61, 31
    %v119 = vpop.permute.xlu0 %118
    %120 = vrot.lane.b32.xlu0 %v65, 31
    %v121 = vpop.permute.xlu0 %120
    %122 = vrot.lane.b32.xlu0 %v69, 31
    %v123 = vpop.permute.xlu0 %122
    %124 = vrot.lane.b32.xlu0 %v73, 31
    %v125 = vpop.permute.xlu0 %124
    %126 = vrot.lane.b32.xlu0 %v77, 31
    %v127 = vpop.permute.xlu0 %126
    %128 = vrot.lane.b32.xlu0 %v81, 31
    %v129 = vpop.permute.xlu0 %128
    %130 = vrot.lane.b32.xlu0 %v85, 31
    %v131 = vpop.permute.xlu0 %130
    %132 = vrot.lane.b32.xlu0 %v89, 31
    %v133 = vpop.permute.xlu0 %132
    %134 = vrot.lane.b32.xlu0 %v93, 31
    %v135 = vpop.permute.xlu0 %134
    %136 = vrot.lane.b32.xlu0 %v97, 31
    %v137 = vpop.permute.xlu0 %136
    %138 = vrot.lane.b32.xlu0 %v101, 31
    %v139 = vpop.permute.xlu0 %138
    %140 = vrot.lane.b32.xlu0 %v105, 31
    %v141 = vpop.permute.xlu0 %140
    %142 = vrot.lane.b32.xlu0 %v109, 31
    %v143 = vpop.permute.xlu0 %142
    %144 = vrot.lane.b32.xlu0 %v113, 31
    %v145 = vpop.permute.xlu0 %144
    %146 = vrot.lane.b32.xlu0 %v117, 31
    %v147 = vpop.permute.xlu0 %146
    %vm148 = vcmask 252928
    %v149 = vsel %vm148, %v119, %v121
    %v150 = vsel %vm148, %v121, %v123
    %v151 = vsel %vm148, %v123, %v125
    %v152 = vsel %vm148, %v125, %v127
    %v153 = vsel %vm148, %v127, %v129
    %v154 = vsel %vm148, %v129, %v131
    %v155 = vsel %vm148, %v131, %v133
    %v156 = vsel %vm148, %v133, %v135
    %v157 = vsel %vm148, %v135, %v137
    %v158 = vsel %vm148, %v137, %v139
    %v159 = vsel %vm148, %v139, %v141
    %v160 = vsel %vm148, %v141, %v143
    %v161 = vsel %vm148, %v143, %v145
    %v162 = vsel %vm148, %v145, %v147
    %v178 = vsel %vm148, 0.0, %v119
    %vm179 = vcmask 318464
    %v180 = vsel %vm179, %v162, 0.0
    %v183 = vrot.slane %v178, 7
    %v184 = vrot.slane %v149, 7
    %v185 = vrot.slane %v150, 7
    %v186 = vrot.slane %v151, 7
    %v187 = vrot.slane %v152, 7
    %v188 = vrot.slane %v153, 7
    %v189 = vrot.slane %v154, 7
    %v190 = vrot.slane %v155, 7
    %v191 = vrot.slane %v156, 7
    %v192 = vrot.slane %v157, 7
    %v193 = vrot.slane %v158, 7
    %v194 = vrot.slane %v159, 7
    %v195 = vrot.slane %v160, 7
    %v196 = vrot.slane %v161, 7
    %v197 = vrot.slane %v180, 7
    %198 = vrot.lane.b32.xlu0 %v183, 127
    %v199 = vpop.permute.xlu0 %198
    %200 = vrot.lane.b32.xlu0 %v184, 127
    %v201 = vpop.permute.xlu0 %200
    %202 = vrot.lane.b32.xlu0 %v185, 127
    %v203 = vpop.permute.xlu0 %202
    %204 = vrot.lane.b32.xlu0 %v186, 127
    %v205 = vpop.permute.xlu0 %204
    %206 = vrot.lane.b32.xlu0 %v187, 127
    %v207 = vpop.permute.xlu0 %206
    %208 = vrot.lane.b32.xlu0 %v188, 127
    %v209 = vpop.permute.xlu0 %208
    %210 = vrot.lane.b32.xlu0 %v189, 127
    %v211 = vpop.permute.xlu0 %210
    %212 = vrot.lane.b32.xlu0 %v190, 127
    %v213 = vpop.permute.xlu0 %212
    %214 = vrot.lane.b32.xlu0 %v191, 127
    %v215 = vpop.permute.xlu0 %214
    %216 = vrot.lane.b32.xlu0 %v192, 127
    %v217 = vpop.permute.xlu0 %216
    %218 = vrot.lane.b32.xlu0 %v193, 127
    %v219 = vpop.permute.xlu0 %218
    %220 = vrot.lane.b32.xlu0 %v194, 127
    %v221 = vpop.permute.xlu0 %220
    %222 = vrot.lane.b32.xlu0 %v195, 127
    %v223 = vpop.permute.xlu0 %222
    %224 = vrot.lane.b32.xlu0 %v196, 127
    %v225 = vpop.permute.xlu0 %224
    %226 = vrot.lane.b32.xlu0 %v197, 127
    %v227 = vpop.permute.xlu0 %226
    %vm228 = vcmask 1039360
    %v229 = vsel %vm228, %v199, %v201
    %v230 = vsel %vm228, %v201, %v203
    %v231 = vsel %vm228, %v203, %v205
    %v232 = vsel %vm228, %v205, %v207
    %v233 = vsel %vm228, %v207, %v209
    %v234 = vsel %vm228, %v209, %v211
    %v235 = vsel %vm228, %v211, %v213
    %v236 = vsel %vm228, %v213, %v215
    %v237 = vsel %vm228, %v215, %v217
    %v238 = vsel %vm228, %v217, %v219
    %v239 = vsel %vm228, %v219, %v221
    %v240 = vsel %vm228, %v221, %v223
    %v241 = vsel %vm228, %v223, %v225
    %v242 = vsel %vm228, %v225, %v227
    %v258 = vrot.slane %v178, 6
    %v259 = vrot.slane %v149, 6
    %v260 = vrot.slane %v150, 6
    %v261 = vrot.slane %v151, 6
    %v262 = vrot.slane %v152, 6
    %v263 = vrot.slane %v153, 6
    %v264 = vrot.slane %v154, 6
    %v265 = vrot.slane %v155, 6
    %v266 = vrot.slane %v156, 6
    %v267 = vrot.slane %v157, 6
    %v268 = vrot.slane %v158, 6
    %v269 = vrot.slane %v159, 6
    %v270 = vrot.slane %v160, 6
    %v271 = vrot.slane %v161, 6
    %v272 = vrot.slane %v180, 6
    %273 = vrot.lane.b32.xlu0 %v258, 126
    %v274 = vpop.permute.xlu0 %273
    %275 = vrot.lane.b32.xlu0 %v259, 126
    %v276 = vpop.permute.xlu0 %275
    %277 = vrot.lane.b32.xlu0 %v260, 126
    %v278 = vpop.permute.xlu0 %277
    %279 = vrot.lane.b32.xlu0 %v261, 126
    %v280 = vpop.permute.xlu0 %279
    %281 = vrot.lane.b32.xlu0 %v262, 126
    %v282 = vpop.permute.xlu0 %281
    %283 = vrot.lane.b32.xlu0 %v263, 126
    %v284 = vpop.permute.xlu0 %283
    %285 = vrot.lane.b32.xlu0 %v264, 126
    %v286 = vpop.permute.xlu0 %285
    %287 = vrot.lane.b32.xlu0 %v265, 126
    %v288 = vpop.permute.xlu0 %287
    %289 = vrot.lane.b32.xlu0 %v266, 126
    %v290 = vpop.permute.xlu0 %289
    %291 = vrot.lane.b32.xlu0 %v267, 126
    %v292 = vpop.permute.xlu0 %291
    %293 = vrot.lane.b32.xlu0 %v268, 126
    %v294 = vpop.permute.xlu0 %293
    %295 = vrot.lane.b32.xlu0 %v269, 126
    %v296 = vpop.permute.xlu0 %295
    %297 = vrot.lane.b32.xlu0 %v270, 126
    %v298 = vpop.permute.xlu0 %297
    %299 = vrot.lane.b32.xlu0 %v271, 126
    %v300 = vpop.permute.xlu0 %299
    %301 = vrot.lane.b32.xlu0 %v272, 126
    %v302 = vpop.permute.xlu0 %301
    %vm303 = vcmask 1031168
    %v304 = vsel %vm303, %v274, %v276
    %v305 = vsel %vm303, %v276, %v278
    %v306 = vsel %vm303, %v278, %v280
    %v307 = vsel %vm303, %v280, %v282
    %v308 = vsel %vm303, %v282, %v284
    %v309 = vsel %vm303, %v284, %v286
    %v310 = vsel %vm303, %v286, %v288
    %v311 = vsel %vm303, %v288, %v290
    %v312 = vsel %vm303, %v290, %v292
    %v313 = vsel %vm303, %v292, %v294
    %v314 = vsel %vm303, %v294, %v296
    %v315 = vsel %vm303, %v296, %v298
    %v316 = vsel %vm303, %v298, %v300
    %v317 = vsel %vm303, %v300, %v302
    %v333 = vrot.slane %v178, 5
    %v334 = vrot.slane %v149, 5
    %v335 = vrot.slane %v150, 5
    %v336 = vrot.slane %v151, 5
    %v337 = vrot.slane %v152, 5
    %v338 = vrot.slane %v153, 5
    %v339 = vrot.slane %v154, 5
    %v340 = vrot.slane %v155, 5
    %v341 = vrot.slane %v156, 5
    %v342 = vrot.slane %v157, 5
    %v343 = vrot.slane %v158, 5
    %v344 = vrot.slane %v159, 5
    %v345 = vrot.slane %v160, 5
    %v346 = vrot.slane %v161, 5
    %v347 = vrot.slane %v180, 5
    %348 = vrot.lane.b32.xlu0 %v333, 98
    %v349 = vpop.permute.xlu0 %348
    %350 = vrot.lane.b32.xlu0 %v334, 98
    %v351 = vpop.permute.xlu0 %350
    %352 = vrot.lane.b32.xlu0 %v335, 98
    %v353 = vpop.permute.xlu0 %352
    %354 = vrot.lane.b32.xlu0 %v336, 98
    %v355 = vpop.permute.xlu0 %354
    %356 = vrot.lane.b32.xlu0 %v337, 98
    %v357 = vpop.permute.xlu0 %356
    %358 = vrot.lane.b32.xlu0 %v338, 98
    %v359 = vpop.permute.xlu0 %358
    %360 = vrot.lane.b32.xlu0 %v339, 98
    %v361 = vpop.permute.xlu0 %360
    %362 = vrot.lane.b32.xlu0 %v340, 98
    %v363 = vpop.permute.xlu0 %362
    %364 = vrot.lane.b32.xlu0 %v341, 98
    %v365 = vpop.permute.xlu0 %364
    %366 = vrot.lane.b32.xlu0 %v342, 98
    %v367 = vpop.permute.xlu0 %366
    %368 = vrot.lane.b32.xlu0 %v343, 98
    %v369 = vpop.permute.xlu0 %368
    %370 = vrot.lane.b32.xlu0 %v344, 98
    %v371 = vpop.permute.xlu0 %370
    %372 = vrot.lane.b32.xlu0 %v345, 98
    %v373 = vpop.permute.xlu0 %372
    %374 = vrot.lane.b32.xlu0 %v346, 98
    %v375 = vpop.permute.xlu0 %374
    %376 = vrot.lane.b32.xlu0 %v347, 98
    %v377 = vpop.permute.xlu0 %376
    %vm378 = vcmask 801792
    %v379 = vsel %vm378, %v349, %v351
    %v380 = vsel %vm378, %v351, %v353
    %v381 = vsel %vm378, %v353, %v355
    %v382 = vsel %vm378, %v355, %v357
    %v383 = vsel %vm378, %v357, %v359
    %v384 = vsel %vm378, %v359, %v361
    %v385 = vsel %vm378, %v361, %v363
    %v386 = vsel %vm378, %v363, %v365
    %v387 = vsel %vm378, %v365, %v367
    %v388 = vsel %vm378, %v367, %v369
    %v389 = vsel %vm378, %v369, %v371
    %v390 = vsel %vm378, %v371, %v373
    %v391 = vsel %vm378, %v373, %v375
    %v392 = vsel %vm378, %v375, %v377
    %v408 = vrot.slane %v178, 4
    %v409 = vrot.slane %v149, 4
    %v410 = vrot.slane %v150, 4
    %v411 = vrot.slane %v151, 4
    %v412 = vrot.slane %v152, 4
    %v413 = vrot.slane %v153, 4
    %v414 = vrot.slane %v154, 4
    %v415 = vrot.slane %v155, 4
    %v416 = vrot.slane %v156, 4
    %v417 = vrot.slane %v157, 4
    %v418 = vrot.slane %v158, 4
    %v419 = vrot.slane %v159, 4
    %v420 = vrot.slane %v160, 4
    %v421 = vrot.slane %v161, 4
    %v422 = vrot.slane %v180, 4
    %423 = vrot.lane.b32.xlu0 %v408, 97
    %v424 = vpop.permute.xlu0 %423
    %425 = vrot.lane.b32.xlu0 %v409, 97
    %v426 = vpop.permute.xlu0 %425
    %427 = vrot.lane.b32.xlu0 %v410, 97
    %v428 = vpop.permute.xlu0 %427
    %429 = vrot.lane.b32.xlu0 %v411, 97
    %v430 = vpop.permute.xlu0 %429
    %431 = vrot.lane.b32.xlu0 %v412, 97
    %v432 = vpop.permute.xlu0 %431
    %433 = vrot.lane.b32.xlu0 %v413, 97
    %v434 = vpop.permute.xlu0 %433
    %435 = vrot.lane.b32.xlu0 %v414, 97
    %v436 = vpop.permute.xlu0 %435
    %437 = vrot.lane.b32.xlu0 %v415, 97
    %v438 = vpop.permute.xlu0 %437
    %439 = vrot.lane.b32.xlu0 %v416, 97
    %v440 = vpop.permute.xlu0 %439
    %441 = vrot.lane.b32.xlu0 %v417, 97
    %v442 = vpop.permute.xlu0 %441
    %443 = vrot.lane.b32.xlu0 %v418, 97
    %v444 = vpop.permute.xlu0 %443
    %445 = vrot.lane.b32.xlu0 %v419, 97
    %v446 = vpop.permute.xlu0 %445
    %447 = vrot.lane.b32.xlu0 %v420, 97
    %v448 = vpop.permute.xlu0 %447
    %449 = vrot.lane.b32.xlu0 %v421, 97
    %v450 = vpop.permute.xlu0 %449
    %451 = vrot.lane.b32.xlu0 %v422, 97
    %v452 = vpop.permute.xlu0 %451
    %vm453 = vcmask 793600
    %v454 = vsel %vm453, %v424, %v426
    %v455 = vsel %vm453, %v426, %v428
    %v456 = vsel %vm453, %v428, %v430
    %v457 = vsel %vm453, %v430, %v432
    %v458 = vsel %vm453, %v432, %v434
    %v459 = vsel %vm453, %v434, %v436
    %v460 = vsel %vm453, %v436, %v438
    %v461 = vsel %vm453, %v438, %v440
    %v462 = vsel %vm453, %v440, %v442
    %v463 = vsel %vm453, %v442, %v444
    %v464 = vsel %vm453, %v444, %v446
    %v465 = vsel %vm453, %v446, %v448
    %v466 = vsel %vm453, %v448, %v450
    %v467 = vsel %vm453, %v450, %v452
    %v483 = vrot.slane %v178, 3
    %v484 = vrot.slane %v149, 3
    %v485 = vrot.slane %v150, 3
    %v486 = vrot.slane %v151, 3
    %v487 = vrot.slane %v152, 3
    %v488 = vrot.slane %v153, 3
    %v489 = vrot.slane %v154, 3
    %v490 = vrot.slane %v155, 3
    %v491 = vrot.slane %v156, 3
    %v492 = vrot.slane %v157, 3
    %v493 = vrot.slane %v158, 3
    %v494 = vrot.slane %v159, 3
    %v495 = vrot.slane %v160, 3
    %v496 = vrot.slane %v161, 3
    %v497 = vrot.slane %v180, 3
    %498 = vrot.lane.b32.xlu0 %v483, 96
    %v499 = vpop.permute.xlu0 %498
    %500 = vrot.lane.b32.xlu0 %v484, 96
    %v501 = vpop.permute.xlu0 %500
    %502 = vrot.lane.b32.xlu0 %v485, 96
    %v503 = vpop.permute.xlu0 %502
    %504 = vrot.lane.b32.xlu0 %v486, 96
    %v505 = vpop.permute.xlu0 %504
    %506 = vrot.lane.b32.xlu0 %v487, 96
    %v507 = vpop.permute.xlu0 %506
    %508 = vrot.lane.b32.xlu0 %v488, 96
    %v509 = vpop.permute.xlu0 %508
    %510 = vrot.lane.b32.xlu0 %v489, 96
    %v511 = vpop.permute.xlu0 %510
    %512 = vrot.lane.b32.xlu0 %v490, 96
    %v513 = vpop.permute.xlu0 %512
    %514 = vrot.lane.b32.xlu0 %v491, 96
    %v515 = vpop.permute.xlu0 %514
    %516 = vrot.lane.b32.xlu0 %v492, 96
    %v517 = vpop.permute.xlu0 %516
    %518 = vrot.lane.b32.xlu0 %v493, 96
    %v519 = vpop.permute.xlu0 %518
    %520 = vrot.lane.b32.xlu0 %v494, 96
    %v521 = vpop.permute.xlu0 %520
    %522 = vrot.lane.b32.xlu0 %v495, 96
    %v523 = vpop.permute.xlu0 %522
    %524 = vrot.lane.b32.xlu0 %v496, 96
    %v525 = vpop.permute.xlu0 %524
    %526 = vrot.lane.b32.xlu0 %v497, 96
    %v527 = vpop.permute.xlu0 %526
    %vm528 = vcmask 785408
    %v529 = vsel %vm528, %v499, %v501
    %v530 = vsel %vm528, %v501, %v503
    %v531 = vsel %vm528, %v503, %v505
    %v532 = vsel %vm528, %v505, %v507
    %v533 = vsel %vm528, %v507, %v509
    %v534 = vsel %vm528, %v509, %v511
    %v535 = vsel %vm528, %v511, %v513
    %v536 = vsel %vm528, %v513, %v515
    %v537 = vsel %vm528, %v515, %v517
    %v538 = vsel %vm528, %v517, %v519
    %v539 = vsel %vm528, %v519, %v521
    %v540 = vsel %vm528, %v521, %v523
    %v541 = vsel %vm528, %v523, %v525
    %v542 = vsel %vm528, %v525, %v527
    %v558 = vrot.slane %v178, 2
    %v559 = vrot.slane %v149, 2
    %v560 = vrot.slane %v150, 2
    %v561 = vrot.slane %v151, 2
    %v562 = vrot.slane %v152, 2
    %v563 = vrot.slane %v153, 2
    %v564 = vrot.slane %v154, 2
    %v565 = vrot.slane %v155, 2
    %v566 = vrot.slane %v156, 2
    %v567 = vrot.slane %v157, 2
    %v568 = vrot.slane %v158, 2
    %v569 = vrot.slane %v159, 2
    %v570 = vrot.slane %v160, 2
    %v571 = vrot.slane %v161, 2
    %v572 = vrot.slane %v180, 2
    %573 = vrot.lane.b32.xlu0 %v558, 68
    %v574 = vpop.permute.xlu0 %573
    %575 = vrot.lane.b32.xlu0 %v559, 68
    %v576 = vpop.permute.xlu0 %575
    %577 = vrot.lane.b32.xlu0 %v560, 68
    %v578 = vpop.permute.xlu0 %577
    %579 = vrot.lane.b32.xlu0 %v561, 68
    %v580 = vpop.permute.xlu0 %579
    %581 = vrot.lane.b32.xlu0 %v562, 68
    %v582 = vpop.permute.xlu0 %581
    %583 = vrot.lane.b32.xlu0 %v563, 68
    %v584 = vpop.permute.xlu0 %583
    %585 = vrot.lane.b32.xlu0 %v564, 68
    %v586 = vpop.permute.xlu0 %585
    %587 = vrot.lane.b32.xlu0 %v565, 68
    %v588 = vpop.permute.xlu0 %587
    %589 = vrot.lane.b32.xlu0 %v566, 68
    %v590 = vpop.permute.xlu0 %589
    %591 = vrot.lane.b32.xlu0 %v567, 68
    %v592 = vpop.permute.xlu0 %591
    %593 = vrot.lane.b32.xlu0 %v568, 68
    %v594 = vpop.permute.xlu0 %593
    %595 = vrot.lane.b32.xlu0 %v569, 68
    %v596 = vpop.permute.xlu0 %595
    %597 = vrot.lane.b32.xlu0 %v570, 68
    %v598 = vpop.permute.xlu0 %597
    %599 = vrot.lane.b32.xlu0 %v571, 68
    %v600 = vpop.permute.xlu0 %599
    %601 = vrot.lane.b32.xlu0 %v572, 68
    %v602 = vpop.permute.xlu0 %601
    %vm603 = vcmask 556032
    %v604 = vsel %vm603, %v574, %v576
    %v605 = vsel %vm603, %v576, %v578
    %v606 = vsel %vm603, %v578, %v580
    %v607 = vsel %vm603, %v580, %v582
    %v608 = vsel %vm603, %v582, %v584
    %v609 = vsel %vm603, %v584, %v586
    %v610 = vsel %vm603, %v586, %v588
    %v611 = vsel %vm603, %v588, %v590
    %v612 = vsel %vm603, %v590, %v592
    %v613 = vsel %vm603, %v592, %v594
    %v614 = vsel %vm603, %v594, %v596
    %v615 = vsel %vm603, %v596, %v598
    %v616 = vsel %vm603, %v598, %v600
    %v617 = vsel %vm603, %v600, %v602
    %v633 = vrot.slane %v178, 1
    %v634 = vrot.slane %v149, 1
    %v635 = vrot.slane %v150, 1
    %v636 = vrot.slane %v151, 1
    %v637 = vrot.slane %v152, 1
    %v638 = vrot.slane %v153, 1
    %v639 = vrot.slane %v154, 1
    %v640 = vrot.slane %v155, 1
    %v641 = vrot.slane %v156, 1
    %v642 = vrot.slane %v157, 1
    %v643 = vrot.slane %v158, 1
    %v644 = vrot.slane %v159, 1
    %v645 = vrot.slane %v160, 1
    %v646 = vrot.slane %v161, 1
    %v647 = vrot.slane %v180, 1
    %648 = vrot.lane.b32.xlu0 %v633, 67
    %v649 = vpop.permute.xlu0 %648
    %650 = vrot.lane.b32.xlu0 %v634, 67
    %v651 = vpop.permute.xlu0 %650
    %652 = vrot.lane.b32.xlu0 %v635, 67
    %v653 = vpop.permute.xlu0 %652
    %654 = vrot.lane.b32.xlu0 %v636, 67
    %v655 = vpop.permute.xlu0 %654
    %656 = vrot.lane.b32.xlu0 %v637, 67
    %v657 = vpop.permute.xlu0 %656
    %658 = vrot.lane.b32.xlu0 %v638, 67
    %v659 = vpop.permute.xlu0 %658
    %660 = vrot.lane.b32.xlu0 %v639, 67
    %v661 = vpop.permute.xlu0 %660
    %662 = vrot.lane.b32.xlu0 %v640, 67
    %v663 = vpop.permute.xlu0 %662
    %664 = vrot.lane.b32.xlu0 %v641, 67
    %v665 = vpop.permute.xlu0 %664
    %666 = vrot.lane.b32.xlu0 %v642, 67
    %v667 = vpop.permute.xlu0 %666
    %668 = vrot.lane.b32.xlu0 %v643, 67
    %v669 = vpop.permute.xlu0 %668
    %670 = vrot.lane.b32.xlu0 %v644, 67
    %v671 = vpop.permute.xlu0 %670
    %672 = vrot.lane.b32.xlu0 %v645, 67
    %v673 = vpop.permute.xlu0 %672
    %674 = vrot.lane.b32.xlu0 %v646, 67
    %v675 = vpop.permute.xlu0 %674
    %676 = vrot.lane.b32.xlu0 %v647, 67
    %v677 = vpop.permute.xlu0 %676
    %vm678 = vcmask 547840
    %v679 = vsel %vm678, %v649, %v651
    %v680 = vsel %vm678, %v651, %v653
    %v681 = vsel %vm678, %v653, %v655
    %v682 = vsel %vm678, %v655, %v657
    %v683 = vsel %vm678, %v657, %v659
    %v684 = vsel %vm678, %v659, %v661
    %v685 = vsel %vm678, %v661, %v663
    %v686 = vsel %vm678, %v663, %v665
    %v687 = vsel %vm678, %v665, %v667
    %v688 = vsel %vm678, %v667, %v669
    %v689 = vsel %vm678, %v669, %v671
    %v690 = vsel %vm678, %v671, %v673
    %v691 = vsel %vm678, %v673, %v675
    %v692 = vsel %vm678, %v675, %v677
    %708 = vrot.lane.b32.xlu0 %v178, 66
    %v709 = vpop.permute.xlu0 %708
    %710 = vrot.lane.b32.xlu0 %v149, 66
    %v711 = vpop.permute.xlu0 %710
    %712 = vrot.lane.b32.xlu0 %v150, 66
    %v713 = vpop.permute.xlu0 %712
    %714 = vrot.lane.b32.xlu0 %v151, 66
    %v715 = vpop.permute.xlu0 %714
    %716 = vrot.lane.b32.xlu0 %v152, 66
    %v717 = vpop.permute.xlu0 %716
    %718 = vrot.lane.b32.xlu0 %v153, 66
    %v719 = vpop.permute.xlu0 %718
    %720 = vrot.lane.b32.xlu0 %v154, 66
    %v721 = vpop.permute.xlu0 %720
    %722 = vrot.lane.b32.xlu0 %v155, 66
    %v723 = vpop.permute.xlu0 %722
    %724 = vrot.lane.b32.xlu0 %v156, 66
    %v725 = vpop.permute.xlu0 %724
    %726 = vrot.lane.b32.xlu0 %v157, 66
    %v727 = vpop.permute.xlu0 %726
    %728 = vrot.lane.b32.xlu0 %v158, 66
    %v729 = vpop.permute.xlu0 %728
    %730 = vrot.lane.b32.xlu0 %v159, 66
    %v731 = vpop.permute.xlu0 %730
    %732 = vrot.lane.b32.xlu0 %v160, 66
    %v733 = vpop.permute.xlu0 %732
    %734 = vrot.lane.b32.xlu0 %v161, 66
    %v735 = vpop.permute.xlu0 %734
    %736 = vrot.lane.b32.xlu0 %v180, 66
    %v737 = vpop.permute.xlu0 %736
    %vm738 = vcmask 539648
    %v739 = vsel %vm738, %v709, %v711
    %v740 = vsel %vm738, %v711, %v713
    %v741 = vsel %vm738, %v713, %v715
    %v742 = vsel %vm738, %v715, %v717
    %v743 = vsel %vm738, %v717, %v719
    %v744 = vsel %vm738, %v719, %v721
    %v745 = vsel %vm738, %v721, %v723
    %v746 = vsel %vm738, %v723, %v725
    %v747 = vsel %vm738, %v725, %v727
    %v748 = vsel %vm738, %v727, %v729
    %v749 = vsel %vm738, %v729, %v731
    %v750 = vsel %vm738, %v731, %v733
    %v751 = vsel %vm738, %v733, %v735
    %v752 = vsel %vm738, %v735, %v737
    %vm768 = vcmask 1040384
    %v769 = vsel %vm768, %v178, %v229
    %v770 = vsel %vm768, %v149, %v230
    %v771 = vsel %vm768, %v150, %v231
    %v772 = vsel %vm768, %v151, %v232
    %v773 = vsel %vm768, %v152, %v233
    %v774 = vsel %vm768, %v153, %v234
    %v775 = vsel %vm768, %v154, %v235
    %v776 = vsel %vm768, %v155, %v236
    %v777 = vsel %vm768, %v156, %v237
    %v778 = vsel %vm768, %v157, %v238
    %v779 = vsel %vm768, %v158, %v239
    %v780 = vsel %vm768, %v159, %v240
    %v781 = vsel %vm768, %v160, %v241
    %v782 = vsel %vm768, %v161, %v242
    %v783 = vsel %vm768, %v180, %v227
    %vm784 = vcmask 1041408
    %v785 = vsel %vm784, %v769, %v304
    %v786 = vsel %vm784, %v770, %v305
    %v787 = vsel %vm784, %v771, %v306
    %v788 = vsel %vm784, %v772, %v307
    %v789 = vsel %vm784, %v773, %v308
    %v790 = vsel %vm784, %v774, %v309
    %v791 = vsel %vm784, %v775, %v310
    %v792 = vsel %vm784, %v776, %v311
    %v793 = vsel %vm784, %v777, %v312
    %v794 = vsel %vm784, %v778, %v313
    %v795 = vsel %vm784, %v779, %v314
    %v796 = vsel %vm784, %v780, %v315
    %v797 = vsel %vm784, %v781, %v316
    %v798 = vsel %vm784, %v782, %v317
    %v799 = vsel %vm784, %v783, %v302
    %vm800 = vcmask 1042432
    %v801 = vsel %vm800, %v785, %v379
    %v802 = vsel %vm800, %v786, %v380
    %v803 = vsel %vm800, %v787, %v381
    %v804 = vsel %vm800, %v788, %v382
    %v805 = vsel %vm800, %v789, %v383
    %v806 = vsel %vm800, %v790, %v384
    %v807 = vsel %vm800, %v791, %v385
    %v808 = vsel %vm800, %v792, %v386
    %v809 = vsel %vm800, %v793, %v387
    %v810 = vsel %vm800, %v794, %v388
    %v811 = vsel %vm800, %v795, %v389
    %v812 = vsel %vm800, %v796, %v390
    %v813 = vsel %vm800, %v797, %v391
    %v814 = vsel %vm800, %v798, %v392
    %v815 = vsel %vm800, %v799, %v377
    %vm816 = vcmask 1043456
    %v817 = vsel %vm816, %v801, %v454
    %v818 = vsel %vm816, %v802, %v455
    %v819 = vsel %vm816, %v803, %v456
    %v820 = vsel %vm816, %v804, %v457
    %v821 = vsel %vm816, %v805, %v458
    %v822 = vsel %vm816, %v806, %v459
    %v823 = vsel %vm816, %v807, %v460
    %v824 = vsel %vm816, %v808, %v461
    %v825 = vsel %vm816, %v809, %v462
    %v826 = vsel %vm816, %v810, %v463
    %v827 = vsel %vm816, %v811, %v464
    %v828 = vsel %vm816, %v812, %v465
    %v829 = vsel %vm816, %v813, %v466
    %v830 = vsel %vm816, %v814, %v467
    %v831 = vsel %vm816, %v815, %v452
    %vm832 = vcmask 1044480
    %v833 = vsel %vm832, %v817, %v529
    %v834 = vsel %vm832, %v818, %v530
    %v835 = vsel %vm832, %v819, %v531
    %v836 = vsel %vm832, %v820, %v532
    %v837 = vsel %vm832, %v821, %v533
    %v838 = vsel %vm832, %v822, %v534
    %v839 = vsel %vm832, %v823, %v535
    %v840 = vsel %vm832, %v824, %v536
    %v841 = vsel %vm832, %v825, %v537
    %v842 = vsel %vm832, %v826, %v538
    %v843 = vsel %vm832, %v827, %v539
    %v844 = vsel %vm832, %v828, %v540
    %v845 = vsel %vm832, %v829, %v541
    %v846 = vsel %vm832, %v830, %v542
    %v847 = vsel %vm832, %v831, %v527
    %vm848 = vcmask 1045504
    %v849 = vsel %vm848, %v833, %v604
    %v850 = vsel %vm848, %v834, %v605
    %v851 = vsel %vm848, %v835, %v606
    %v852 = vsel %vm848, %v836, %v607
    %v853 = vsel %vm848, %v837, %v608
    %v854 = vsel %vm848, %v838, %v609
    %v855 = vsel %vm848, %v839, %v610
    %v856 = vsel %vm848, %v840, %v611
    %v857 = vsel %vm848, %v841, %v612
    %v858 = vsel %vm848, %v842, %v613
    %v859 = vsel %vm848, %v843, %v614
    %v860 = vsel %vm848, %v844, %v615
    %v861 = vsel %vm848, %v845, %v616
    %v862 = vsel %vm848, %v846, %v617
    %v863 = vsel %vm848, %v847, %v602
    %vm864 = vcmask 1046528
    %v865 = vsel %vm864, %v849, %v679
    %v866 = vsel %vm864, %v850, %v680
    %v867 = vsel %vm864, %v851, %v681
    %v868 = vsel %vm864, %v852, %v682
    %v869 = vsel %vm864, %v853, %v683
    %v870 = vsel %vm864, %v854, %v684
    %v871 = vsel %vm864, %v855, %v685
    %v872 = vsel %vm864, %v856, %v686
    %v873 = vsel %vm864, %v857, %v687
    %v874 = vsel %vm864, %v858, %v688
    %v875 = vsel %vm864, %v859, %v689
    %v876 = vsel %vm864, %v860, %v690
    %v877 = vsel %vm864, %v861, %v691
    %v878 = vsel %vm864, %v862, %v692
    %v879 = vsel %vm864, %v863, %v677
    %v880 = vpack.c.bf16 %v739, %v865
    %v881 = vpack.c.bf16 %v740, %v866
    %v882 = vpack.c.bf16 %v741, %v867
    %v883 = vpack.c.bf16 %v742, %v868
    %v884 = vpack.c.bf16 %v743, %v869
    %v885 = vpack.c.bf16 %v744, %v870
    %v886 = vpack.c.bf16 %v745, %v871
    %v887 = vpack.c.bf16 %v746, %v872
    %v888 = vpack.c.bf16 %v747, %v873
    %v889 = vpack.c.bf16 %v748, %v874
    %v890 = vpack.c.bf16 %v749, %v875
    %v891 = vpack.c.bf16 %v750, %v876
    %v892 = vpack.c.bf16 %v751, %v877
    %v893 = vpack.c.bf16 %v752, %v878
    %v894 = vpack.c.bf16 %v737, %v879
    %v895 = vld [vmem:[%s1] sm:$0xf]
    %v896 = vld [vmem:[%s2] sm:$0xff]
    %898 = vset.pattern.permute.xlu0 0
    %899 = vperm.xlu0 %898, %v896
    %v900 = vpop.permute.xlu0 %899
    %vm902 = vcmask 72704
    %v904 = vsel %vm902, %v895, 0
    %v906 = vsel %vm816, 4294967295, 65535
    %v907 = vsel %vm832, %v906, 0
    %v909 = vand.u32 %v880, %v907
    %v912 = vand.u32 %v881, %v907
    %v915 = vand.u32 %v882, %v907
    %v918 = vand.u32 %v883, %v907
    %v921 = vand.u32 %v884, %v907
    %v924 = vand.u32 %v885, %v907
    %v927 = vand.u32 %v886, %v907
    %v930 = vand.u32 %v887, %v907
    %v933 = vand.u32 %v888, %v907
    %v936 = vand.u32 %v889, %v907
    %v939 = vand.u32 %v890, %v907
    %v942 = vand.u32 %v891, %v907
    %v945 = vand.u32 %v892, %v907
    %v948 = vand.u32 %v893, %v907
    %v951 = vand.u32 %v894, %v907
    %953 = vmatprep.subr.bf16.mxu0 0
    %954 = vmatpush1.bf16.msra.mxu0 0
    %955 = vmatprep.subr.bf16.mxu0 0
    %956 = vmatpush1.bf16.msra.mxu0 0
    %957 = vmatprep.subr.bf16.mxu0 0
    %958 = vmatpush1.bf16.msra.mxu0 0
    %959 = vmatprep.subr.bf16.mxu0 0
    %960 = vmatpush1.bf16.msra.mxu0 0
    %961 = vmatprep.subr.bf16.mxu0 0
    %962 = vmatpush1.bf16.msra.mxu0 0
    %963 = vmatprep.subr.bf16.mxu0 0
    %964 = vmatpush1.bf16.msra.mxu0 0
    %965 = vmatprep.subr.bf16.mxu0 0
    %966 = vmatpush1.bf16.msra.mxu0 0
    %967 = vmatprep.subr.bf16.mxu0 %v912
    %968 = vmatpush1.bf16.msra.mxu0 %v909
    %969 = vmatprep.subr.bf16.mxu0 0
    %970 = vmatpush2.bf16.msra.mxu0 0
    %971 = vmatprep.subr.bf16.mxu0 0
    %972 = vmatpush2.bf16.msra.mxu0 0
    %973 = vmatprep.subr.bf16.mxu0 0
    %974 = vmatpush2.bf16.msra.mxu0 0
    %975 = vmatprep.subr.bf16.mxu0 0
    %976 = vmatpush2.bf16.msra.mxu0 0
    %977 = vmatprep.subr.bf16.mxu0 0
    %978 = vmatpush2.bf16.msra.mxu0 0
    %979 = vmatprep.subr.bf16.mxu0 0
    %980 = vmatpush2.bf16.msra.mxu0 0
    %981 = vmatprep.subr.bf16.mxu0 0
    %982 = vmatpush2.bf16.msra.mxu0 0
    %983 = vmatprep.subr.bf16.mxu0 0
    %984 = vmatpush2.bf16.msra.mxu0 0
    %985 = vmatprep.mubr.bf16.mxu0 0
    %986 = vmatmul.mubr.bf16.gmra.mxu0 %v904
    %v987 = vpop.f32.mrf.mxu0
    %v988 = vadd.f32 %v900, %v987
    %v989 = vpop.f32.mrf.mxu0
    %v990 = vadd.f32 %v900, %v989
    %v991 = vpop.f32.mrf.mxu0
    %v992 = vpop.f32.mrf.mxu0
    %993 = vdwg.mxu0
    %994 = vmatprep.subr.bf16.mxu0 0
    %995 = vmatpush1.bf16.msra.mxu0 0
    %996 = vmatprep.subr.bf16.mxu0 0
    %997 = vmatpush1.bf16.msra.mxu0 0
    %998 = vmatprep.subr.bf16.mxu0 0
    %999 = vmatpush1.bf16.msra.mxu0 0
    %1000 = vmatprep.subr.bf16.mxu0 0
    %1001 = vmatpush1.bf16.msra.mxu0 0
    %1002 = vmatprep.subr.bf16.mxu0 0
    %1003 = vmatpush1.bf16.msra.mxu0 0
    %1004 = vmatprep.subr.bf16.mxu0 0
    %1005 = vmatpush1.bf16.msra.mxu0 0
    %1006 = vmatprep.subr.bf16.mxu0 0
    %1007 = vmatpush1.bf16.msra.mxu0 0
    %1008 = vmatprep.subr.bf16.mxu0 %v918
    %1009 = vmatpush1.bf16.msra.mxu0 %v915
    %1010 = vmatprep.subr.bf16.mxu0 0
    %1011 = vmatpush2.bf16.msra.mxu0 0
    %1012 = vmatprep.subr.bf16.mxu0 0
    %1013 = vmatpush2.bf16.msra.mxu0 0
    %1014 = vmatprep.subr.bf16.mxu0 0
    %1015 = vmatpush2.bf16.msra.mxu0 0
    %1016 = vmatprep.subr.bf16.mxu0 0
    %1017 = vmatpush2.bf16.msra.mxu0 0
    %1018 = vmatprep.subr.bf16.mxu0 0
    %1019 = vmatpush2.bf16.msra.mxu0 0
    %1020 = vmatprep.subr.bf16.mxu0 0
    %1021 = vmatpush2.bf16.msra.mxu0 0
    %1022 = vmatprep.subr.bf16.mxu0 0
    %1023 = vmatpush2.bf16.msra.mxu0 0
    %1024 = vmatprep.subr.bf16.mxu0 0
    %1025 = vmatpush2.bf16.msra.mxu0 0
    %1026 = vmatprep.mubr.bf16.mxu0 0
    %1027 = vmatmul.mubr.bf16.gmra.mxu0 %v904
    %v1028 = vpop.f32.mrf.mxu0
    %v1029 = vadd.f32 %v900, %v1028
    %v1030 = vpop.f32.mrf.mxu0
    %v1031 = vadd.f32 %v900, %v1030
    %v1032 = vpop.f32.mrf.mxu0
    %v1033 = vpop.f32.mrf.mxu0
    %1034 = vdwg.mxu0
    %1035 = vmatprep.subr.bf16.mxu0 0
    %1036 = vmatpush1.bf16.msra.mxu0 0
    %1037 = vmatprep.subr.bf16.mxu0 0
    %1038 = vmatpush1.bf16.msra.mxu0 0
    %1039 = vmatprep.subr.bf16.mxu0 0
    %1040 = vmatpush1.bf16.msra.mxu0 0
    %1041 = vmatprep.subr.bf16.mxu0 0
    %1042 = vmatpush1.bf16.msra.mxu0 0
    %1043 = vmatprep.subr.bf16.mxu0 0
    %1044 = vmatpush1.bf16.msra.mxu0 0
    %1045 = vmatprep.subr.bf16.mxu0 0
    %1046 = vmatpush1.bf16.msra.mxu0 0
    %1047 = vmatprep.subr.bf16.mxu0 0
    %1048 = vmatpush1.bf16.msra.mxu0 0
    %1049 = vmatprep.subr.bf16.mxu0 %v924
    %1050 = vmatpush1.bf16.msra.mxu0 %v921
    %1051 = vmatprep.subr.bf16.mxu0 0
    %1052 = vmatpush2.bf16.msra.mxu0 0
    %1053 = vmatprep.subr.bf16.mxu0 0
    %1054 = vmatpush2.bf16.msra.mxu0 0
    %1055 = vmatprep.subr.bf16.mxu0 0
    %1056 = vmatpush2.bf16.msra.mxu0 0
    %1057 = vmatprep.subr.bf16.mxu0 0
    %1058 = vmatpush2.bf16.msra.mxu0 0
    %1059 = vmatprep.subr.bf16.mxu0 0
    %1060 = vmatpush2.bf16.msra.mxu0 0
    %1061 = vmatprep.subr.bf16.mxu0 0
    %1062 = vmatpush2.bf16.msra.mxu0 0
    %1063 = vmatprep.subr.bf16.mxu0 0
    %1064 = vmatpush2.bf16.msra.mxu0 0
    %1065 = vmatprep.subr.bf16.mxu0 0
    %1066 = vmatpush2.bf16.msra.mxu0 0
    %1067 = vmatprep.mubr.bf16.mxu0 0
    %1068 = vmatmul.mubr.bf16.gmra.mxu0 %v904
    %v1069 = vpop.f32.mrf.mxu0
    %v1070 = vadd.f32 %v900, %v1069
    %v1071 = vpop.f32.mrf.mxu0
    %v1072 = vadd.f32 %v900, %v1071
    %v1073 = vpop.f32.mrf.mxu0
    %v1074 = vpop.f32.mrf.mxu0
    %1075 = vdwg.mxu0
    %1076 = vmatprep.subr.bf16.mxu0 0
    %1077 = vmatpush1.bf16.msra.mxu0 0
    %1078 = vmatprep.subr.bf16.mxu0 0
    %1079 = vmatpush1.bf16.msra.mxu0 0
    %1080 = vmatprep.subr.bf16.mxu0 0
    %1081 = vmatpush1.bf16.msra.mxu0 0
    %1082 = vmatprep.subr.bf16.mxu0 0
    %1083 = vmatpush1.bf16.msra.mxu0 0
    %1084 = vmatprep.subr.bf16.mxu0 0
    %1085 = vmatpush1.bf16.msra.mxu0 0
    %1086 = vmatprep.subr.bf16.mxu0 0
    %1087 = vmatpush1.bf16.msra.mxu0 0
    %1088 = vmatprep.subr.bf16.mxu0 0
    %1089 = vmatpush1.bf16.msra.mxu0 0
    %1090 = vmatprep.subr.bf16.mxu0 %v930
    %1091 = vmatpush1.bf16.msra.mxu0 %v927
    %1092 = vmatprep.subr.bf16.mxu0 0
    %1093 = vmatpush2.bf16.msra.mxu0 0
    %1094 = vmatprep.subr.bf16.mxu0 0
    %1095 = vmatpush2.bf16.msra.mxu0 0
    %1096 = vmatprep.subr.bf16.mxu0 0
    %1097 = vmatpush2.bf16.msra.mxu0 0
    %1098 = vmatprep.subr.bf16.mxu0 0
    %1099 = vmatpush2.bf16.msra.mxu0 0
    %1100 = vmatprep.subr.bf16.mxu0 0
    %1101 = vmatpush2.bf16.msra.mxu0 0
    %1102 = vmatprep.subr.bf16.mxu0 0
    %1103 = vmatpush2.bf16.msra.mxu0 0
    %1104 = vmatprep.subr.bf16.mxu0 0
    %1105 = vmatpush2.bf16.msra.mxu0 0
    %1106 = vmatprep.subr.bf16.mxu0 0
    %1107 = vmatpush2.bf16.msra.mxu0 0
    %1108 = vmatprep.mubr.bf16.mxu0 0
    %1109 = vmatmul.mubr.bf16.gmra.mxu0 %v904
    %v1110 = vpop.f32.mrf.mxu0
    %v1111 = vadd.f32 %v900, %v1110
    %v1112 = vpop.f32.mrf.mxu0
    %v1113 = vadd.f32 %v900, %v1112
    %v1114 = vpop.f32.mrf.mxu0
    %v1115 = vpop.f32.mrf.mxu0
    %1116 = vdwg.mxu0
    %1117 = vmatprep.subr.bf16.mxu0 0
    %1118 = vmatpush1.bf16.msra.mxu0 0
    %1119 = vmatprep.subr.bf16.mxu0 0
    %1120 = vmatpush1.bf16.msra.mxu0 0
    %1121 = vmatprep.subr.bf16.mxu0 0
    %1122 = vmatpush1.bf16.msra.mxu0 0
    %1123 = vmatprep.subr.bf16.mxu0 0
    %1124 = vmatpush1.bf16.msra.mxu0 0
    %1125 = vmatprep.subr.bf16.mxu0 0
    %1126 = vmatpush1.bf16.msra.mxu0 0
    %1127 = vmatprep.subr.bf16.mxu0 0
    %1128 = vmatpush1.bf16.msra.mxu0 0
    %1129 = vmatprep.subr.bf16.mxu0 0
    %1130 = vmatpush1.bf16.msra.mxu0 0
    %1131 = vmatprep.subr.bf16.mxu0 %v936
    %1132 = vmatpush1.bf16.msra.mxu0 %v933
    %1133 = vmatprep.subr.bf16.mxu0 0
    %1134 = vmatpush2.bf16.msra.mxu0 0
    %1135 = vmatprep.subr.bf16.mxu0 0
    %1136 = vmatpush2.bf16.msra.mxu0 0
    %1137 = vmatprep.subr.bf16.mxu0 0
    %1138 = vmatpush2.bf16.msra.mxu0 0
    %1139 = vmatprep.subr.bf16.mxu0 0
    %1140 = vmatpush2.bf16.msra.mxu0 0
    %1141 = vmatprep.subr.bf16.mxu0 0
    %1142 = vmatpush2.bf16.msra.mxu0 0
    %1143 = vmatprep.subr.bf16.mxu0 0
    %1144 = vmatpush2.bf16.msra.mxu0 0
    %1145 = vmatprep.subr.bf16.mxu0 0
    %1146 = vmatpush2.bf16.msra.mxu0 0
    %1147 = vmatprep.subr.bf16.mxu0 0
    %1148 = vmatpush2.bf16.msra.mxu0 0
    %1149 = vmatprep.mubr.bf16.mxu0 0
    %1150 = vmatmul.mubr.bf16.gmra.mxu0 %v904
    %v1151 = vpop.f32.mrf.mxu0
    %v1152 = vadd.f32 %v900, %v1151
    %v1153 = vpop.f32.mrf.mxu0
    %v1154 = vadd.f32 %v900, %v1153
    %v1155 = vpop.f32.mrf.mxu0
    %v1156 = vpop.f32.mrf.mxu0
    %1157 = vdwg.mxu0
    %1158 = vmatprep.subr.bf16.mxu0 0
    %1159 = vmatpush1.bf16.msra.mxu0 0
    %1160 = vmatprep.subr.bf16.mxu0 0
    %1161 = vmatpush1.bf16.msra.mxu0 0
    %1162 = vmatprep.subr.bf16.mxu0 0
    %1163 = vmatpush1.bf16.msra.mxu0 0
    %1164 = vmatprep.subr.bf16.mxu0 0
    %1165 = vmatpush1.bf16.msra.mxu0 0
    %1166 = vmatprep.subr.bf16.mxu0 0
    %1167 = vmatpush1.bf16.msra.mxu0 0
    %1168 = vmatprep.subr.bf16.mxu0 0
    %1169 = vmatpush1.bf16.msra.mxu0 0
    %1170 = vmatprep.subr.bf16.mxu0 0
    %1171 = vmatpush1.bf16.msra.mxu0 0
    %1172 = vmatprep.subr.bf16.mxu0 %v942
    %1173 = vmatpush1.bf16.msra.mxu0 %v939
    %1174 = vmatprep.subr.bf16.mxu0 0
    %1175 = vmatpush2.bf16.msra.mxu0 0
    %1176 = vmatprep.subr.bf16.mxu0 0
    %1177 = vmatpush2.bf16.msra.mxu0 0
    %1178 = vmatprep.subr.bf16.mxu0 0
    %1179 = vmatpush2.bf16.msra.mxu0 0
    %1180 = vmatprep.subr.bf16.mxu0 0
    %1181 = vmatpush2.bf16.msra.mxu0 0
    %1182 = vmatprep.subr.bf16.mxu0 0
    %1183 = vmatpush2.bf16.msra.mxu0 0
    %1184 = vmatprep.subr.bf16.mxu0 0
    %1185 = vmatpush2.bf16.msra.mxu0 0
    %1186 = vmatprep.subr.bf16.mxu0 0
    %1187 = vmatpush2.bf16.msra.mxu0 0
    %1188 = vmatprep.subr.bf16.mxu0 0
    %1189 = vmatpush2.bf16.msra.mxu0 0
    %1190 = vmatprep.mubr.bf16.mxu0 0
    %1191 = vmatmul.mubr.bf16.gmra.mxu0 %v904
    %v1192 = vpop.f32.mrf.mxu0
    %v1193 = vadd.f32 %v900, %v1192
    %v1194 = vpop.f32.mrf.mxu0
    %v1195 = vadd.f32 %v900, %v1194
    %v1196 = vpop.f32.mrf.mxu0
    %v1197 = vpop.f32.mrf.mxu0
    %1198 = vdwg.mxu0
    %1199 = vmatprep.subr.bf16.mxu0 0
    %1200 = vmatpush1.bf16.msra.mxu0 0
    %1201 = vmatprep.subr.bf16.mxu0 0
    %1202 = vmatpush1.bf16.msra.mxu0 0
    %1203 = vmatprep.subr.bf16.mxu0 0
    %1204 = vmatpush1.bf16.msra.mxu0 0
    %1205 = vmatprep.subr.bf16.mxu0 0
    %1206 = vmatpush1.bf16.msra.mxu0 0
    %1207 = vmatprep.subr.bf16.mxu0 0
    %1208 = vmatpush1.bf16.msra.mxu0 0
    %1209 = vmatprep.subr.bf16.mxu0 0
    %1210 = vmatpush1.bf16.msra.mxu0 0
    %1211 = vmatprep.subr.bf16.mxu0 0
    %1212 = vmatpush1.bf16.msra.mxu0 0
    %1213 = vmatprep.subr.bf16.mxu0 %v948
    %1214 = vmatpush1.bf16.msra.mxu0 %v945
    %1215 = vmatprep.subr.bf16.mxu0 0
    %1216 = vmatpush2.bf16.msra.mxu0 0
    %1217 = vmatprep.subr.bf16.mxu0 0
    %1218 = vmatpush2.bf16.msra.mxu0 0
    %1219 = vmatprep.subr.bf16.mxu0 0
    %1220 = vmatpush2.bf16.msra.mxu0 0
    %1221 = vmatprep.subr.bf16.mxu0 0
    %1222 = vmatpush2.bf16.msra.mxu0 0
    %1223 = vmatprep.subr.bf16.mxu0 0
    %1224 = vmatpush2.bf16.msra.mxu0 0
    %1225 = vmatprep.subr.bf16.mxu0 0
    %1226 = vmatpush2.bf16.msra.mxu0 0
    %1227 = vmatprep.subr.bf16.mxu0 0
    %1228 = vmatpush2.bf16.msra.mxu0 0
    %1229 = vmatprep.subr.bf16.mxu0 0
    %1230 = vmatpush2.bf16.msra.mxu0 0
    %1231 = vmatprep.mubr.bf16.mxu0 0
    %1232 = vmatmul.mubr.bf16.gmra.mxu0 %v904
    %v1233 = vpop.f32.mrf.mxu0
    %v1234 = vadd.f32 %v900, %v1233
    %v1235 = vpop.f32.mrf.mxu0
    %v1236 = vadd.f32 %v900, %v1235
    %v1237 = vpop.f32.mrf.mxu0
    %v1238 = vpop.f32.mrf.mxu0
    %1239 = vdwg.mxu0
    %1240 = vmatprep.subr.bf16.mxu0 0
    %1241 = vmatpush1.bf16.msra.mxu0 0
    %1242 = vmatprep.subr.bf16.mxu0 0
    %1243 = vmatpush1.bf16.msra.mxu0 0
    %1244 = vmatprep.subr.bf16.mxu0 0
    %1245 = vmatpush1.bf16.msra.mxu0 0
    %1246 = vmatprep.subr.bf16.mxu0 0
    %1247 = vmatpush1.bf16.msra.mxu0 0
    %1248 = vmatprep.subr.bf16.mxu0 0
    %1249 = vmatpush1.bf16.msra.mxu0 0
    %1250 = vmatprep.subr.bf16.mxu0 0
    %1251 = vmatpush1.bf16.msra.mxu0 0
    %1252 = vmatprep.subr.bf16.mxu0 0
    %1253 = vmatpush1.bf16.msra.mxu0 0
    %1254 = vmatprep.subr.bf16.mxu0 0
    %1255 = vmatpush1.bf16.msra.mxu0 %v951
    %1256 = vmatprep.subr.bf16.mxu0 0
    %1257 = vmatpush2.bf16.msra.mxu0 0
    %1258 = vmatprep.subr.bf16.mxu0 0
    %1259 = vmatpush2.bf16.msra.mxu0 0
    %1260 = vmatprep.subr.bf16.mxu0 0
    %1261 = vmatpush2.bf16.msra.mxu0 0
    %1262 = vmatprep.subr.bf16.mxu0 0
    %1263 = vmatpush2.bf16.msra.mxu0 0
    %1264 = vmatprep.subr.bf16.mxu0 0
    %1265 = vmatpush2.bf16.msra.mxu0 0
    %1266 = vmatprep.subr.bf16.mxu0 0
    %1267 = vmatpush2.bf16.msra.mxu0 0
    %1268 = vmatprep.subr.bf16.mxu0 0
    %1269 = vmatpush2.bf16.msra.mxu0 0
    %1270 = vmatprep.subr.bf16.mxu0 0
    %1271 = vmatpush2.bf16.msra.mxu0 0
    %1272 = vmatprep.mubr.bf16.mxu0 0
    %1273 = vmatmul.mubr.bf16.gmra.mxu0 %v904
    %v1274 = vpop.f32.mrf.mxu0
    %v1275 = vadd.f32 %v900, %v1274
    %v1276 = vpop.f32.mrf.mxu0
    %v1277 = vpop.f32.mrf.mxu0
    %v1278 = vpop.f32.mrf.mxu0
    %1279 = vdwg.mxu0
    %v1280 = vmax.f32 %v988, 0.0
    %v1281 = vmax.f32 %v990, 0.0
    %v1282 = vmax.f32 %v1029, 0.0
    %v1283 = vmax.f32 %v1031, 0.0
    %v1284 = vmax.f32 %v1070, 0.0
    %v1285 = vmax.f32 %v1072, 0.0
    %v1286 = vmax.f32 %v1111, 0.0
    %v1287 = vmax.f32 %v1113, 0.0
    %v1288 = vmax.f32 %v1152, 0.0
    %v1289 = vmax.f32 %v1154, 0.0
    %v1290 = vmax.f32 %v1193, 0.0
    %v1291 = vmax.f32 %v1195, 0.0
    %v1292 = vmax.f32 %v1234, 0.0
    %v1293 = vmax.f32 %v1236, 0.0
    %v1294 = vmax.f32 %v1275, 0.0
    %v1297 = vlaneseq
    %v1298 = vshrl.u32 %v1297, 7
    %v1299 = vsub.s32 0, %v1298
    %v1300 = vrot.slane %v54, %v1299
    %v1301 = vlaneseq
    %v1302 = vshrl.u32 %v1301, 7
    %v1303 = vsub.s32 1, %v1302
    %v1304 = vrot.slane %v54, %v1303
    %v1305 = vlaneseq
    %v1306 = vshrl.u32 %v1305, 7
    %v1307 = vsub.s32 2, %v1306
    %v1308 = vrot.slane %v54, %v1307
    %v1309 = vlaneseq
    %v1310 = vshrl.u32 %v1309, 7
    %v1311 = vsub.s32 3, %v1310
    %v1312 = vrot.slane %v54, %v1311
    %v1313 = vlaneseq
    %v1314 = vshrl.u32 %v1313, 7
    %v1315 = vsub.s32 4, %v1314
    %v1316 = vrot.slane %v54, %v1315
    %v1317 = vlaneseq
    %v1318 = vshrl.u32 %v1317, 7
    %v1319 = vsub.s32 5, %v1318
    %v1320 = vrot.slane %v54, %v1319
    %v1321 = vlaneseq
    %v1322 = vshrl.u32 %v1321, 7
    %v1323 = vsub.s32 6, %v1322
    %v1324 = vrot.slane %v54, %v1323
    %v1325 = vlaneseq
    %v1326 = vshrl.u32 %v1325, 7
    %v1327 = vsub.s32 7, %v1326
    %v1328 = vrot.slane %v54, %v1327
    %v1329 = vlaneseq
    %v1330 = vshrl.u32 %v1329, 7
    %v1331 = vsub.s32 0, %v1330
    %v1332 = vrot.slane %v55, %v1331
    %v1333 = vlaneseq
    %v1334 = vshrl.u32 %v1333, 7
    %v1335 = vsub.s32 1, %v1334
    %v1336 = vrot.slane %v55, %v1335
    %v1337 = vlaneseq
    %v1338 = vshrl.u32 %v1337, 7
    %v1339 = vsub.s32 2, %v1338
    %v1340 = vrot.slane %v55, %v1339
    %v1341 = vlaneseq
    %v1342 = vshrl.u32 %v1341, 7
    %v1343 = vsub.s32 3, %v1342
    %v1344 = vrot.slane %v55, %v1343
    %v1345 = vlaneseq
    %v1346 = vshrl.u32 %v1345, 7
    %v1347 = vsub.s32 4, %v1346
    %v1348 = vrot.slane %v55, %v1347
    %v1349 = vlaneseq
    %v1350 = vshrl.u32 %v1349, 7
    %v1351 = vsub.s32 5, %v1350
    %v1352 = vrot.slane %v55, %v1351
    %v1353 = vlaneseq
    %v1354 = vshrl.u32 %v1353, 7
    %v1355 = vsub.s32 6, %v1354
    %v1356 = vrot.slane %v55, %v1355
    %v1372 = vmul.f32 %v1280, %v1300
    %v1373 = vmul.f32 %v1281, %v1304
    %v1374 = vmul.f32 %v1282, %v1308
    %v1375 = vmul.f32 %v1283, %v1312
    %v1376 = vmul.f32 %v1284, %v1316
    %v1377 = vmul.f32 %v1285, %v1320
    %v1378 = vmul.f32 %v1286, %v1324
    %v1379 = vmul.f32 %v1287, %v1328
    %v1380 = vmul.f32 %v1288, %v1332
    %v1381 = vmul.f32 %v1289, %v1336
    %v1382 = vmul.f32 %v1290, %v1340
    %v1383 = vmul.f32 %v1291, %v1344
    %v1384 = vmul.f32 %v1292, %v1348
    %v1385 = vmul.f32 %v1293, %v1352
    %v1386 = vmul.f32 %v1294, %v1356
    %1402 = vrot.lane.b32.xlu0 %v1372, 31
    %v1403 = vpop.permute.xlu0 %1402
    %1404 = vrot.lane.b32.xlu0 %v1373, 31
    %v1405 = vpop.permute.xlu0 %1404
    %1406 = vrot.lane.b32.xlu0 %v1374, 31
    %v1407 = vpop.permute.xlu0 %1406
    %1408 = vrot.lane.b32.xlu0 %v1375, 31
    %v1409 = vpop.permute.xlu0 %1408
    %1410 = vrot.lane.b32.xlu0 %v1376, 31
    %v1411 = vpop.permute.xlu0 %1410
    %1412 = vrot.lane.b32.xlu0 %v1377, 31
    %v1413 = vpop.permute.xlu0 %1412
    %1414 = vrot.lane.b32.xlu0 %v1378, 31
    %v1415 = vpop.permute.xlu0 %1414
    %1416 = vrot.lane.b32.xlu0 %v1379, 31
    %v1417 = vpop.permute.xlu0 %1416
    %1418 = vrot.lane.b32.xlu0 %v1380, 31
    %v1419 = vpop.permute.xlu0 %1418
    %1420 = vrot.lane.b32.xlu0 %v1381, 31
    %v1421 = vpop.permute.xlu0 %1420
    %1422 = vrot.lane.b32.xlu0 %v1382, 31
    %v1423 = vpop.permute.xlu0 %1422
    %1424 = vrot.lane.b32.xlu0 %v1383, 31
    %v1425 = vpop.permute.xlu0 %1424
    %1426 = vrot.lane.b32.xlu0 %v1384, 31
    %v1427 = vpop.permute.xlu0 %1426
    %1428 = vrot.lane.b32.xlu0 %v1385, 31
    %v1429 = vpop.permute.xlu0 %1428
    %1430 = vrot.lane.b32.xlu0 %v1386, 31
    %v1431 = vpop.permute.xlu0 %1430
    %v1432 = vsel %vm148, %v1403, %v1405
    %v1433 = vsel %vm148, %v1405, %v1407
    %v1434 = vsel %vm148, %v1407, %v1409
    %v1435 = vsel %vm148, %v1409, %v1411
    %v1436 = vsel %vm148, %v1411, %v1413
    %v1437 = vsel %vm148, %v1413, %v1415
    %v1438 = vsel %vm148, %v1415, %v1417
    %v1439 = vsel %vm148, %v1417, %v1419
    %v1440 = vsel %vm148, %v1419, %v1421
    %v1441 = vsel %vm148, %v1421, %v1423
    %v1442 = vsel %vm148, %v1423, %v1425
    %v1443 = vsel %vm148, %v1425, %v1427
    %v1444 = vsel %vm148, %v1427, %v1429
    %v1445 = vsel %vm148, %v1429, %v1431
    %v1461 = vsel %vm148, 0.0, %v1403
    %v1462 = vsel %vm179, %v1445, 0.0
    %1465 = vrot.lane.b32.xlu0 %v1461, 127
    %v1466 = vpop.permute.xlu0 %1465
    %1467 = vrot.lane.b32.xlu0 %v1432, 127
    %v1468 = vpop.permute.xlu0 %1467
    %1469 = vrot.lane.b32.xlu0 %v1433, 127
    %v1470 = vpop.permute.xlu0 %1469
    %1471 = vrot.lane.b32.xlu0 %v1434, 127
    %v1472 = vpop.permute.xlu0 %1471
    %1473 = vrot.lane.b32.xlu0 %v1435, 127
    %v1474 = vpop.permute.xlu0 %1473
    %1475 = vrot.lane.b32.xlu0 %v1436, 127
    %v1476 = vpop.permute.xlu0 %1475
    %1477 = vrot.lane.b32.xlu0 %v1437, 127
    %v1478 = vpop.permute.xlu0 %1477
    %1479 = vrot.lane.b32.xlu0 %v1438, 127
    %v1480 = vpop.permute.xlu0 %1479
    %1481 = vrot.lane.b32.xlu0 %v1439, 127
    %v1482 = vpop.permute.xlu0 %1481
    %1483 = vrot.lane.b32.xlu0 %v1440, 127
    %v1484 = vpop.permute.xlu0 %1483
    %1485 = vrot.lane.b32.xlu0 %v1441, 127
    %v1486 = vpop.permute.xlu0 %1485
    %1487 = vrot.lane.b32.xlu0 %v1442, 127
    %v1488 = vpop.permute.xlu0 %1487
    %1489 = vrot.lane.b32.xlu0 %v1443, 127
    %v1490 = vpop.permute.xlu0 %1489
    %1491 = vrot.lane.b32.xlu0 %v1444, 127
    %v1492 = vpop.permute.xlu0 %1491
    %1493 = vrot.lane.b32.xlu0 %v1462, 127
    %v1494 = vpop.permute.xlu0 %1493
    %v1495 = vsel %vm228, %v1466, %v1468
    %v1496 = vsel %vm228, %v1468, %v1470
    %v1497 = vsel %vm228, %v1470, %v1472
    %v1498 = vsel %vm228, %v1472, %v1474
    %v1499 = vsel %vm228, %v1474, %v1476
    %v1500 = vsel %vm228, %v1476, %v1478
    %v1501 = vsel %vm228, %v1478, %v1480
    %v1502 = vsel %vm228, %v1480, %v1482
    %v1503 = vsel %vm228, %v1482, %v1484
    %v1504 = vsel %vm228, %v1484, %v1486
    %v1505 = vsel %vm228, %v1486, %v1488
    %v1506 = vsel %vm228, %v1488, %v1490
    %v1507 = vsel %vm228, %v1490, %v1492
    %v1508 = vsel %vm228, %v1492, %v1494
    %1524 = vrot.lane.b32.xlu0 %v1461, 126
    %v1525 = vpop.permute.xlu0 %1524
    %1526 = vrot.lane.b32.xlu0 %v1432, 126
    %v1527 = vpop.permute.xlu0 %1526
    %1528 = vrot.lane.b32.xlu0 %v1433, 126
    %v1529 = vpop.permute.xlu0 %1528
    %1530 = vrot.lane.b32.xlu0 %v1434, 126
    %v1531 = vpop.permute.xlu0 %1530
    %1532 = vrot.lane.b32.xlu0 %v1435, 126
    %v1533 = vpop.permute.xlu0 %1532
    %1534 = vrot.lane.b32.xlu0 %v1436, 126
    %v1535 = vpop.permute.xlu0 %1534
    %1536 = vrot.lane.b32.xlu0 %v1437, 126
    %v1537 = vpop.permute.xlu0 %1536
    %1538 = vrot.lane.b32.xlu0 %v1438, 126
    %v1539 = vpop.permute.xlu0 %1538
    %1540 = vrot.lane.b32.xlu0 %v1439, 126
    %v1541 = vpop.permute.xlu0 %1540
    %1542 = vrot.lane.b32.xlu0 %v1440, 126
    %v1543 = vpop.permute.xlu0 %1542
    %1544 = vrot.lane.b32.xlu0 %v1441, 126
    %v1545 = vpop.permute.xlu0 %1544
    %1546 = vrot.lane.b32.xlu0 %v1442, 126
    %v1547 = vpop.permute.xlu0 %1546
    %1548 = vrot.lane.b32.xlu0 %v1443, 126
    %v1549 = vpop.permute.xlu0 %1548
    %1550 = vrot.lane.b32.xlu0 %v1444, 126
    %v1551 = vpop.permute.xlu0 %1550
    %1552 = vrot.lane.b32.xlu0 %v1462, 126
    %v1553 = vpop.permute.xlu0 %1552
    %v1554 = vsel %vm303, %v1525, %v1527
    %v1555 = vsel %vm303, %v1527, %v1529
    %v1556 = vsel %vm303, %v1529, %v1531
    %v1557 = vsel %vm303, %v1531, %v1533
    %v1558 = vsel %vm303, %v1533, %v1535
    %v1559 = vsel %vm303, %v1535, %v1537
    %v1560 = vsel %vm303, %v1537, %v1539
    %v1561 = vsel %vm303, %v1539, %v1541
    %v1562 = vsel %vm303, %v1541, %v1543
    %v1563 = vsel %vm303, %v1543, %v1545
    %v1564 = vsel %vm303, %v1545, %v1547
    %v1565 = vsel %vm303, %v1547, %v1549
    %v1566 = vsel %vm303, %v1549, %v1551
    %v1567 = vsel %vm303, %v1551, %v1553
    %1583 = vrot.lane.b32.xlu0 %v1461, 98
    %v1584 = vpop.permute.xlu0 %1583
    %1585 = vrot.lane.b32.xlu0 %v1432, 98
    %v1586 = vpop.permute.xlu0 %1585
    %1587 = vrot.lane.b32.xlu0 %v1433, 98
    %v1588 = vpop.permute.xlu0 %1587
    %1589 = vrot.lane.b32.xlu0 %v1434, 98
    %v1590 = vpop.permute.xlu0 %1589
    %1591 = vrot.lane.b32.xlu0 %v1435, 98
    %v1592 = vpop.permute.xlu0 %1591
    %1593 = vrot.lane.b32.xlu0 %v1436, 98
    %v1594 = vpop.permute.xlu0 %1593
    %1595 = vrot.lane.b32.xlu0 %v1437, 98
    %v1596 = vpop.permute.xlu0 %1595
    %1597 = vrot.lane.b32.xlu0 %v1438, 98
    %v1598 = vpop.permute.xlu0 %1597
    %1599 = vrot.lane.b32.xlu0 %v1439, 98
    %v1600 = vpop.permute.xlu0 %1599
    %1601 = vrot.lane.b32.xlu0 %v1440, 98
    %v1602 = vpop.permute.xlu0 %1601
    %1603 = vrot.lane.b32.xlu0 %v1441, 98
    %v1604 = vpop.permute.xlu0 %1603
    %1605 = vrot.lane.b32.xlu0 %v1442, 98
    %v1606 = vpop.permute.xlu0 %1605
    %1607 = vrot.lane.b32.xlu0 %v1443, 98
    %v1608 = vpop.permute.xlu0 %1607
    %1609 = vrot.lane.b32.xlu0 %v1444, 98
    %v1610 = vpop.permute.xlu0 %1609
    %1611 = vrot.lane.b32.xlu0 %v1462, 98
    %v1612 = vpop.permute.xlu0 %1611
    %v1613 = vsel %vm378, %v1584, %v1586
    %v1614 = vsel %vm378, %v1586, %v1588
    %v1615 = vsel %vm378, %v1588, %v1590
    %v1616 = vsel %vm378, %v1590, %v1592
    %v1617 = vsel %vm378, %v1592, %v1594
    %v1618 = vsel %vm378, %v1594, %v1596
    %v1619 = vsel %vm378, %v1596, %v1598
    %v1620 = vsel %vm378, %v1598, %v1600
    %v1621 = vsel %vm378, %v1600, %v1602
    %v1622 = vsel %vm378, %v1602, %v1604
    %v1623 = vsel %vm378, %v1604, %v1606
    %v1624 = vsel %vm378, %v1606, %v1608
    %v1625 = vsel %vm378, %v1608, %v1610
    %v1626 = vsel %vm378, %v1610, %v1612
    %1642 = vrot.lane.b32.xlu0 %v1461, 97
    %v1643 = vpop.permute.xlu0 %1642
    %1644 = vrot.lane.b32.xlu0 %v1432, 97
    %v1645 = vpop.permute.xlu0 %1644
    %1646 = vrot.lane.b32.xlu0 %v1433, 97
    %v1647 = vpop.permute.xlu0 %1646
    %1648 = vrot.lane.b32.xlu0 %v1434, 97
    %v1649 = vpop.permute.xlu0 %1648
    %1650 = vrot.lane.b32.xlu0 %v1435, 97
    %v1651 = vpop.permute.xlu0 %1650
    %1652 = vrot.lane.b32.xlu0 %v1436, 97
    %v1653 = vpop.permute.xlu0 %1652
    %1654 = vrot.lane.b32.xlu0 %v1437, 97
    %v1655 = vpop.permute.xlu0 %1654
    %1656 = vrot.lane.b32.xlu0 %v1438, 97
    %v1657 = vpop.permute.xlu0 %1656
    %1658 = vrot.lane.b32.xlu0 %v1439, 97
    %v1659 = vpop.permute.xlu0 %1658
    %1660 = vrot.lane.b32.xlu0 %v1440, 97
    %v1661 = vpop.permute.xlu0 %1660
    %1662 = vrot.lane.b32.xlu0 %v1441, 97
    %v1663 = vpop.permute.xlu0 %1662
    %1664 = vrot.lane.b32.xlu0 %v1442, 97
    %v1665 = vpop.permute.xlu0 %1664
    %1666 = vrot.lane.b32.xlu0 %v1443, 97
    %v1667 = vpop.permute.xlu0 %1666
    %1668 = vrot.lane.b32.xlu0 %v1444, 97
    %v1669 = vpop.permute.xlu0 %1668
    %1670 = vrot.lane.b32.xlu0 %v1462, 97
    %v1671 = vpop.permute.xlu0 %1670
    %v1672 = vsel %vm453, %v1643, %v1645
    %v1673 = vsel %vm453, %v1645, %v1647
    %v1674 = vsel %vm453, %v1647, %v1649
    %v1675 = vsel %vm453, %v1649, %v1651
    %v1676 = vsel %vm453, %v1651, %v1653
    %v1677 = vsel %vm453, %v1653, %v1655
    %v1678 = vsel %vm453, %v1655, %v1657
    %v1679 = vsel %vm453, %v1657, %v1659
    %v1680 = vsel %vm453, %v1659, %v1661
    %v1681 = vsel %vm453, %v1661, %v1663
    %v1682 = vsel %vm453, %v1663, %v1665
    %v1683 = vsel %vm453, %v1665, %v1667
    %v1684 = vsel %vm453, %v1667, %v1669
    %v1685 = vsel %vm453, %v1669, %v1671
    %1701 = vrot.lane.b32.xlu0 %v1461, 96
    %v1702 = vpop.permute.xlu0 %1701
    %1703 = vrot.lane.b32.xlu0 %v1432, 96
    %v1704 = vpop.permute.xlu0 %1703
    %1705 = vrot.lane.b32.xlu0 %v1433, 96
    %v1706 = vpop.permute.xlu0 %1705
    %1707 = vrot.lane.b32.xlu0 %v1434, 96
    %v1708 = vpop.permute.xlu0 %1707
    %1709 = vrot.lane.b32.xlu0 %v1435, 96
    %v1710 = vpop.permute.xlu0 %1709
    %1711 = vrot.lane.b32.xlu0 %v1436, 96
    %v1712 = vpop.permute.xlu0 %1711
    %1713 = vrot.lane.b32.xlu0 %v1437, 96
    %v1714 = vpop.permute.xlu0 %1713
    %1715 = vrot.lane.b32.xlu0 %v1438, 96
    %v1716 = vpop.permute.xlu0 %1715
    %1717 = vrot.lane.b32.xlu0 %v1439, 96
    %v1718 = vpop.permute.xlu0 %1717
    %1719 = vrot.lane.b32.xlu0 %v1440, 96
    %v1720 = vpop.permute.xlu0 %1719
    %1721 = vrot.lane.b32.xlu0 %v1441, 96
    %v1722 = vpop.permute.xlu0 %1721
    %1723 = vrot.lane.b32.xlu0 %v1442, 96
    %v1724 = vpop.permute.xlu0 %1723
    %1725 = vrot.lane.b32.xlu0 %v1443, 96
    %v1726 = vpop.permute.xlu0 %1725
    %1727 = vrot.lane.b32.xlu0 %v1444, 96
    %v1728 = vpop.permute.xlu0 %1727
    %1729 = vrot.lane.b32.xlu0 %v1462, 96
    %v1730 = vpop.permute.xlu0 %1729
    %v1731 = vsel %vm528, %v1702, %v1704
    %v1732 = vsel %vm528, %v1704, %v1706
    %v1733 = vsel %vm528, %v1706, %v1708
    %v1734 = vsel %vm528, %v1708, %v1710
    %v1735 = vsel %vm528, %v1710, %v1712
    %v1736 = vsel %vm528, %v1712, %v1714
    %v1737 = vsel %vm528, %v1714, %v1716
    %v1738 = vsel %vm528, %v1716, %v1718
    %v1739 = vsel %vm528, %v1718, %v1720
    %v1740 = vsel %vm528, %v1720, %v1722
    %v1741 = vsel %vm528, %v1722, %v1724
    %v1742 = vsel %vm528, %v1724, %v1726
    %v1743 = vsel %vm528, %v1726, %v1728
    %v1744 = vsel %vm528, %v1728, %v1730
    %1760 = vrot.lane.b32.xlu0 %v1461, 68
    %v1761 = vpop.permute.xlu0 %1760
    %1762 = vrot.lane.b32.xlu0 %v1432, 68
    %v1763 = vpop.permute.xlu0 %1762
    %1764 = vrot.lane.b32.xlu0 %v1433, 68
    %v1765 = vpop.permute.xlu0 %1764
    %1766 = vrot.lane.b32.xlu0 %v1434, 68
    %v1767 = vpop.permute.xlu0 %1766
    %1768 = vrot.lane.b32.xlu0 %v1435, 68
    %v1769 = vpop.permute.xlu0 %1768
    %1770 = vrot.lane.b32.xlu0 %v1436, 68
    %v1771 = vpop.permute.xlu0 %1770
    %1772 = vrot.lane.b32.xlu0 %v1437, 68
    %v1773 = vpop.permute.xlu0 %1772
    %1774 = vrot.lane.b32.xlu0 %v1438, 68
    %v1775 = vpop.permute.xlu0 %1774
    %1776 = vrot.lane.b32.xlu0 %v1439, 68
    %v1777 = vpop.permute.xlu0 %1776
    %1778 = vrot.lane.b32.xlu0 %v1440, 68
    %v1779 = vpop.permute.xlu0 %1778
    %1780 = vrot.lane.b32.xlu0 %v1441, 68
    %v1781 = vpop.permute.xlu0 %1780
    %1782 = vrot.lane.b32.xlu0 %v1442, 68
    %v1783 = vpop.permute.xlu0 %1782
    %1784 = vrot.lane.b32.xlu0 %v1443, 68
    %v1785 = vpop.permute.xlu0 %1784
    %1786 = vrot.lane.b32.xlu0 %v1444, 68
    %v1787 = vpop.permute.xlu0 %1786
    %1788 = vrot.lane.b32.xlu0 %v1462, 68
    %v1789 = vpop.permute.xlu0 %1788
    %v1790 = vsel %vm603, %v1761, %v1763
    %v1791 = vsel %vm603, %v1763, %v1765
    %v1792 = vsel %vm603, %v1765, %v1767
    %v1793 = vsel %vm603, %v1767, %v1769
    %v1794 = vsel %vm603, %v1769, %v1771
    %v1795 = vsel %vm603, %v1771, %v1773
    %v1796 = vsel %vm603, %v1773, %v1775
    %v1797 = vsel %vm603, %v1775, %v1777
    %v1798 = vsel %vm603, %v1777, %v1779
    %v1799 = vsel %vm603, %v1779, %v1781
    %v1800 = vsel %vm603, %v1781, %v1783
    %v1801 = vsel %vm603, %v1783, %v1785
    %v1802 = vsel %vm603, %v1785, %v1787
    %v1803 = vsel %vm603, %v1787, %v1789
    %1819 = vrot.lane.b32.xlu0 %v1461, 67
    %v1820 = vpop.permute.xlu0 %1819
    %1821 = vrot.lane.b32.xlu0 %v1432, 67
    %v1822 = vpop.permute.xlu0 %1821
    %1823 = vrot.lane.b32.xlu0 %v1433, 67
    %v1824 = vpop.permute.xlu0 %1823
    %1825 = vrot.lane.b32.xlu0 %v1434, 67
    %v1826 = vpop.permute.xlu0 %1825
    %1827 = vrot.lane.b32.xlu0 %v1435, 67
    %v1828 = vpop.permute.xlu0 %1827
    %1829 = vrot.lane.b32.xlu0 %v1436, 67
    %v1830 = vpop.permute.xlu0 %1829
    %1831 = vrot.lane.b32.xlu0 %v1437, 67
    %v1832 = vpop.permute.xlu0 %1831
    %1833 = vrot.lane.b32.xlu0 %v1438, 67
    %v1834 = vpop.permute.xlu0 %1833
    %1835 = vrot.lane.b32.xlu0 %v1439, 67
    %v1836 = vpop.permute.xlu0 %1835
    %1837 = vrot.lane.b32.xlu0 %v1440, 67
    %v1838 = vpop.permute.xlu0 %1837
    %1839 = vrot.lane.b32.xlu0 %v1441, 67
    %v1840 = vpop.permute.xlu0 %1839
    %1841 = vrot.lane.b32.xlu0 %v1442, 67
    %v1842 = vpop.permute.xlu0 %1841
    %1843 = vrot.lane.b32.xlu0 %v1443, 67
    %v1844 = vpop.permute.xlu0 %1843
    %1845 = vrot.lane.b32.xlu0 %v1444, 67
    %v1846 = vpop.permute.xlu0 %1845
    %1847 = vrot.lane.b32.xlu0 %v1462, 67
    %v1848 = vpop.permute.xlu0 %1847
    %v1849 = vsel %vm678, %v1820, %v1822
    %v1850 = vsel %vm678, %v1822, %v1824
    %v1851 = vsel %vm678, %v1824, %v1826
    %v1852 = vsel %vm678, %v1826, %v1828
    %v1853 = vsel %vm678, %v1828, %v1830
    %v1854 = vsel %vm678, %v1830, %v1832
    %v1855 = vsel %vm678, %v1832, %v1834
    %v1856 = vsel %vm678, %v1834, %v1836
    %v1857 = vsel %vm678, %v1836, %v1838
    %v1858 = vsel %vm678, %v1838, %v1840
    %v1859 = vsel %vm678, %v1840, %v1842
    %v1860 = vsel %vm678, %v1842, %v1844
    %v1861 = vsel %vm678, %v1844, %v1846
    %v1862 = vsel %vm678, %v1846, %v1848
    %1878 = vrot.lane.b32.xlu0 %v1461, 66
    %v1879 = vpop.permute.xlu0 %1878
    %1880 = vrot.lane.b32.xlu0 %v1432, 66
    %v1881 = vpop.permute.xlu0 %1880
    %1882 = vrot.lane.b32.xlu0 %v1433, 66
    %v1883 = vpop.permute.xlu0 %1882
    %1884 = vrot.lane.b32.xlu0 %v1434, 66
    %v1885 = vpop.permute.xlu0 %1884
    %1886 = vrot.lane.b32.xlu0 %v1435, 66
    %v1887 = vpop.permute.xlu0 %1886
    %1888 = vrot.lane.b32.xlu0 %v1436, 66
    %v1889 = vpop.permute.xlu0 %1888
    %1890 = vrot.lane.b32.xlu0 %v1437, 66
    %v1891 = vpop.permute.xlu0 %1890
    %1892 = vrot.lane.b32.xlu0 %v1438, 66
    %v1893 = vpop.permute.xlu0 %1892
    %1894 = vrot.lane.b32.xlu0 %v1439, 66
    %v1895 = vpop.permute.xlu0 %1894
    %1896 = vrot.lane.b32.xlu0 %v1440, 66
    %v1897 = vpop.permute.xlu0 %1896
    %1898 = vrot.lane.b32.xlu0 %v1441, 66
    %v1899 = vpop.permute.xlu0 %1898
    %1900 = vrot.lane.b32.xlu0 %v1442, 66
    %v1901 = vpop.permute.xlu0 %1900
    %1902 = vrot.lane.b32.xlu0 %v1443, 66
    %v1903 = vpop.permute.xlu0 %1902
    %1904 = vrot.lane.b32.xlu0 %v1444, 66
    %v1905 = vpop.permute.xlu0 %1904
    %1906 = vrot.lane.b32.xlu0 %v1462, 66
    %v1907 = vpop.permute.xlu0 %1906
    %v1908 = vsel %vm738, %v1879, %v1881
    %v1909 = vsel %vm738, %v1881, %v1883
    %v1910 = vsel %vm738, %v1883, %v1885
    %v1911 = vsel %vm738, %v1885, %v1887
    %v1912 = vsel %vm738, %v1887, %v1889
    %v1913 = vsel %vm738, %v1889, %v1891
    %v1914 = vsel %vm738, %v1891, %v1893
    %v1915 = vsel %vm738, %v1893, %v1895
    %v1916 = vsel %vm738, %v1895, %v1897
    %v1917 = vsel %vm738, %v1897, %v1899
    %v1918 = vsel %vm738, %v1899, %v1901
    %v1919 = vsel %vm738, %v1901, %v1903
    %v1920 = vsel %vm738, %v1903, %v1905
    %v1921 = vsel %vm738, %v1905, %v1907
    %v1937 = vpack.c.bf16 %v1495, %v1461
    %v1938 = vpack.c.bf16 %v1496, %v1432
    %v1939 = vpack.c.bf16 %v1497, %v1433
    %v1940 = vpack.c.bf16 %v1498, %v1434
    %v1941 = vpack.c.bf16 %v1499, %v1435
    %v1942 = vpack.c.bf16 %v1500, %v1436
    %v1943 = vpack.c.bf16 %v1501, %v1437
    %v1944 = vpack.c.bf16 %v1502, %v1438
    %v1945 = vpack.c.bf16 %v1503, %v1439
    %v1946 = vpack.c.bf16 %v1504, %v1440
    %v1947 = vpack.c.bf16 %v1505, %v1441
    %v1948 = vpack.c.bf16 %v1506, %v1442
    %v1949 = vpack.c.bf16 %v1507, %v1443
    %v1950 = vpack.c.bf16 %v1508, %v1444
    %v1951 = vpack.c.bf16 %v1494, %v1462
    %v1952 = vpack.c.bf16 %v1613, %v1554
    %v1953 = vpack.c.bf16 %v1614, %v1555
    %v1954 = vpack.c.bf16 %v1615, %v1556
    %v1955 = vpack.c.bf16 %v1616, %v1557
    %v1956 = vpack.c.bf16 %v1617, %v1558
    %v1957 = vpack.c.bf16 %v1618, %v1559
    %v1958 = vpack.c.bf16 %v1619, %v1560
    %v1959 = vpack.c.bf16 %v1620, %v1561
    %v1960 = vpack.c.bf16 %v1621, %v1562
    %v1961 = vpack.c.bf16 %v1622, %v1563
    %v1962 = vpack.c.bf16 %v1623, %v1564
    %v1963 = vpack.c.bf16 %v1624, %v1565
    %v1964 = vpack.c.bf16 %v1625, %v1566
    %v1965 = vpack.c.bf16 %v1626, %v1567
    %v1966 = vpack.c.bf16 %v1612, %v1553
    %v1967 = vpack.c.bf16 %v1731, %v1672
    %v1968 = vpack.c.bf16 %v1732, %v1673
    %v1969 = vpack.c.bf16 %v1733, %v1674
    %v1970 = vpack.c.bf16 %v1734, %v1675
    %v1971 = vpack.c.bf16 %v1735, %v1676
    %v1972 = vpack.c.bf16 %v1736, %v1677
    %v1973 = vpack.c.bf16 %v1737, %v1678
    %v1974 = vpack.c.bf16 %v1738, %v1679
    %v1975 = vpack.c.bf16 %v1739, %v1680
    %v1976 = vpack.c.bf16 %v1740, %v1681
    %v1977 = vpack.c.bf16 %v1741, %v1682
    %v1978 = vpack.c.bf16 %v1742, %v1683
    %v1979 = vpack.c.bf16 %v1743, %v1684
    %v1980 = vpack.c.bf16 %v1744, %v1685
    %v1981 = vpack.c.bf16 %v1730, %v1671
    %v1982 = vpack.c.bf16 %v1849, %v1790
    %v1983 = vpack.c.bf16 %v1850, %v1791
    %v1984 = vpack.c.bf16 %v1851, %v1792
    %v1985 = vpack.c.bf16 %v1852, %v1793
    %v1986 = vpack.c.bf16 %v1853, %v1794
    %v1987 = vpack.c.bf16 %v1854, %v1795
    %v1988 = vpack.c.bf16 %v1855, %v1796
    %v1989 = vpack.c.bf16 %v1856, %v1797
    %v1990 = vpack.c.bf16 %v1857, %v1798
    %v1991 = vpack.c.bf16 %v1858, %v1799
    %v1992 = vpack.c.bf16 %v1859, %v1800
    %v1993 = vpack.c.bf16 %v1860, %v1801
    %v1994 = vpack.c.bf16 %v1861, %v1802
    %v1995 = vpack.c.bf16 %v1862, %v1803
    %v1996 = vpack.c.bf16 %v1848, %v1789
    %v1997 = vpack.c.bf16 %v1908, %v1908
    %v1998 = vpack.c.bf16 %v1909, %v1909
    %v1999 = vpack.c.bf16 %v1910, %v1910
    %v2000 = vpack.c.bf16 %v1911, %v1911
    %v2001 = vpack.c.bf16 %v1912, %v1912
    %v2002 = vpack.c.bf16 %v1913, %v1913
    %v2003 = vpack.c.bf16 %v1914, %v1914
    %v2004 = vpack.c.bf16 %v1915, %v1915
    %v2005 = vpack.c.bf16 %v1916, %v1916
    %v2006 = vpack.c.bf16 %v1917, %v1917
    %v2007 = vpack.c.bf16 %v1918, %v1918
    %v2008 = vpack.c.bf16 %v1919, %v1919
    %v2009 = vpack.c.bf16 %v1920, %v1920
    %v2010 = vpack.c.bf16 %v1921, %v1921
    %v2011 = vpack.c.bf16 %v1907, %v1907
    %v2012 = vld [vmem:[%s3] sm:$0xf]
    %v2013 = vld [vmem:[%s4] sm:$0xff]
    %2015 = vset.pattern.permute.xlu0 0
    %2016 = vperm.xlu0 %2015, %v2013
    %v2017 = vpop.permute.xlu0 %2016
    %vm2019 = vcmask 588800
    %v2021 = vsel %vm2019, %v2012, 0
    %v2024 = vsel %vm816, %v1997, 0
    %v2027 = vsel %vm816, %v1998, 0
    %v2030 = vsel %vm816, %v1999, 0
    %v2033 = vsel %vm816, %v2000, 0
    %v2036 = vsel %vm816, %v2001, 0
    %v2039 = vsel %vm816, %v2002, 0
    %v2042 = vsel %vm816, %v2003, 0
    %v2045 = vsel %vm816, %v2004, 0
    %v2048 = vsel %vm816, %v2005, 0
    %v2051 = vsel %vm816, %v2006, 0
    %v2054 = vsel %vm816, %v2007, 0
    %v2057 = vsel %vm816, %v2008, 0
    %v2060 = vsel %vm816, %v2009, 0
    %v2063 = vsel %vm816, %v2010, 0
    %v2066 = vsel %vm816, %v2011, 0
    %2068 = vmatprep.subr.bf16.mxu0 0
    %2069 = vmatpush1.bf16.msra.mxu0 0
    %2070 = vmatprep.subr.bf16.mxu0 0
    %2071 = vmatpush1.bf16.msra.mxu0 0
    %2072 = vmatprep.subr.bf16.mxu0 0
    %2073 = vmatpush1.bf16.msra.mxu0 0
    %2074 = vmatprep.subr.bf16.mxu0 %v2027
    %2075 = vmatpush1.bf16.msra.mxu0 %v2024
    %2076 = vmatprep.subr.bf16.mxu0 %v1983
    %2077 = vmatpush1.bf16.msra.mxu0 %v1982
    %2078 = vmatprep.subr.bf16.mxu0 %v1968
    %2079 = vmatpush1.bf16.msra.mxu0 %v1967
    %2080 = vmatprep.subr.bf16.mxu0 %v1953
    %2081 = vmatpush1.bf16.msra.mxu0 %v1952
    %2082 = vmatprep.subr.bf16.mxu0 %v1938
    %2083 = vmatpush1.bf16.msra.mxu0 %v1937
    %2084 = vmatprep.subr.bf16.mxu0 0
    %2085 = vmatpush2.bf16.msra.mxu0 0
    %2086 = vmatprep.subr.bf16.mxu0 0
    %2087 = vmatpush2.bf16.msra.mxu0 0
    %2088 = vmatprep.subr.bf16.mxu0 0
    %2089 = vmatpush2.bf16.msra.mxu0 0
    %2090 = vmatprep.subr.bf16.mxu0 0
    %2091 = vmatpush2.bf16.msra.mxu0 0
    %2092 = vmatprep.subr.bf16.mxu0 0
    %2093 = vmatpush2.bf16.msra.mxu0 0
    %2094 = vmatprep.subr.bf16.mxu0 0
    %2095 = vmatpush2.bf16.msra.mxu0 0
    %2096 = vmatprep.subr.bf16.mxu0 0
    %2097 = vmatpush2.bf16.msra.mxu0 0
    %2098 = vmatprep.subr.bf16.mxu0 0
    %2099 = vmatpush2.bf16.msra.mxu0 0
    %2100 = vmatprep.mubr.bf16.mxu0 0
    %2101 = vmatmul.mubr.bf16.gmra.mxu0 %v2021
    %v2102 = vpop.f32.mrf.mxu0
    %v2103 = vadd.f32 %v2017, %v2102
    %v2104 = vpop.f32.mrf.mxu0
    %v2105 = vadd.f32 %v2017, %v2104
    %v2106 = vpop.f32.mrf.mxu0
    %v2107 = vpop.f32.mrf.mxu0
    %2108 = vdwg.mxu0
    %2109 = vmatprep.subr.bf16.mxu0 0
    %2110 = vmatpush1.bf16.msra.mxu0 0
    %2111 = vmatprep.subr.bf16.mxu0 0
    %2112 = vmatpush1.bf16.msra.mxu0 0
    %2113 = vmatprep.subr.bf16.mxu0 0
    %2114 = vmatpush1.bf16.msra.mxu0 0
    %2115 = vmatprep.subr.bf16.mxu0 %v2033
    %2116 = vmatpush1.bf16.msra.mxu0 %v2030
    %2117 = vmatprep.subr.bf16.mxu0 %v1985
    %2118 = vmatpush1.bf16.msra.mxu0 %v1984
    %2119 = vmatprep.subr.bf16.mxu0 %v1970
    %2120 = vmatpush1.bf16.msra.mxu0 %v1969
    %2121 = vmatprep.subr.bf16.mxu0 %v1955
    %2122 = vmatpush1.bf16.msra.mxu0 %v1954
    %2123 = vmatprep.subr.bf16.mxu0 %v1940
    %2124 = vmatpush1.bf16.msra.mxu0 %v1939
    %2125 = vmatprep.subr.bf16.mxu0 0
    %2126 = vmatpush2.bf16.msra.mxu0 0
    %2127 = vmatprep.subr.bf16.mxu0 0
    %2128 = vmatpush2.bf16.msra.mxu0 0
    %2129 = vmatprep.subr.bf16.mxu0 0
    %2130 = vmatpush2.bf16.msra.mxu0 0
    %2131 = vmatprep.subr.bf16.mxu0 0
    %2132 = vmatpush2.bf16.msra.mxu0 0
    %2133 = vmatprep.subr.bf16.mxu0 0
    %2134 = vmatpush2.bf16.msra.mxu0 0
    %2135 = vmatprep.subr.bf16.mxu0 0
    %2136 = vmatpush2.bf16.msra.mxu0 0
    %2137 = vmatprep.subr.bf16.mxu0 0
    %2138 = vmatpush2.bf16.msra.mxu0 0
    %2139 = vmatprep.subr.bf16.mxu0 0
    %2140 = vmatpush2.bf16.msra.mxu0 0
    %2141 = vmatprep.mubr.bf16.mxu0 0
    %2142 = vmatmul.mubr.bf16.gmra.mxu0 %v2021
    %v2143 = vpop.f32.mrf.mxu0
    %v2144 = vadd.f32 %v2017, %v2143
    %v2145 = vpop.f32.mrf.mxu0
    %v2146 = vadd.f32 %v2017, %v2145
    %v2147 = vpop.f32.mrf.mxu0
    %v2148 = vpop.f32.mrf.mxu0
    %2149 = vdwg.mxu0
    %2150 = vmatprep.subr.bf16.mxu0 0
    %2151 = vmatpush1.bf16.msra.mxu0 0
    %2152 = vmatprep.subr.bf16.mxu0 0
    %2153 = vmatpush1.bf16.msra.mxu0 0
    %2154 = vmatprep.subr.bf16.mxu0 0
    %2155 = vmatpush1.bf16.msra.mxu0 0
    %2156 = vmatprep.subr.bf16.mxu0 %v2039
    %2157 = vmatpush1.bf16.msra.mxu0 %v2036
    %2158 = vmatprep.subr.bf16.mxu0 %v1987
    %2159 = vmatpush1.bf16.msra.mxu0 %v1986
    %2160 = vmatprep.subr.bf16.mxu0 %v1972
    %2161 = vmatpush1.bf16.msra.mxu0 %v1971
    %2162 = vmatprep.subr.bf16.mxu0 %v1957
    %2163 = vmatpush1.bf16.msra.mxu0 %v1956
    %2164 = vmatprep.subr.bf16.mxu0 %v1942
    %2165 = vmatpush1.bf16.msra.mxu0 %v1941
    %2166 = vmatprep.subr.bf16.mxu0 0
    %2167 = vmatpush2.bf16.msra.mxu0 0
    %2168 = vmatprep.subr.bf16.mxu0 0
    %2169 = vmatpush2.bf16.msra.mxu0 0
    %2170 = vmatprep.subr.bf16.mxu0 0
    %2171 = vmatpush2.bf16.msra.mxu0 0
    %2172 = vmatprep.subr.bf16.mxu0 0
    %2173 = vmatpush2.bf16.msra.mxu0 0
    %2174 = vmatprep.subr.bf16.mxu0 0
    %2175 = vmatpush2.bf16.msra.mxu0 0
    %2176 = vmatprep.subr.bf16.mxu0 0
    %2177 = vmatpush2.bf16.msra.mxu0 0
    %2178 = vmatprep.subr.bf16.mxu0 0
    %2179 = vmatpush2.bf16.msra.mxu0 0
    %2180 = vmatprep.subr.bf16.mxu0 0
    %2181 = vmatpush2.bf16.msra.mxu0 0
    %2182 = vmatprep.mubr.bf16.mxu0 0
    %2183 = vmatmul.mubr.bf16.gmra.mxu0 %v2021
    %v2184 = vpop.f32.mrf.mxu0
    %v2185 = vadd.f32 %v2017, %v2184
    %v2186 = vpop.f32.mrf.mxu0
    %v2187 = vadd.f32 %v2017, %v2186
    %v2188 = vpop.f32.mrf.mxu0
    %v2189 = vpop.f32.mrf.mxu0
    %2190 = vdwg.mxu0
    %2191 = vmatprep.subr.bf16.mxu0 0
    %2192 = vmatpush1.bf16.msra.mxu0 0
    %2193 = vmatprep.subr.bf16.mxu0 0
    %2194 = vmatpush1.bf16.msra.mxu0 0
    %2195 = vmatprep.subr.bf16.mxu0 0
    %2196 = vmatpush1.bf16.msra.mxu0 0
    %2197 = vmatprep.subr.bf16.mxu0 %v2045
    %2198 = vmatpush1.bf16.msra.mxu0 %v2042
    %2199 = vmatprep.subr.bf16.mxu0 %v1989
    %2200 = vmatpush1.bf16.msra.mxu0 %v1988
    %2201 = vmatprep.subr.bf16.mxu0 %v1974
    %2202 = vmatpush1.bf16.msra.mxu0 %v1973
    %2203 = vmatprep.subr.bf16.mxu0 %v1959
    %2204 = vmatpush1.bf16.msra.mxu0 %v1958
    %2205 = vmatprep.subr.bf16.mxu0 %v1944
    %2206 = vmatpush1.bf16.msra.mxu0 %v1943
    %2207 = vmatprep.subr.bf16.mxu0 0
    %2208 = vmatpush2.bf16.msra.mxu0 0
    %2209 = vmatprep.subr.bf16.mxu0 0
    %2210 = vmatpush2.bf16.msra.mxu0 0
    %2211 = vmatprep.subr.bf16.mxu0 0
    %2212 = vmatpush2.bf16.msra.mxu0 0
    %2213 = vmatprep.subr.bf16.mxu0 0
    %2214 = vmatpush2.bf16.msra.mxu0 0
    %2215 = vmatprep.subr.bf16.mxu0 0
    %2216 = vmatpush2.bf16.msra.mxu0 0
    %2217 = vmatprep.subr.bf16.mxu0 0
    %2218 = vmatpush2.bf16.msra.mxu0 0
    %2219 = vmatprep.subr.bf16.mxu0 0
    %2220 = vmatpush2.bf16.msra.mxu0 0
    %2221 = vmatprep.subr.bf16.mxu0 0
    %2222 = vmatpush2.bf16.msra.mxu0 0
    %2223 = vmatprep.mubr.bf16.mxu0 0
    %2224 = vmatmul.mubr.bf16.gmra.mxu0 %v2021
    %v2225 = vpop.f32.mrf.mxu0
    %v2226 = vadd.f32 %v2017, %v2225
    %v2227 = vpop.f32.mrf.mxu0
    %v2228 = vadd.f32 %v2017, %v2227
    %v2229 = vpop.f32.mrf.mxu0
    %v2230 = vpop.f32.mrf.mxu0
    %2231 = vdwg.mxu0
    %2232 = vmatprep.subr.bf16.mxu0 0
    %2233 = vmatpush1.bf16.msra.mxu0 0
    %2234 = vmatprep.subr.bf16.mxu0 0
    %2235 = vmatpush1.bf16.msra.mxu0 0
    %2236 = vmatprep.subr.bf16.mxu0 0
    %2237 = vmatpush1.bf16.msra.mxu0 0
    %2238 = vmatprep.subr.bf16.mxu0 %v2051
    %2239 = vmatpush1.bf16.msra.mxu0 %v2048
    %2240 = vmatprep.subr.bf16.mxu0 %v1991
    %2241 = vmatpush1.bf16.msra.mxu0 %v1990
    %2242 = vmatprep.subr.bf16.mxu0 %v1976
    %2243 = vmatpush1.bf16.msra.mxu0 %v1975
    %2244 = vmatprep.subr.bf16.mxu0 %v1961
    %2245 = vmatpush1.bf16.msra.mxu0 %v1960
    %2246 = vmatprep.subr.bf16.mxu0 %v1946
    %2247 = vmatpush1.bf16.msra.mxu0 %v1945
    %2248 = vmatprep.subr.bf16.mxu0 0
    %2249 = vmatpush2.bf16.msra.mxu0 0
    %2250 = vmatprep.subr.bf16.mxu0 0
    %2251 = vmatpush2.bf16.msra.mxu0 0
    %2252 = vmatprep.subr.bf16.mxu0 0
    %2253 = vmatpush2.bf16.msra.mxu0 0
    %2254 = vmatprep.subr.bf16.mxu0 0
    %2255 = vmatpush2.bf16.msra.mxu0 0
    %2256 = vmatprep.subr.bf16.mxu0 0
    %2257 = vmatpush2.bf16.msra.mxu0 0
    %2258 = vmatprep.subr.bf16.mxu0 0
    %2259 = vmatpush2.bf16.msra.mxu0 0
    %2260 = vmatprep.subr.bf16.mxu0 0
    %2261 = vmatpush2.bf16.msra.mxu0 0
    %2262 = vmatprep.subr.bf16.mxu0 0
    %2263 = vmatpush2.bf16.msra.mxu0 0
    %2264 = vmatprep.mubr.bf16.mxu0 0
    %2265 = vmatmul.mubr.bf16.gmra.mxu0 %v2021
    %v2266 = vpop.f32.mrf.mxu0
    %v2267 = vadd.f32 %v2017, %v2266
    %v2268 = vpop.f32.mrf.mxu0
    %v2269 = vadd.f32 %v2017, %v2268
    %v2270 = vpop.f32.mrf.mxu0
    %v2271 = vpop.f32.mrf.mxu0
    %2272 = vdwg.mxu0
    %2273 = vmatprep.subr.bf16.mxu0 0
    %2274 = vmatpush1.bf16.msra.mxu0 0
    %2275 = vmatprep.subr.bf16.mxu0 0
    %2276 = vmatpush1.bf16.msra.mxu0 0
    %2277 = vmatprep.subr.bf16.mxu0 0
    %2278 = vmatpush1.bf16.msra.mxu0 0
    %2279 = vmatprep.subr.bf16.mxu0 %v2057
    %2280 = vmatpush1.bf16.msra.mxu0 %v2054
    %2281 = vmatprep.subr.bf16.mxu0 %v1993
    %2282 = vmatpush1.bf16.msra.mxu0 %v1992
    %2283 = vmatprep.subr.bf16.mxu0 %v1978
    %2284 = vmatpush1.bf16.msra.mxu0 %v1977
    %2285 = vmatprep.subr.bf16.mxu0 %v1963
    %2286 = vmatpush1.bf16.msra.mxu0 %v1962
    %2287 = vmatprep.subr.bf16.mxu0 %v1948
    %2288 = vmatpush1.bf16.msra.mxu0 %v1947
    %2289 = vmatprep.subr.bf16.mxu0 0
    %2290 = vmatpush2.bf16.msra.mxu0 0
    %2291 = vmatprep.subr.bf16.mxu0 0
    %2292 = vmatpush2.bf16.msra.mxu0 0
    %2293 = vmatprep.subr.bf16.mxu0 0
    %2294 = vmatpush2.bf16.msra.mxu0 0
    %2295 = vmatprep.subr.bf16.mxu0 0
    %2296 = vmatpush2.bf16.msra.mxu0 0
    %2297 = vmatprep.subr.bf16.mxu0 0
    %2298 = vmatpush2.bf16.msra.mxu0 0
    %2299 = vmatprep.subr.bf16.mxu0 0
    %2300 = vmatpush2.bf16.msra.mxu0 0
    %2301 = vmatprep.subr.bf16.mxu0 0
    %2302 = vmatpush2.bf16.msra.mxu0 0
    %2303 = vmatprep.subr.bf16.mxu0 0
    %2304 = vmatpush2.bf16.msra.mxu0 0
    %2305 = vmatprep.mubr.bf16.mxu0 0
    %2306 = vmatmul.mubr.bf16.gmra.mxu0 %v2021
    %v2307 = vpop.f32.mrf.mxu0
    %v2308 = vadd.f32 %v2017, %v2307
    %v2309 = vpop.f32.mrf.mxu0
    %v2310 = vadd.f32 %v2017, %v2309
    %v2311 = vpop.f32.mrf.mxu0
    %v2312 = vpop.f32.mrf.mxu0
    %2313 = vdwg.mxu0
    %2314 = vmatprep.subr.bf16.mxu0 0
    %2315 = vmatpush1.bf16.msra.mxu0 0
    %2316 = vmatprep.subr.bf16.mxu0 0
    %2317 = vmatpush1.bf16.msra.mxu0 0
    %2318 = vmatprep.subr.bf16.mxu0 0
    %2319 = vmatpush1.bf16.msra.mxu0 0
    %2320 = vmatprep.subr.bf16.mxu0 %v2063
    %2321 = vmatpush1.bf16.msra.mxu0 %v2060
    %2322 = vmatprep.subr.bf16.mxu0 %v1995
    %2323 = vmatpush1.bf16.msra.mxu0 %v1994
    %2324 = vmatprep.subr.bf16.mxu0 %v1980
    %2325 = vmatpush1.bf16.msra.mxu0 %v1979
    %2326 = vmatprep.subr.bf16.mxu0 %v1965
    %2327 = vmatpush1.bf16.msra.mxu0 %v1964
    %2328 = vmatprep.subr.bf16.mxu0 %v1950
    %2329 = vmatpush1.bf16.msra.mxu0 %v1949
    %2330 = vmatprep.subr.bf16.mxu0 0
    %2331 = vmatpush2.bf16.msra.mxu0 0
    %2332 = vmatprep.subr.bf16.mxu0 0
    %2333 = vmatpush2.bf16.msra.mxu0 0
    %2334 = vmatprep.subr.bf16.mxu0 0
    %2335 = vmatpush2.bf16.msra.mxu0 0
    %2336 = vmatprep.subr.bf16.mxu0 0
    %2337 = vmatpush2.bf16.msra.mxu0 0
    %2338 = vmatprep.subr.bf16.mxu0 0
    %2339 = vmatpush2.bf16.msra.mxu0 0
    %2340 = vmatprep.subr.bf16.mxu0 0
    %2341 = vmatpush2.bf16.msra.mxu0 0
    %2342 = vmatprep.subr.bf16.mxu0 0
    %2343 = vmatpush2.bf16.msra.mxu0 0
    %2344 = vmatprep.subr.bf16.mxu0 0
    %2345 = vmatpush2.bf16.msra.mxu0 0
    %2346 = vmatprep.mubr.bf16.mxu0 0
    %2347 = vmatmul.mubr.bf16.gmra.mxu0 %v2021
    %v2348 = vpop.f32.mrf.mxu0
    %v2349 = vadd.f32 %v2017, %v2348
    %v2350 = vpop.f32.mrf.mxu0
    %v2351 = vadd.f32 %v2017, %v2350
    %v2352 = vpop.f32.mrf.mxu0
    %v2353 = vpop.f32.mrf.mxu0
    %2354 = vdwg.mxu0
    %2355 = vmatprep.subr.bf16.mxu0 0
    %2356 = vmatpush1.bf16.msra.mxu0 0
    %2357 = vmatprep.subr.bf16.mxu0 0
    %2358 = vmatpush1.bf16.msra.mxu0 0
    %2359 = vmatprep.subr.bf16.mxu0 0
    %2360 = vmatpush1.bf16.msra.mxu0 0
    %2361 = vmatprep.subr.bf16.mxu0 0
    %2362 = vmatpush1.bf16.msra.mxu0 %v2066
    %2363 = vmatprep.subr.bf16.mxu0 0
    %2364 = vmatpush1.bf16.msra.mxu0 %v1996
    %2365 = vmatprep.subr.bf16.mxu0 0
    %2366 = vmatpush1.bf16.msra.mxu0 %v1981
    %2367 = vmatprep.subr.bf16.mxu0 0
    %2368 = vmatpush1.bf16.msra.mxu0 %v1966
    %2369 = vmatprep.subr.bf16.mxu0 0
    %2370 = vmatpush1.bf16.msra.mxu0 %v1951
    %2371 = vmatprep.subr.bf16.mxu0 0
    %2372 = vmatpush2.bf16.msra.mxu0 0
    %2373 = vmatprep.subr.bf16.mxu0 0
    %2374 = vmatpush2.bf16.msra.mxu0 0
    %2375 = vmatprep.subr.bf16.mxu0 0
    %2376 = vmatpush2.bf16.msra.mxu0 0
    %2377 = vmatprep.subr.bf16.mxu0 0
    %2378 = vmatpush2.bf16.msra.mxu0 0
    %2379 = vmatprep.subr.bf16.mxu0 0
    %2380 = vmatpush2.bf16.msra.mxu0 0
    %2381 = vmatprep.subr.bf16.mxu0 0
    %2382 = vmatpush2.bf16.msra.mxu0 0
    %2383 = vmatprep.subr.bf16.mxu0 0
    %2384 = vmatpush2.bf16.msra.mxu0 0
    %2385 = vmatprep.subr.bf16.mxu0 0
    %2386 = vmatpush2.bf16.msra.mxu0 0
    %2387 = vmatprep.mubr.bf16.mxu0 0
    %2388 = vmatmul.mubr.bf16.gmra.mxu0 %v2021
    %v2389 = vpop.f32.mrf.mxu0
    %v2390 = vadd.f32 %v2017, %v2389
    %v2391 = vpop.f32.mrf.mxu0
    %v2392 = vpop.f32.mrf.mxu0
    %v2393 = vpop.f32.mrf.mxu0
    %2394 = vdwg.mxu0
    %v2395 = vld [vmem:[%s11] sm:$0xff]
    %v2396 = vld [vmem:[%s11 + $0x8] sm:$0xff]
    %v2397 = vld [vmem:[%s11 + $0x10] sm:$0xff]
    %v2398 = vld [vmem:[%s11 + $0x18] sm:$0xff]
    %v2399 = vld [vmem:[%s11 + $0x20] sm:$0xff]
    %v2400 = vld [vmem:[%s11 + $0x28] sm:$0xff]
    %v2401 = vld [vmem:[%s11 + $0x30] sm:$0xff]
    %v2402 = vld [vmem:[%s11 + $0x38] sm:$0xff]
    %v2403 = vld [vmem:[%s11 + $0x40] sm:$0xff]
    %v2404 = vld [vmem:[%s11 + $0x48] sm:$0xff]
    %v2405 = vld [vmem:[%s11 + $0x50] sm:$0xff]
    %v2406 = vld [vmem:[%s11 + $0x58] sm:$0xff]
    %v2407 = vld [vmem:[%s11 + $0x60] sm:$0xff]
    %v2408 = vld [vmem:[%s11 + $0x68] sm:$0xff]
    %v2409 = vld [vmem:[%s11 + $0x70] sm:$0xff]
    %v2410 = vld [vmem:[%s11 + $0x78] sm:$0xff]
    %v2411 = vld [vmem:[%s11 + $0x80] sm:$0xff]
    %v2412 = vld [vmem:[%s11 + $0x88] sm:$0xff]
    %v2413 = vld [vmem:[%s11 + $0x90] sm:$0xff]
    %v2414 = vld [vmem:[%s11 + $0x98] sm:$0xff]
    %v2415 = vld [vmem:[%s11 + $0xa0] sm:$0xff]
    %v2416 = vld [vmem:[%s11 + $0xa8] sm:$0xff]
    %v2417 = vld [vmem:[%s11 + $0xb0] sm:$0xff]
    %v2418 = vld [vmem:[%s11 + $0xb8] sm:$0xff]
    %v2419 = vld [vmem:[%s11 + $0xc0] sm:$0xff]
    %v2420 = vld [vmem:[%s11 + $0xc8] sm:$0xff]
    %v2421 = vld [vmem:[%s11 + $0xd0] sm:$0xff]
    %v2422 = vld [vmem:[%s11 + $0xd8] sm:$0xff]
    %v2423 = vld [vmem:[%s11 + $0xe0] sm:$0xff]
    %v2424 = vld [vmem:[%s11 + $0xe8] sm:$0xff]
    %v2425 = vld [vmem:[%s11 + $0xf0] sm:$0xff]
    %v2426 = vld [vmem:[%s11 + $0xf8] sm:$0xff]
    %v2427 = vld [vmem:[%s11 + $0x100] sm:$0xff]
    %v2428 = vld [vmem:[%s11 + $0x108] sm:$0xff]
    %v2429 = vld [vmem:[%s11 + $0x110] sm:$0xff]
    %v2430 = vld [vmem:[%s11 + $0x118] sm:$0xff]
    %v2431 = vld [vmem:[%s11 + $0x120] sm:$0xff]
    %v2432 = vld [vmem:[%s11 + $0x128] sm:$0xff]
    %v2433 = vld [vmem:[%s11 + $0x130] sm:$0xff]
    %v2434 = vld [vmem:[%s11 + $0x138] sm:$0xff]
    %v2435 = vld [vmem:[%s11 + $0x140] sm:$0xff]
    %v2436 = vld [vmem:[%s11 + $0x148] sm:$0xff]
    %v2437 = vld [vmem:[%s11 + $0x150] sm:$0xff]
    %v2438 = vld [vmem:[%s11 + $0x158] sm:$0xff]
    %v2439 = vld [vmem:[%s11 + $0x160] sm:$0xff]
    %v2440 = vld [vmem:[%s11 + $0x168] sm:$0xff]
    %v2441 = vld [vmem:[%s11 + $0x170] sm:$0xff]
    %v2442 = vld [vmem:[%s11 + $0x178] sm:$0xff]
    %v2443 = vld [vmem:[%s11 + $0x180] sm:$0xff]
    %v2444 = vld [vmem:[%s11 + $0x188] sm:$0xff]
    %v2445 = vld [vmem:[%s11 + $0x190] sm:$0xff]
    %v2446 = vld [vmem:[%s11 + $0x198] sm:$0xff]
    %v2447 = vld [vmem:[%s11 + $0x1a0] sm:$0xff]
    %v2448 = vld [vmem:[%s11 + $0x1a8] sm:$0xff]
    %v2449 = vld [vmem:[%s11 + $0x1b0] sm:$0xff]
    %v2450 = vld [vmem:[%s11 + $0x1b8] sm:$0xff]
    %v2451 = vld [vmem:[%s11 + $0x1c0] sm:$0xff]
    %v2452 = vld [vmem:[%s11 + $0x1c8] sm:$0xff]
    %v2453 = vld [vmem:[%s11 + $0x1d0] sm:$0xff]
    %v2454 = vld [vmem:[%s11 + $0x1d8] sm:$0xff]
    %v2455 = vld [vmem:[%s11 + $0x1e0] sm:$0xff]
    %v2456 = vld [vmem:[%s11 + $0x1e8] sm:$0xff]
    %v2457 = vld [vmem:[%s11 + $0x1f0] sm:$0xff]
    %v2458 = vld [vmem:[%s11 + $0x1f8] sm:$0xff]
    %v2459 = vld [vmem:[%s11 + $0x200] sm:$0xff]
    %v2460 = vld [vmem:[%s11 + $0x208] sm:$0xff]
    %v2461 = vld [vmem:[%s11 + $0x210] sm:$0xff]
    %v2462 = vld [vmem:[%s11 + $0x218] sm:$0xff]
    %v2463 = vld [vmem:[%s11 + $0x220] sm:$0xff]
    %v2464 = vld [vmem:[%s11 + $0x228] sm:$0xff]
    %v2465 = vld [vmem:[%s11 + $0x230] sm:$0xff]
    %v2466 = vld [vmem:[%s11 + $0x238] sm:$0xff]
    %v2467 = vld [vmem:[%s11 + $0x240] sm:$0xff]
    %v2468 = vld [vmem:[%s11 + $0x248] sm:$0xff]
    %v2469 = vld [vmem:[%s11 + $0x250] sm:$0xff]
    %v2470 = vld [vmem:[%s11 + $0x258] sm:$0xff]
    %v2471 = vld [vmem:[%s11 + $0x260] sm:$0xff]
    %v2472 = vld [vmem:[%s11 + $0x268] sm:$0xff]
    %v2473 = vld [vmem:[%s11 + $0x270] sm:$0xff]
    %v2474 = vld [vmem:[%s11 + $0x278] sm:$0xff]
    %v2475 = vld [vmem:[%s11 + $0x280] sm:$0xff]
    %v2476 = vld [vmem:[%s11 + $0x288] sm:$0xff]
    %v2477 = vld [vmem:[%s11 + $0x290] sm:$0xff]
    %v2478 = vld [vmem:[%s11 + $0x298] sm:$0xff]
    %v2479 = vld [vmem:[%s11 + $0x2a0] sm:$0xff]
    %v2480 = vld [vmem:[%s11 + $0x2a8] sm:$0xff]
    %v2481 = vld [vmem:[%s11 + $0x2b0] sm:$0xff]
    %v2482 = vld [vmem:[%s11 + $0x2b8] sm:$0xff]
    %v2483 = vld [vmem:[%s11 + $0x2c0] sm:$0xff]
    %v2484 = vld [vmem:[%s11 + $0x2c8] sm:$0xff]
    %v2485 = vld [vmem:[%s11 + $0x2d0] sm:$0xff]
    %v2486 = vld [vmem:[%s11 + $0x2d8] sm:$0xff]
    %v2487 = vld [vmem:[%s11 + $0x2e0] sm:$0xff]
    %v2488 = vld [vmem:[%s11 + $0x2e8] sm:$0xff]
    %v2489 = vld [vmem:[%s11 + $0x2f0] sm:$0xff]
    %v2490 = vld [vmem:[%s11 + $0x2f8] sm:$0xff]
    %v2491 = vld [vmem:[%s11 + $0x300] sm:$0xff]
    %v2492 = vld [vmem:[%s11 + $0x308] sm:$0xff]
    %v2493 = vld [vmem:[%s11 + $0x310] sm:$0xff]
    %v2494 = vld [vmem:[%s11 + $0x318] sm:$0xff]
    %v2495 = vld [vmem:[%s11 + $0x320] sm:$0xff]
    %v2496 = vld [vmem:[%s11 + $0x328] sm:$0xff]
    %v2497 = vld [vmem:[%s11 + $0x330] sm:$0xff]
    %v2498 = vld [vmem:[%s11 + $0x338] sm:$0xff]
    %v2499 = vld [vmem:[%s11 + $0x340] sm:$0xff]
    %v2500 = vld [vmem:[%s11 + $0x348] sm:$0xff]
    %v2501 = vld [vmem:[%s11 + $0x350] sm:$0xff]
    %v2502 = vld [vmem:[%s11 + $0x358] sm:$0xff]
    %v2503 = vld [vmem:[%s11 + $0x360] sm:$0xff]
    %v2504 = vld [vmem:[%s11 + $0x368] sm:$0xff]
    %v2505 = vld [vmem:[%s11 + $0x370] sm:$0xff]
    %v2506 = vld [vmem:[%s11 + $0x378] sm:$0xff]
    %v2507 = vld [vmem:[%s11 + $0x380] sm:$0x33]
    %vm2508 = vcmask 64512
    %v2509 = vsel %vm2508, %v2390, 0.0
    %2525 = vrot.lane.b32.xlu0 %v2103, 127
    %v2526 = vpop.permute.xlu0 %2525
    %2527 = vrot.lane.b32.xlu0 %v2105, 127
    %v2528 = vpop.permute.xlu0 %2527
    %2529 = vrot.lane.b32.xlu0 %v2144, 127
    %v2530 = vpop.permute.xlu0 %2529
    %2531 = vrot.lane.b32.xlu0 %v2146, 127
    %v2532 = vpop.permute.xlu0 %2531
    %2533 = vrot.lane.b32.xlu0 %v2185, 127
    %v2534 = vpop.permute.xlu0 %2533
    %2535 = vrot.lane.b32.xlu0 %v2187, 127
    %v2536 = vpop.permute.xlu0 %2535
    %2537 = vrot.lane.b32.xlu0 %v2226, 127
    %v2538 = vpop.permute.xlu0 %2537
    %2539 = vrot.lane.b32.xlu0 %v2228, 127
    %v2540 = vpop.permute.xlu0 %2539
    %2541 = vrot.lane.b32.xlu0 %v2267, 127
    %v2542 = vpop.permute.xlu0 %2541
    %2543 = vrot.lane.b32.xlu0 %v2269, 127
    %v2544 = vpop.permute.xlu0 %2543
    %2545 = vrot.lane.b32.xlu0 %v2308, 127
    %v2546 = vpop.permute.xlu0 %2545
    %2547 = vrot.lane.b32.xlu0 %v2310, 127
    %v2548 = vpop.permute.xlu0 %2547
    %2549 = vrot.lane.b32.xlu0 %v2349, 127
    %v2550 = vpop.permute.xlu0 %2549
    %2551 = vrot.lane.b32.xlu0 %v2351, 127
    %v2552 = vpop.permute.xlu0 %2551
    %2553 = vrot.lane.b32.xlu0 %v2509, 127
    %v2554 = vpop.permute.xlu0 %2553
    %v2555 = vsel %vm228, %v2526, %v2528
    %v2556 = vsel %vm228, %v2528, %v2530
    %v2557 = vsel %vm228, %v2530, %v2532
    %v2558 = vsel %vm228, %v2532, %v2534
    %v2559 = vsel %vm228, %v2534, %v2536
    %v2560 = vsel %vm228, %v2536, %v2538
    %v2561 = vsel %vm228, %v2538, %v2540
    %v2562 = vsel %vm228, %v2540, %v2542
    %v2563 = vsel %vm228, %v2542, %v2544
    %v2564 = vsel %vm228, %v2544, %v2546
    %v2565 = vsel %vm228, %v2546, %v2548
    %v2566 = vsel %vm228, %v2548, %v2550
    %v2567 = vsel %vm228, %v2550, %v2552
    %v2568 = vsel %vm228, %v2552, %v2554
    %v2584 = vmax.f32 %v2103, %v2555
    %v2585 = vmax.f32 %v2105, %v2556
    %v2586 = vmax.f32 %v2144, %v2557
    %v2587 = vmax.f32 %v2146, %v2558
    %v2588 = vmax.f32 %v2185, %v2559
    %v2589 = vmax.f32 %v2187, %v2560
    %v2590 = vmax.f32 %v2226, %v2561
    %v2591 = vmax.f32 %v2228, %v2562
    %v2592 = vmax.f32 %v2267, %v2563
    %v2593 = vmax.f32 %v2269, %v2564
    %v2594 = vmax.f32 %v2308, %v2565
    %v2595 = vmax.f32 %v2310, %v2566
    %v2596 = vmax.f32 %v2349, %v2567
    %v2597 = vmax.f32 %v2351, %v2568
    %v2598 = vmax.f32 %v2509, %v2554
    %2614 = vrot.lane.b32.xlu0 %v2584, 98
    %v2615 = vpop.permute.xlu0 %2614
    %2616 = vrot.lane.b32.xlu0 %v2585, 98
    %v2617 = vpop.permute.xlu0 %2616
    %2618 = vrot.lane.b32.xlu0 %v2586, 98
    %v2619 = vpop.permute.xlu0 %2618
    %2620 = vrot.lane.b32.xlu0 %v2587, 98
    %v2621 = vpop.permute.xlu0 %2620
    %2622 = vrot.lane.b32.xlu0 %v2588, 98
    %v2623 = vpop.permute.xlu0 %2622
    %2624 = vrot.lane.b32.xlu0 %v2589, 98
    %v2625 = vpop.permute.xlu0 %2624
    %2626 = vrot.lane.b32.xlu0 %v2590, 98
    %v2627 = vpop.permute.xlu0 %2626
    %2628 = vrot.lane.b32.xlu0 %v2591, 98
    %v2629 = vpop.permute.xlu0 %2628
    %2630 = vrot.lane.b32.xlu0 %v2592, 98
    %v2631 = vpop.permute.xlu0 %2630
    %2632 = vrot.lane.b32.xlu0 %v2593, 98
    %v2633 = vpop.permute.xlu0 %2632
    %2634 = vrot.lane.b32.xlu0 %v2594, 98
    %v2635 = vpop.permute.xlu0 %2634
    %2636 = vrot.lane.b32.xlu0 %v2595, 98
    %v2637 = vpop.permute.xlu0 %2636
    %2638 = vrot.lane.b32.xlu0 %v2596, 98
    %v2639 = vpop.permute.xlu0 %2638
    %2640 = vrot.lane.b32.xlu0 %v2597, 98
    %v2641 = vpop.permute.xlu0 %2640
    %2642 = vrot.lane.b32.xlu0 %v2598, 98
    %v2643 = vpop.permute.xlu0 %2642
    %v2644 = vsel %vm378, %v2615, %v2617
    %v2645 = vsel %vm378, %v2617, %v2619
    %v2646 = vsel %vm378, %v2619, %v2621
    %v2647 = vsel %vm378, %v2621, %v2623
    %v2648 = vsel %vm378, %v2623, %v2625
    %v2649 = vsel %vm378, %v2625, %v2627
    %v2650 = vsel %vm378, %v2627, %v2629
    %v2651 = vsel %vm378, %v2629, %v2631
    %v2652 = vsel %vm378, %v2631, %v2633
    %v2653 = vsel %vm378, %v2633, %v2635
    %v2654 = vsel %vm378, %v2635, %v2637
    %v2655 = vsel %vm378, %v2637, %v2639
    %v2656 = vsel %vm378, %v2639, %v2641
    %v2657 = vsel %vm378, %v2641, %v2643
    %v2673 = vmax.f32 %v2584, %v2644
    %v2674 = vmax.f32 %v2585, %v2645
    %v2675 = vmax.f32 %v2586, %v2646
    %v2676 = vmax.f32 %v2587, %v2647
    %v2677 = vmax.f32 %v2588, %v2648
    %v2678 = vmax.f32 %v2589, %v2649
    %v2679 = vmax.f32 %v2590, %v2650
    %v2680 = vmax.f32 %v2591, %v2651
    %v2681 = vmax.f32 %v2592, %v2652
    %v2682 = vmax.f32 %v2593, %v2653
    %v2683 = vmax.f32 %v2594, %v2654
    %v2684 = vmax.f32 %v2595, %v2655
    %v2685 = vmax.f32 %v2596, %v2656
    %v2686 = vmax.f32 %v2597, %v2657
    %v2687 = vmax.f32 %v2598, %v2643
    %v2688 = vpack.c.bf16 %v2673, %v2673
    %v2689 = vpack.c.bf16 %v2674, %v2674
    %v2690 = vpack.c.bf16 %v2675, %v2675
    %v2691 = vpack.c.bf16 %v2676, %v2676
    %v2692 = vpack.c.bf16 %v2677, %v2677
    %v2693 = vpack.c.bf16 %v2678, %v2678
    %v2694 = vpack.c.bf16 %v2679, %v2679
    %v2695 = vpack.c.bf16 %v2680, %v2680
    %v2696 = vpack.c.bf16 %v2681, %v2681
    %v2697 = vpack.c.bf16 %v2682, %v2682
    %v2698 = vpack.c.bf16 %v2683, %v2683
    %v2699 = vpack.c.bf16 %v2684, %v2684
    %v2700 = vpack.c.bf16 %v2685, %v2685
    %v2701 = vpack.c.bf16 %v2686, %v2686
    %v2702 = vpack.c.bf16 %v2687, %v2687
    %v2816 = vunpack.c.l.b16 %v2395
    %v2817 = vunpack.c.h.b16 %v2395
    %v2818 = vunpack.c.l.b16 %v2396
    %v2819 = vunpack.c.h.b16 %v2396
    %v2820 = vunpack.c.l.b16 %v2397
    %v2821 = vunpack.c.h.b16 %v2397
    %v2822 = vunpack.c.l.b16 %v2398
    %v2823 = vunpack.c.h.b16 %v2398
    %v2824 = vunpack.c.l.b16 %v2399
    %v2825 = vunpack.c.h.b16 %v2399
    %v2826 = vunpack.c.l.b16 %v2400
    %v2827 = vunpack.c.h.b16 %v2400
    %v2828 = vunpack.c.l.b16 %v2401
    %v2829 = vunpack.c.h.b16 %v2401
    %v2830 = vunpack.c.l.b16 %v2402
    %v2831 = vunpack.c.h.b16 %v2402
    %v2832 = vunpack.c.l.b16 %v2403
    %v2833 = vunpack.c.h.b16 %v2403
    %v2834 = vunpack.c.l.b16 %v2404
    %v2835 = vunpack.c.h.b16 %v2404
    %v2836 = vunpack.c.l.b16 %v2405
    %v2837 = vunpack.c.h.b16 %v2405
    %v2838 = vunpack.c.l.b16 %v2406
    %v2839 = vunpack.c.h.b16 %v2406
    %v2840 = vunpack.c.l.b16 %v2407
    %v2841 = vunpack.c.h.b16 %v2407
    %v2842 = vunpack.c.l.b16 %v2408
    %v2843 = vunpack.c.h.b16 %v2408
    %v2844 = vunpack.c.l.b16 %v2409
    %v2845 = vunpack.c.h.b16 %v2409
    %v2846 = vunpack.c.l.b16 %v2410
    %v2847 = vunpack.c.h.b16 %v2410
    %v2848 = vunpack.c.l.b16 %v2411
    %v2849 = vunpack.c.h.b16 %v2411
    %v2850 = vunpack.c.l.b16 %v2412
    %v2851 = vunpack.c.h.b16 %v2412
    %v2852 = vunpack.c.l.b16 %v2413
    %v2853 = vunpack.c.h.b16 %v2413
    %v2854 = vunpack.c.l.b16 %v2414
    %v2855 = vunpack.c.h.b16 %v2414
    %v2856 = vunpack.c.l.b16 %v2415
    %v2857 = vunpack.c.h.b16 %v2415
    %v2858 = vunpack.c.l.b16 %v2416
    %v2859 = vunpack.c.h.b16 %v2416
    %v2860 = vunpack.c.l.b16 %v2417
    %v2861 = vunpack.c.h.b16 %v2417
    %v2862 = vunpack.c.l.b16 %v2418
    %v2863 = vunpack.c.h.b16 %v2418
    %v2864 = vunpack.c.l.b16 %v2419
    %v2865 = vunpack.c.h.b16 %v2419
    %v2866 = vunpack.c.l.b16 %v2420
    %v2867 = vunpack.c.h.b16 %v2420
    %v2868 = vunpack.c.l.b16 %v2421
    %v2869 = vunpack.c.h.b16 %v2421
    %v2870 = vunpack.c.l.b16 %v2422
    %v2871 = vunpack.c.h.b16 %v2422
    %v2872 = vunpack.c.l.b16 %v2423
    %v2873 = vunpack.c.h.b16 %v2423
    %v2874 = vunpack.c.l.b16 %v2424
    %v2875 = vunpack.c.h.b16 %v2424
    %v2876 = vunpack.c.l.b16 %v2425
    %v2877 = vunpack.c.h.b16 %v2425
    %v2878 = vunpack.c.l.b16 %v2426
    %v2879 = vunpack.c.h.b16 %v2426
    %v2880 = vunpack.c.l.b16 %v2427
    %v2881 = vunpack.c.h.b16 %v2427
    %v2882 = vunpack.c.l.b16 %v2428
    %v2883 = vunpack.c.h.b16 %v2428
    %v2884 = vunpack.c.l.b16 %v2429
    %v2885 = vunpack.c.h.b16 %v2429
    %v2886 = vunpack.c.l.b16 %v2430
    %v2887 = vunpack.c.h.b16 %v2430
    %v2888 = vunpack.c.l.b16 %v2431
    %v2889 = vunpack.c.h.b16 %v2431
    %v2890 = vunpack.c.l.b16 %v2432
    %v2891 = vunpack.c.h.b16 %v2432
    %v2892 = vunpack.c.l.b16 %v2433
    %v2893 = vunpack.c.h.b16 %v2433
    %v2894 = vunpack.c.l.b16 %v2434
    %v2895 = vunpack.c.h.b16 %v2434
    %v2896 = vunpack.c.l.b16 %v2435
    %v2897 = vunpack.c.h.b16 %v2435
    %v2898 = vunpack.c.l.b16 %v2436
    %v2899 = vunpack.c.h.b16 %v2436
    %v2900 = vunpack.c.l.b16 %v2437
    %v2901 = vunpack.c.h.b16 %v2437
    %v2902 = vunpack.c.l.b16 %v2438
    %v2903 = vunpack.c.h.b16 %v2438
    %v2904 = vunpack.c.l.b16 %v2439
    %v2905 = vunpack.c.h.b16 %v2439
    %v2906 = vunpack.c.l.b16 %v2440
    %v2907 = vunpack.c.h.b16 %v2440
    %v2908 = vunpack.c.l.b16 %v2441
    %v2909 = vunpack.c.h.b16 %v2441
    %v2910 = vunpack.c.l.b16 %v2442
    %v2911 = vunpack.c.h.b16 %v2442
    %v2912 = vunpack.c.l.b16 %v2443
    %v2913 = vunpack.c.h.b16 %v2443
    %v2914 = vunpack.c.l.b16 %v2444
    %v2915 = vunpack.c.h.b16 %v2444
    %v2916 = vunpack.c.l.b16 %v2445
    %v2917 = vunpack.c.h.b16 %v2445
    %v2918 = vunpack.c.l.b16 %v2446
    %v2919 = vunpack.c.h.b16 %v2446
    %v2920 = vunpack.c.l.b16 %v2447
    %v2921 = vunpack.c.h.b16 %v2447
    %v2922 = vunpack.c.l.b16 %v2448
    %v2923 = vunpack.c.h.b16 %v2448
    %v2924 = vunpack.c.l.b16 %v2449
    %v2925 = vunpack.c.h.b16 %v2449
    %v2926 = vunpack.c.l.b16 %v2450
    %v2927 = vunpack.c.h.b16 %v2450
    %v2928 = vunpack.c.l.b16 %v2451
    %v2929 = vunpack.c.h.b16 %v2451
    %v2930 = vunpack.c.l.b16 %v2452
    %v2931 = vunpack.c.h.b16 %v2452
    %v2932 = vunpack.c.l.b16 %v2453
    %v2933 = vunpack.c.h.b16 %v2453
    %v2934 = vunpack.c.l.b16 %v2454
    %v2935 = vunpack.c.h.b16 %v2454
    %v2936 = vunpack.c.l.b16 %v2455
    %v2937 = vunpack.c.h.b16 %v2455
    %v2938 = vunpack.c.l.b16 %v2456
    %v2939 = vunpack.c.h.b16 %v2456
    %v2940 = vunpack.c.l.b16 %v2457
    %v2941 = vunpack.c.h.b16 %v2457
    %v2942 = vunpack.c.l.b16 %v2458
    %v2943 = vunpack.c.h.b16 %v2458
    %v2944 = vunpack.c.l.b16 %v2459
    %v2945 = vunpack.c.h.b16 %v2459
    %v2946 = vunpack.c.l.b16 %v2460
    %v2947 = vunpack.c.h.b16 %v2460
    %v2948 = vunpack.c.l.b16 %v2461
    %v2949 = vunpack.c.h.b16 %v2461
    %v2950 = vunpack.c.l.b16 %v2462
    %v2951 = vunpack.c.h.b16 %v2462
    %v2952 = vunpack.c.l.b16 %v2463
    %v2953 = vunpack.c.h.b16 %v2463
    %v2954 = vunpack.c.l.b16 %v2464
    %v2955 = vunpack.c.h.b16 %v2464
    %v2956 = vunpack.c.l.b16 %v2465
    %v2957 = vunpack.c.h.b16 %v2465
    %v2958 = vunpack.c.l.b16 %v2466
    %v2959 = vunpack.c.h.b16 %v2466
    %v2960 = vunpack.c.l.b16 %v2467
    %v2961 = vunpack.c.h.b16 %v2467
    %v2962 = vunpack.c.l.b16 %v2468
    %v2963 = vunpack.c.h.b16 %v2468
    %v2964 = vunpack.c.l.b16 %v2469
    %v2965 = vunpack.c.h.b16 %v2469
    %v2966 = vunpack.c.l.b16 %v2470
    %v2967 = vunpack.c.h.b16 %v2470
    %v2968 = vunpack.c.l.b16 %v2471
    %v2969 = vunpack.c.h.b16 %v2471
    %v2970 = vunpack.c.l.b16 %v2472
    %v2971 = vunpack.c.h.b16 %v2472
    %v2972 = vunpack.c.l.b16 %v2473
    %v2973 = vunpack.c.h.b16 %v2473
    %v2974 = vunpack.c.l.b16 %v2474
    %v2975 = vunpack.c.h.b16 %v2474
    %v2976 = vunpack.c.l.b16 %v2475
    %v2977 = vunpack.c.h.b16 %v2475
    %v2978 = vunpack.c.l.b16 %v2476
    %v2979 = vunpack.c.h.b16 %v2476
    %v2980 = vunpack.c.l.b16 %v2477
    %v2981 = vunpack.c.h.b16 %v2477
    %v2982 = vunpack.c.l.b16 %v2478
    %v2983 = vunpack.c.h.b16 %v2478
    %v2984 = vunpack.c.l.b16 %v2479
    %v2985 = vunpack.c.h.b16 %v2479
    %v2986 = vunpack.c.l.b16 %v2480
    %v2987 = vunpack.c.h.b16 %v2480
    %v2988 = vunpack.c.l.b16 %v2481
    %v2989 = vunpack.c.h.b16 %v2481
    %v2990 = vunpack.c.l.b16 %v2482
    %v2991 = vunpack.c.h.b16 %v2482
    %v2992 = vunpack.c.l.b16 %v2483
    %v2993 = vunpack.c.h.b16 %v2483
    %v2994 = vunpack.c.l.b16 %v2484
    %v2995 = vunpack.c.h.b16 %v2484
    %v2996 = vunpack.c.l.b16 %v2485
    %v2997 = vunpack.c.h.b16 %v2485
    %v2998 = vunpack.c.l.b16 %v2486
    %v2999 = vunpack.c.h.b16 %v2486
    %v3000 = vunpack.c.l.b16 %v2487
    %v3001 = vunpack.c.h.b16 %v2487
    %v3002 = vunpack.c.l.b16 %v2488
    %v3003 = vunpack.c.h.b16 %v2488
    %v3004 = vunpack.c.l.b16 %v2489
    %v3005 = vunpack.c.h.b16 %v2489
    %v3006 = vunpack.c.l.b16 %v2490
    %v3007 = vunpack.c.h.b16 %v2490
    %v3008 = vunpack.c.l.b16 %v2491
    %v3009 = vunpack.c.h.b16 %v2491
    %v3010 = vunpack.c.l.b16 %v2492
    %v3011 = vunpack.c.h.b16 %v2492
    %v3012 = vunpack.c.l.b16 %v2493
    %v3013 = vunpack.c.h.b16 %v2493
    %v3014 = vunpack.c.l.b16 %v2494
    %v3015 = vunpack.c.h.b16 %v2494
    %v3016 = vunpack.c.l.b16 %v2495
    %v3017 = vunpack.c.h.b16 %v2495
    %v3018 = vunpack.c.l.b16 %v2496
    %v3019 = vunpack.c.h.b16 %v2496
    %v3020 = vunpack.c.l.b16 %v2497
    %v3021 = vunpack.c.h.b16 %v2497
    %v3022 = vunpack.c.l.b16 %v2498
    %v3023 = vunpack.c.h.b16 %v2498
    %v3024 = vunpack.c.l.b16 %v2499
    %v3025 = vunpack.c.h.b16 %v2499
    %v3026 = vunpack.c.l.b16 %v2500
    %v3027 = vunpack.c.h.b16 %v2500
    %v3028 = vunpack.c.l.b16 %v2501
    %v3029 = vunpack.c.h.b16 %v2501
    %v3030 = vunpack.c.l.b16 %v2502
    %v3031 = vunpack.c.h.b16 %v2502
    %v3032 = vunpack.c.l.b16 %v2503
    %v3033 = vunpack.c.h.b16 %v2503
    %v3034 = vunpack.c.l.b16 %v2504
    %v3035 = vunpack.c.h.b16 %v2504
    %v3036 = vunpack.c.l.b16 %v2505
    %v3037 = vunpack.c.h.b16 %v2505
    %v3038 = vunpack.c.l.b16 %v2506
    %v3039 = vunpack.c.h.b16 %v2506
    %v3040 = vunpack.c.l.b16 %v2507
    %v3041 = vunpack.c.h.b16 %v2507
    %v3042 = vpack.c.b16 %v2818, %v2816
    %v3043 = vpack.c.b16 %v2819, %v2817
    %v3044 = vpack.c.b16 %v2822, %v2820
    %v3045 = vpack.c.b16 %v2823, %v2821
    %v3046 = vpack.c.b16 %v2826, %v2824
    %v3047 = vpack.c.b16 %v2827, %v2825
    %v3048 = vpack.c.b16 %v2830, %v2828
    %v3049 = vpack.c.b16 %v2831, %v2829
    %v3050 = vpack.c.b16 %v2834, %v2832
    %v3051 = vpack.c.b16 %v2835, %v2833
    %v3052 = vpack.c.b16 %v2838, %v2836
    %v3053 = vpack.c.b16 %v2839, %v2837
    %v3054 = vpack.c.b16 %v2842, %v2840
    %v3055 = vpack.c.b16 %v2843, %v2841
    %v3056 = vpack.c.b16 %v2846, %v2844
    %v3057 = vpack.c.b16 %v2847, %v2845
    %v3058 = vpack.c.b16 %v2850, %v2848
    %v3059 = vpack.c.b16 %v2851, %v2849
    %v3060 = vpack.c.b16 %v2854, %v2852
    %v3061 = vpack.c.b16 %v2855, %v2853
    %v3062 = vpack.c.b16 %v2858, %v2856
    %v3063 = vpack.c.b16 %v2859, %v2857
    %v3064 = vpack.c.b16 %v2862, %v2860
    %v3065 = vpack.c.b16 %v2863, %v2861
    %v3066 = vpack.c.b16 %v2866, %v2864
    %v3067 = vpack.c.b16 %v2867, %v2865
    %v3068 = vpack.c.b16 %v2870, %v2868
    %v3069 = vpack.c.b16 %v2871, %v2869
    %v3070 = vpack.c.b16 %v2874, %v2872
    %v3071 = vpack.c.b16 %v2875, %v2873
    %v3072 = vpack.c.b16 %v2878, %v2876
    %v3073 = vpack.c.b16 %v2879, %v2877
    %v3074 = vpack.c.b16 %v2882, %v2880
    %v3075 = vpack.c.b16 %v2883, %v2881
    %v3076 = vpack.c.b16 %v2886, %v2884
    %v3077 = vpack.c.b16 %v2887, %v2885
    %v3078 = vpack.c.b16 %v2890, %v2888
    %v3079 = vpack.c.b16 %v2891, %v2889
    %v3080 = vpack.c.b16 %v2894, %v2892
    %v3081 = vpack.c.b16 %v2895, %v2893
    %v3082 = vpack.c.b16 %v2898, %v2896
    %v3083 = vpack.c.b16 %v2899, %v2897
    %v3084 = vpack.c.b16 %v2902, %v2900
    %v3085 = vpack.c.b16 %v2903, %v2901
    %v3086 = vpack.c.b16 %v2906, %v2904
    %v3087 = vpack.c.b16 %v2907, %v2905
    %v3088 = vpack.c.b16 %v2910, %v2908
    %v3089 = vpack.c.b16 %v2911, %v2909
    %v3090 = vpack.c.b16 %v2914, %v2912
    %v3091 = vpack.c.b16 %v2915, %v2913
    %v3092 = vpack.c.b16 %v2918, %v2916
    %v3093 = vpack.c.b16 %v2919, %v2917
    %v3094 = vpack.c.b16 %v2922, %v2920
    %v3095 = vpack.c.b16 %v2923, %v2921
    %v3096 = vpack.c.b16 %v2926, %v2924
    %v3097 = vpack.c.b16 %v2927, %v2925
    %v3098 = vpack.c.b16 %v2930, %v2928
    %v3099 = vpack.c.b16 %v2931, %v2929
    %v3100 = vpack.c.b16 %v2934, %v2932
    %v3101 = vpack.c.b16 %v2935, %v2933
    %v3102 = vpack.c.b16 %v2938, %v2936
    %v3103 = vpack.c.b16 %v2939, %v2937
    %v3104 = vpack.c.b16 %v2942, %v2940
    %v3105 = vpack.c.b16 %v2943, %v2941
    %v3106 = vpack.c.b16 %v2946, %v2944
    %v3107 = vpack.c.b16 %v2947, %v2945
    %v3108 = vpack.c.b16 %v2950, %v2948
    %v3109 = vpack.c.b16 %v2951, %v2949
    %v3110 = vpack.c.b16 %v2954, %v2952
    %v3111 = vpack.c.b16 %v2955, %v2953
    %v3112 = vpack.c.b16 %v2958, %v2956
    %v3113 = vpack.c.b16 %v2959, %v2957
    %v3114 = vpack.c.b16 %v2962, %v2960
    %v3115 = vpack.c.b16 %v2963, %v2961
    %v3116 = vpack.c.b16 %v2966, %v2964
    %v3117 = vpack.c.b16 %v2967, %v2965
    %v3118 = vpack.c.b16 %v2970, %v2968
    %v3119 = vpack.c.b16 %v2971, %v2969
    %v3120 = vpack.c.b16 %v2974, %v2972
    %v3121 = vpack.c.b16 %v2975, %v2973
    %v3122 = vpack.c.b16 %v2978, %v2976
    %v3123 = vpack.c.b16 %v2979, %v2977
    %v3124 = vpack.c.b16 %v2982, %v2980
    %v3125 = vpack.c.b16 %v2983, %v2981
    %v3126 = vpack.c.b16 %v2986, %v2984
    %v3127 = vpack.c.b16 %v2987, %v2985
    %v3128 = vpack.c.b16 %v2990, %v2988
    %v3129 = vpack.c.b16 %v2991, %v2989
    %v3130 = vpack.c.b16 %v2994, %v2992
    %v3131 = vpack.c.b16 %v2995, %v2993
    %v3132 = vpack.c.b16 %v2998, %v2996
    %v3133 = vpack.c.b16 %v2999, %v2997
    %v3134 = vpack.c.b16 %v3002, %v3000
    %v3135 = vpack.c.b16 %v3003, %v3001
    %v3136 = vpack.c.b16 %v3006, %v3004
    %v3137 = vpack.c.b16 %v3007, %v3005
    %v3138 = vpack.c.b16 %v3010, %v3008
    %v3139 = vpack.c.b16 %v3011, %v3009
    %v3140 = vpack.c.b16 %v3014, %v3012
    %v3141 = vpack.c.b16 %v3015, %v3013
    %v3142 = vpack.c.b16 %v3018, %v3016
    %v3143 = vpack.c.b16 %v3019, %v3017
    %v3144 = vpack.c.b16 %v3022, %v3020
    %v3145 = vpack.c.b16 %v3023, %v3021
    %v3146 = vpack.c.b16 %v3026, %v3024
    %v3147 = vpack.c.b16 %v3027, %v3025
    %v3148 = vpack.c.b16 %v3030, %v3028
    %v3149 = vpack.c.b16 %v3031, %v3029
    %v3150 = vpack.c.b16 %v3034, %v3032
    %v3151 = vpack.c.b16 %v3035, %v3033
    %v3152 = vpack.c.b16 %v3038, %v3036
    %v3153 = vpack.c.b16 %v3039, %v3037
    %v3154 = vpack.c.b16 %v3040, %v3040
    %v3155 = vpack.c.b16 %v3041, %v3041
    %vm3268 = vcmask 31744
    %v3270 = vsel %vm3268, %v2695, 0
    %v3273 = vsel %vm784, %v3154, 0
    %v3276 = vsel %vm784, %v3155, 0
    %3278 = vmatprep.subr.bf16.mxu0 %v3057
    %3279 = vmatpush1.bf16.msra.mxu0 %v3056
    %3280 = vmatprep.subr.bf16.mxu0 %v3055
    %3281 = vmatpush1.bf16.msra.mxu0 %v3054
    %3282 = vmatprep.subr.bf16.mxu0 %v3053
    %3283 = vmatpush1.bf16.msra.mxu0 %v3052
    %3284 = vmatprep.subr.bf16.mxu0 %v3051
    %3285 = vmatpush1.bf16.msra.mxu0 %v3050
    %3286 = vmatprep.subr.bf16.mxu0 %v3049
    %3287 = vmatpush1.bf16.msra.mxu0 %v3048
    %3288 = vmatprep.subr.bf16.mxu0 %v3047
    %3289 = vmatpush1.bf16.msra.mxu0 %v3046
    %3290 = vmatprep.subr.bf16.mxu0 %v3045
    %3291 = vmatpush1.bf16.msra.mxu0 %v3044
    %3292 = vmatprep.subr.bf16.mxu0 %v3043
    %3293 = vmatpush1.bf16.msra.mxu0 %v3042
    %3294 = vmatprep.subr.bf16.mxu0 %v3073
    %3295 = vmatpush2.bf16.msra.mxu0 %v3072
    %3296 = vmatprep.subr.bf16.mxu0 %v3071
    %3297 = vmatpush2.bf16.msra.mxu0 %v3070
    %3298 = vmatprep.subr.bf16.mxu0 %v3069
    %3299 = vmatpush2.bf16.msra.mxu0 %v3068
    %3300 = vmatprep.subr.bf16.mxu0 %v3067
    %3301 = vmatpush2.bf16.msra.mxu0 %v3066
    %3302 = vmatprep.subr.bf16.mxu0 %v3065
    %3303 = vmatpush2.bf16.msra.mxu0 %v3064
    %3304 = vmatprep.subr.bf16.mxu0 %v3063
    %3305 = vmatpush2.bf16.msra.mxu0 %v3062
    %3306 = vmatprep.subr.bf16.mxu0 %v3061
    %3307 = vmatpush2.bf16.msra.mxu0 %v3060
    %3308 = vmatprep.subr.bf16.mxu0 %v3059
    %3309 = vmatpush2.bf16.msra.mxu0 %v3058
    %3310 = vmatprep.mubr.bf16.mxu0 %v2689
    %3311 = vmatmul.mubr.bf16.gmra.mxu0 %v2688
    %v3312 = vpop.f32.mrf.mxu0
    %v3313 = vadd.f32 0.0, %v3312
    %v3314 = vpop.f32.mrf.mxu0
    %v3315 = vadd.f32 0.0, %v3314
    %v3316 = vpop.f32.mrf.mxu0
    %v3317 = vpop.f32.mrf.mxu0
    %3318 = vdwg.mxu0
    %3319 = vmatprep.subr.bf16.mxu0 %v3089
    %3320 = vmatpush1.bf16.msra.mxu0 %v3088
    %3321 = vmatprep.subr.bf16.mxu0 %v3087
    %3322 = vmatpush1.bf16.msra.mxu0 %v3086
    %3323 = vmatprep.subr.bf16.mxu0 %v3085
    %3324 = vmatpush1.bf16.msra.mxu0 %v3084
    %3325 = vmatprep.subr.bf16.mxu0 %v3083
    %3326 = vmatpush1.bf16.msra.mxu0 %v3082
    %3327 = vmatprep.subr.bf16.mxu0 %v3081
    %3328 = vmatpush1.bf16.msra.mxu0 %v3080
    %3329 = vmatprep.subr.bf16.mxu0 %v3079
    %3330 = vmatpush1.bf16.msra.mxu0 %v3078
    %3331 = vmatprep.subr.bf16.mxu0 %v3077
    %3332 = vmatpush1.bf16.msra.mxu0 %v3076
    %3333 = vmatprep.subr.bf16.mxu0 %v3075
    %3334 = vmatpush1.bf16.msra.mxu0 %v3074
    %3335 = vmatprep.subr.bf16.mxu0 %v3105
    %3336 = vmatpush2.bf16.msra.mxu0 %v3104
    %3337 = vmatprep.subr.bf16.mxu0 %v3103
    %3338 = vmatpush2.bf16.msra.mxu0 %v3102
    %3339 = vmatprep.subr.bf16.mxu0 %v3101
    %3340 = vmatpush2.bf16.msra.mxu0 %v3100
    %3341 = vmatprep.subr.bf16.mxu0 %v3099
    %3342 = vmatpush2.bf16.msra.mxu0 %v3098
    %3343 = vmatprep.subr.bf16.mxu0 %v3097
    %3344 = vmatpush2.bf16.msra.mxu0 %v3096
    %3345 = vmatprep.subr.bf16.mxu0 %v3095
    %3346 = vmatpush2.bf16.msra.mxu0 %v3094
    %3347 = vmatprep.subr.bf16.mxu0 %v3093
    %3348 = vmatpush2.bf16.msra.mxu0 %v3092
    %3349 = vmatprep.subr.bf16.mxu0 %v3091
    %3350 = vmatpush2.bf16.msra.mxu0 %v3090
    %3351 = vmatprep.mubr.bf16.mxu0 %v2691
    %3352 = vmatmul.mubr.bf16.gmra.mxu0 %v2690
    %v3353 = vpop.f32.mrf.mxu0
    %v3354 = vadd.f32 %v3313, %v3353
    %v3355 = vpop.f32.mrf.mxu0
    %v3356 = vadd.f32 %v3315, %v3355
    %v3357 = vpop.f32.mrf.mxu0
    %v3358 = vpop.f32.mrf.mxu0
    %3359 = vdwg.mxu0
    %3360 = vmatprep.subr.bf16.mxu0 %v3121
    %3361 = vmatpush1.bf16.msra.mxu0 %v3120
    %3362 = vmatprep.subr.bf16.mxu0 %v3119
    %3363 = vmatpush1.bf16.msra.mxu0 %v3118
    %3364 = vmatprep.subr.bf16.mxu0 %v3117
    %3365 = vmatpush1.bf16.msra.mxu0 %v3116
    %3366 = vmatprep.subr.bf16.mxu0 %v3115
    %3367 = vmatpush1.bf16.msra.mxu0 %v3114
    %3368 = vmatprep.subr.bf16.mxu0 %v3113
    %3369 = vmatpush1.bf16.msra.mxu0 %v3112
    %3370 = vmatprep.subr.bf16.mxu0 %v3111
    %3371 = vmatpush1.bf16.msra.mxu0 %v3110
    %3372 = vmatprep.subr.bf16.mxu0 %v3109
    %3373 = vmatpush1.bf16.msra.mxu0 %v3108
    %3374 = vmatprep.subr.bf16.mxu0 %v3107
    %3375 = vmatpush1.bf16.msra.mxu0 %v3106
    %3376 = vmatprep.subr.bf16.mxu0 %v3137
    %3377 = vmatpush2.bf16.msra.mxu0 %v3136
    %3378 = vmatprep.subr.bf16.mxu0 %v3135
    %3379 = vmatpush2.bf16.msra.mxu0 %v3134
    %3380 = vmatprep.subr.bf16.mxu0 %v3133
    %3381 = vmatpush2.bf16.msra.mxu0 %v3132
    %3382 = vmatprep.subr.bf16.mxu0 %v3131
    %3383 = vmatpush2.bf16.msra.mxu0 %v3130
    %3384 = vmatprep.subr.bf16.mxu0 %v3129
    %3385 = vmatpush2.bf16.msra.mxu0 %v3128
    %3386 = vmatprep.subr.bf16.mxu0 %v3127
    %3387 = vmatpush2.bf16.msra.mxu0 %v3126
    %3388 = vmatprep.subr.bf16.mxu0 %v3125
    %3389 = vmatpush2.bf16.msra.mxu0 %v3124
    %3390 = vmatprep.subr.bf16.mxu0 %v3123
    %3391 = vmatpush2.bf16.msra.mxu0 %v3122
    %3392 = vmatprep.mubr.bf16.mxu0 %v2693
    %3393 = vmatmul.mubr.bf16.gmra.mxu0 %v2692
    %v3394 = vpop.f32.mrf.mxu0
    %v3395 = vadd.f32 %v3354, %v3394
    %v3396 = vpop.f32.mrf.mxu0
    %v3397 = vadd.f32 %v3356, %v3396
    %v3398 = vpop.f32.mrf.mxu0
    %v3399 = vpop.f32.mrf.mxu0
    %3400 = vdwg.mxu0
    %3401 = vmatprep.subr.bf16.mxu0 %v3153
    %3402 = vmatpush1.bf16.msra.mxu0 %v3152
    %3403 = vmatprep.subr.bf16.mxu0 %v3151
    %3404 = vmatpush1.bf16.msra.mxu0 %v3150
    %3405 = vmatprep.subr.bf16.mxu0 %v3149
    %3406 = vmatpush1.bf16.msra.mxu0 %v3148
    %3407 = vmatprep.subr.bf16.mxu0 %v3147
    %3408 = vmatpush1.bf16.msra.mxu0 %v3146
    %3409 = vmatprep.subr.bf16.mxu0 %v3145
    %3410 = vmatpush1.bf16.msra.mxu0 %v3144
    %3411 = vmatprep.subr.bf16.mxu0 %v3143
    %3412 = vmatpush1.bf16.msra.mxu0 %v3142
    %3413 = vmatprep.subr.bf16.mxu0 %v3141
    %3414 = vmatpush1.bf16.msra.mxu0 %v3140
    %3415 = vmatprep.subr.bf16.mxu0 %v3139
    %3416 = vmatpush1.bf16.msra.mxu0 %v3138
    %3417 = vmatprep.subr.bf16.mxu0 0
    %3418 = vmatpush2.bf16.msra.mxu0 0
    %3419 = vmatprep.subr.bf16.mxu0 0
    %3420 = vmatpush2.bf16.msra.mxu0 0
    %3421 = vmatprep.subr.bf16.mxu0 0
    %3422 = vmatpush2.bf16.msra.mxu0 0
    %3423 = vmatprep.subr.bf16.mxu0 0
    %3424 = vmatpush2.bf16.msra.mxu0 0
    %3425 = vmatprep.subr.bf16.mxu0 0
    %3426 = vmatpush2.bf16.msra.mxu0 0
    %3427 = vmatprep.subr.bf16.mxu0 0
    %3428 = vmatpush2.bf16.msra.mxu0 0
    %3429 = vmatprep.subr.bf16.mxu0 0
    %3430 = vmatpush2.bf16.msra.mxu0 0
    %3431 = vmatprep.subr.bf16.mxu0 %v3276
    %3432 = vmatpush2.bf16.msra.mxu0 %v3273
    %3433 = vmatprep.mubr.bf16.mxu0 %v3270
    %3434 = vmatmul.mubr.bf16.gmra.mxu0 %v2694
    %v3435 = vpop.f32.mrf.mxu0
    %v3436 = vadd.f32 %v3395, %v3435
    %v3437 = vpop.f32.mrf.mxu0
    %v3438 = vadd.f32 %v3397, %v3437
    %v3439 = vpop.f32.mrf.mxu0
    %v3440 = vpop.f32.mrf.mxu0
    %3441 = vdwg.mxu0
    %3450 = vrot.lane.b32.xlu0 %v2695, 124
    %v3451 = vpop.permute.xlu0 %3450
    %3452 = vrot.lane.b32.xlu0 %v2696, 124
    %v3453 = vpop.permute.xlu0 %3452
    %3454 = vrot.lane.b32.xlu0 %v2697, 124
    %v3455 = vpop.permute.xlu0 %3454
    %3456 = vrot.lane.b32.xlu0 %v2698, 124
    %v3457 = vpop.permute.xlu0 %3456
    %3458 = vrot.lane.b32.xlu0 %v2699, 124
    %v3459 = vpop.permute.xlu0 %3458
    %3460 = vrot.lane.b32.xlu0 %v2700, 124
    %v3461 = vpop.permute.xlu0 %3460
    %3462 = vrot.lane.b32.xlu0 %v2701, 124
    %v3463 = vpop.permute.xlu0 %3462
    %3464 = vrot.lane.b32.xlu0 %v2702, 124
    %v3465 = vpop.permute.xlu0 %3464
    %vm3466 = vcmask 1014784
    %v3467 = vsel %vm3466, %v3451, %v3453
    %v3468 = vsel %vm3466, %v3453, %v3455
    %v3469 = vsel %vm3466, %v3455, %v3457
    %v3470 = vsel %vm3466, %v3457, %v3459
    %v3471 = vsel %vm3466, %v3459, %v3461
    %v3472 = vsel %vm3466, %v3461, %v3463
    %v3473 = vsel %vm3466, %v3463, %v3465
    %v3482 = vsel %vm3268, %v3465, 0
    %3484 = vmatprep.subr.bf16.mxu0 %v3057
    %3485 = vmatpush1.bf16.msra.mxu0 %v3056
    %3486 = vmatprep.subr.bf16.mxu0 %v3055
    %3487 = vmatpush1.bf16.msra.mxu0 %v3054
    %3488 = vmatprep.subr.bf16.mxu0 %v3053
    %3489 = vmatpush1.bf16.msra.mxu0 %v3052
    %3490 = vmatprep.subr.bf16.mxu0 %v3051
    %3491 = vmatpush1.bf16.msra.mxu0 %v3050
    %3492 = vmatprep.subr.bf16.mxu0 %v3049
    %3493 = vmatpush1.bf16.msra.mxu0 %v3048
    %3494 = vmatprep.subr.bf16.mxu0 %v3047
    %3495 = vmatpush1.bf16.msra.mxu0 %v3046
    %3496 = vmatprep.subr.bf16.mxu0 %v3045
    %3497 = vmatpush1.bf16.msra.mxu0 %v3044
    %3498 = vmatprep.subr.bf16.mxu0 %v3043
    %3499 = vmatpush1.bf16.msra.mxu0 %v3042
    %3500 = vmatprep.subr.bf16.mxu0 %v3073
    %3501 = vmatpush2.bf16.msra.mxu0 %v3072
    %3502 = vmatprep.subr.bf16.mxu0 %v3071
    %3503 = vmatpush2.bf16.msra.mxu0 %v3070
    %3504 = vmatprep.subr.bf16.mxu0 %v3069
    %3505 = vmatpush2.bf16.msra.mxu0 %v3068
    %3506 = vmatprep.subr.bf16.mxu0 %v3067
    %3507 = vmatpush2.bf16.msra.mxu0 %v3066
    %3508 = vmatprep.subr.bf16.mxu0 %v3065
    %3509 = vmatpush2.bf16.msra.mxu0 %v3064
    %3510 = vmatprep.subr.bf16.mxu0 %v3063
    %3511 = vmatpush2.bf16.msra.mxu0 %v3062
    %3512 = vmatprep.subr.bf16.mxu0 %v3061
    %3513 = vmatpush2.bf16.msra.mxu0 %v3060
    %3514 = vmatprep.subr.bf16.mxu0 %v3059
    %3515 = vmatpush2.bf16.msra.mxu0 %v3058
    %3516 = vmatprep.mubr.bf16.mxu0 %v3468
    %3517 = vmatmul.mubr.bf16.gmra.mxu0 %v3467
    %v3518 = vpop.f32.mrf.mxu0
    %v3519 = vadd.f32 0.0, %v3518
    %v3520 = vpop.f32.mrf.mxu0
    %v3521 = vadd.f32 0.0, %v3520
    %v3522 = vpop.f32.mrf.mxu0
    %v3523 = vpop.f32.mrf.mxu0
    %3524 = vdwg.mxu0
    %3525 = vmatprep.subr.bf16.mxu0 %v3089
    %3526 = vmatpush1.bf16.msra.mxu0 %v3088
    %3527 = vmatprep.subr.bf16.mxu0 %v3087
    %3528 = vmatpush1.bf16.msra.mxu0 %v3086
    %3529 = vmatprep.subr.bf16.mxu0 %v3085
    %3530 = vmatpush1.bf16.msra.mxu0 %v3084
    %3531 = vmatprep.subr.bf16.mxu0 %v3083
    %3532 = vmatpush1.bf16.msra.mxu0 %v3082
    %3533 = vmatprep.subr.bf16.mxu0 %v3081
    %3534 = vmatpush1.bf16.msra.mxu0 %v3080
    %3535 = vmatprep.subr.bf16.mxu0 %v3079
    %3536 = vmatpush1.bf16.msra.mxu0 %v3078
    %3537 = vmatprep.subr.bf16.mxu0 %v3077
    %3538 = vmatpush1.bf16.msra.mxu0 %v3076
    %3539 = vmatprep.subr.bf16.mxu0 %v3075
    %3540 = vmatpush1.bf16.msra.mxu0 %v3074
    %3541 = vmatprep.subr.bf16.mxu0 %v3105
    %3542 = vmatpush2.bf16.msra.mxu0 %v3104
    %3543 = vmatprep.subr.bf16.mxu0 %v3103
    %3544 = vmatpush2.bf16.msra.mxu0 %v3102
    %3545 = vmatprep.subr.bf16.mxu0 %v3101
    %3546 = vmatpush2.bf16.msra.mxu0 %v3100
    %3547 = vmatprep.subr.bf16.mxu0 %v3099
    %3548 = vmatpush2.bf16.msra.mxu0 %v3098
    %3549 = vmatprep.subr.bf16.mxu0 %v3097
    %3550 = vmatpush2.bf16.msra.mxu0 %v3096
    %3551 = vmatprep.subr.bf16.mxu0 %v3095
    %3552 = vmatpush2.bf16.msra.mxu0 %v3094
    %3553 = vmatprep.subr.bf16.mxu0 %v3093
    %3554 = vmatpush2.bf16.msra.mxu0 %v3092
    %3555 = vmatprep.subr.bf16.mxu0 %v3091
    %3556 = vmatpush2.bf16.msra.mxu0 %v3090
    %3557 = vmatprep.mubr.bf16.mxu0 %v3470
    %3558 = vmatmul.mubr.bf16.gmra.mxu0 %v3469
    %v3559 = vpop.f32.mrf.mxu0
    %v3560 = vadd.f32 %v3519, %v3559
    %v3561 = vpop.f32.mrf.mxu0
    %v3562 = vadd.f32 %v3521, %v3561
    %v3563 = vpop.f32.mrf.mxu0
    %v3564 = vpop.f32.mrf.mxu0
    %3565 = vdwg.mxu0
    %3566 = vmatprep.subr.bf16.mxu0 %v3121
    %3567 = vmatpush1.bf16.msra.mxu0 %v3120
    %3568 = vmatprep.subr.bf16.mxu0 %v3119
    %3569 = vmatpush1.bf16.msra.mxu0 %v3118
    %3570 = vmatprep.subr.bf16.mxu0 %v3117
    %3571 = vmatpush1.bf16.msra.mxu0 %v3116
    %3572 = vmatprep.subr.bf16.mxu0 %v3115
    %3573 = vmatpush1.bf16.msra.mxu0 %v3114
    %3574 = vmatprep.subr.bf16.mxu0 %v3113
    %3575 = vmatpush1.bf16.msra.mxu0 %v3112
    %3576 = vmatprep.subr.bf16.mxu0 %v3111
    %3577 = vmatpush1.bf16.msra.mxu0 %v3110
    %3578 = vmatprep.subr.bf16.mxu0 %v3109
    %3579 = vmatpush1.bf16.msra.mxu0 %v3108
    %3580 = vmatprep.subr.bf16.mxu0 %v3107
    %3581 = vmatpush1.bf16.msra.mxu0 %v3106
    %3582 = vmatprep.subr.bf16.mxu0 %v3137
    %3583 = vmatpush2.bf16.msra.mxu0 %v3136
    %3584 = vmatprep.subr.bf16.mxu0 %v3135
    %3585 = vmatpush2.bf16.msra.mxu0 %v3134
    %3586 = vmatprep.subr.bf16.mxu0 %v3133
    %3587 = vmatpush2.bf16.msra.mxu0 %v3132
    %3588 = vmatprep.subr.bf16.mxu0 %v3131
    %3589 = vmatpush2.bf16.msra.mxu0 %v3130
    %3590 = vmatprep.subr.bf16.mxu0 %v3129
    %3591 = vmatpush2.bf16.msra.mxu0 %v3128
    %3592 = vmatprep.subr.bf16.mxu0 %v3127
    %3593 = vmatpush2.bf16.msra.mxu0 %v3126
    %3594 = vmatprep.subr.bf16.mxu0 %v3125
    %3595 = vmatpush2.bf16.msra.mxu0 %v3124
    %3596 = vmatprep.subr.bf16.mxu0 %v3123
    %3597 = vmatpush2.bf16.msra.mxu0 %v3122
    %3598 = vmatprep.mubr.bf16.mxu0 %v3472
    %3599 = vmatmul.mubr.bf16.gmra.mxu0 %v3471
    %v3600 = vpop.f32.mrf.mxu0
    %v3601 = vadd.f32 %v3560, %v3600
    %v3602 = vpop.f32.mrf.mxu0
    %v3603 = vadd.f32 %v3562, %v3602
    %v3604 = vpop.f32.mrf.mxu0
    %v3605 = vpop.f32.mrf.mxu0
    %3606 = vdwg.mxu0
    %3607 = vmatprep.subr.bf16.mxu0 %v3153
    %3608 = vmatpush1.bf16.msra.mxu0 %v3152
    %3609 = vmatprep.subr.bf16.mxu0 %v3151
    %3610 = vmatpush1.bf16.msra.mxu0 %v3150
    %3611 = vmatprep.subr.bf16.mxu0 %v3149
    %3612 = vmatpush1.bf16.msra.mxu0 %v3148
    %3613 = vmatprep.subr.bf16.mxu0 %v3147
    %3614 = vmatpush1.bf16.msra.mxu0 %v3146
    %3615 = vmatprep.subr.bf16.mxu0 %v3145
    %3616 = vmatpush1.bf16.msra.mxu0 %v3144
    %3617 = vmatprep.subr.bf16.mxu0 %v3143
    %3618 = vmatpush1.bf16.msra.mxu0 %v3142
    %3619 = vmatprep.subr.bf16.mxu0 %v3141
    %3620 = vmatpush1.bf16.msra.mxu0 %v3140
    %3621 = vmatprep.subr.bf16.mxu0 %v3139
    %3622 = vmatpush1.bf16.msra.mxu0 %v3138
    %3623 = vmatprep.subr.bf16.mxu0 0
    %3624 = vmatpush2.bf16.msra.mxu0 0
    %3625 = vmatprep.subr.bf16.mxu0 0
    %3626 = vmatpush2.bf16.msra.mxu0 0
    %3627 = vmatprep.subr.bf16.mxu0 0
    %3628 = vmatpush2.bf16.msra.mxu0 0
    %3629 = vmatprep.subr.bf16.mxu0 0
    %3630 = vmatpush2.bf16.msra.mxu0 0
    %3631 = vmatprep.subr.bf16.mxu0 0
    %3632 = vmatpush2.bf16.msra.mxu0 0
    %3633 = vmatprep.subr.bf16.mxu0 0
    %3634 = vmatpush2.bf16.msra.mxu0 0
    %3635 = vmatprep.subr.bf16.mxu0 0
    %3636 = vmatpush2.bf16.msra.mxu0 0
    %3637 = vmatprep.subr.bf16.mxu0 %v3276
    %3638 = vmatpush2.bf16.msra.mxu0 %v3273
    %3639 = vmatprep.mubr.bf16.mxu0 %v3482
    %3640 = vmatmul.mubr.bf16.gmra.mxu0 %v3473
    %v3641 = vpop.f32.mrf.mxu0
    %v3642 = vadd.f32 %v3601, %v3641
    %v3643 = vpop.f32.mrf.mxu0
    %v3644 = vadd.f32 %v3603, %v3643
    %v3645 = vpop.f32.mrf.mxu0
    %v3646 = vpop.f32.mrf.mxu0
    %3647 = vdwg.mxu0
    %v3648 = vld [vmem:[%s10] sm:$0xf]
    %3653 = vrot.lane.b32.xlu0 %v3436, 17
    %v3654 = vpop.permute.xlu0 %3653
    %3655 = vrot.lane.b32.xlu0 %v3438, 17
    %v3656 = vpop.permute.xlu0 %3655
    %3657 = vrot.lane.b32.xlu0 %v3642, 17
    %v3658 = vpop.permute.xlu0 %3657
    %3659 = vrot.lane.b32.xlu0 %v3644, 17
    %v3660 = vpop.permute.xlu0 %3659
    %vm3661 = vcmask 138240
    %v3662 = vsel %vm3661, %v3654, %v3656
    %v3663 = vsel %vm3661, %v3656, %v3658
    %v3664 = vsel %vm3661, %v3658, %v3660
    %v3670 = vsel %vm3661, 0.0, %v3654
    %v3671 = vsel %vm3661, %v3660, 0.0
    %3674 = vrot.lane.b32.xlu0 %v3670, 127
    %v3675 = vpop.permute.xlu0 %3674
    %3676 = vrot.lane.b32.xlu0 %v3662, 127
    %v3677 = vpop.permute.xlu0 %3676
    %3678 = vrot.lane.b32.xlu0 %v3663, 127
    %v3679 = vpop.permute.xlu0 %3678
    %3680 = vrot.lane.b32.xlu0 %v3664, 127
    %v3681 = vpop.permute.xlu0 %3680
    %3682 = vrot.lane.b32.xlu0 %v3671, 127
    %v3683 = vpop.permute.xlu0 %3682
    %v3684 = vsel %vm228, %v3675, %v3677
    %v3685 = vsel %vm228, %v3677, %v3679
    %v3686 = vsel %vm228, %v3679, %v3681
    %v3687 = vsel %vm228, %v3681, %v3683
    %3692 = vrot.lane.b32.xlu0 %v3670, 126
    %v3693 = vpop.permute.xlu0 %3692
    %3694 = vrot.lane.b32.xlu0 %v3662, 126
    %v3695 = vpop.permute.xlu0 %3694
    %3696 = vrot.lane.b32.xlu0 %v3663, 126
    %v3697 = vpop.permute.xlu0 %3696
    %3698 = vrot.lane.b32.xlu0 %v3664, 126
    %v3699 = vpop.permute.xlu0 %3698
    %3700 = vrot.lane.b32.xlu0 %v3671, 126
    %v3701 = vpop.permute.xlu0 %3700
    %v3702 = vsel %vm303, %v3693, %v3695
    %v3703 = vsel %vm303, %v3695, %v3697
    %v3704 = vsel %vm303, %v3697, %v3699
    %v3705 = vsel %vm303, %v3699, %v3701
    %3710 = vrot.lane.b32.xlu0 %v3670, 112
    %v3711 = vpop.permute.xlu0 %3710
    %3712 = vrot.lane.b32.xlu0 %v3662, 112
    %v3713 = vpop.permute.xlu0 %3712
    %3714 = vrot.lane.b32.xlu0 %v3663, 112
    %v3715 = vpop.permute.xlu0 %3714
    %3716 = vrot.lane.b32.xlu0 %v3664, 112
    %v3717 = vpop.permute.xlu0 %3716
    %3718 = vrot.lane.b32.xlu0 %v3671, 112
    %v3719 = vpop.permute.xlu0 %3718
    %vm3720 = vcmask 916480
    %v3721 = vsel %vm3720, %v3711, %v3713
    %v3722 = vsel %vm3720, %v3713, %v3715
    %v3723 = vsel %vm3720, %v3715, %v3717
    %v3724 = vsel %vm3720, %v3717, %v3719
    %3729 = vrot.lane.b32.xlu0 %v3670, 111
    %v3730 = vpop.permute.xlu0 %3729
    %3731 = vrot.lane.b32.xlu0 %v3662, 111
    %v3732 = vpop.permute.xlu0 %3731
    %3733 = vrot.lane.b32.xlu0 %v3663, 111
    %v3734 = vpop.permute.xlu0 %3733
    %3735 = vrot.lane.b32.xlu0 %v3664, 111
    %v3736 = vpop.permute.xlu0 %3735
    %3737 = vrot.lane.b32.xlu0 %v3671, 111
    %v3738 = vpop.permute.xlu0 %3737
    %vm3739 = vcmask 908288
    %v3740 = vsel %vm3739, %v3730, %v3732
    %v3741 = vsel %vm3739, %v3732, %v3734
    %v3742 = vsel %vm3739, %v3734, %v3736
    %v3743 = vsel %vm3739, %v3736, %v3738
    %3748 = vrot.lane.b32.xlu0 %v3670, 110
    %v3749 = vpop.permute.xlu0 %3748
    %3750 = vrot.lane.b32.xlu0 %v3662, 110
    %v3751 = vpop.permute.xlu0 %3750
    %3752 = vrot.lane.b32.xlu0 %v3663, 110
    %v3753 = vpop.permute.xlu0 %3752
    %3754 = vrot.lane.b32.xlu0 %v3664, 110
    %v3755 = vpop.permute.xlu0 %3754
    %3756 = vrot.lane.b32.xlu0 %v3671, 110
    %v3757 = vpop.permute.xlu0 %3756
    %vm3758 = vcmask 900096
    %v3759 = vsel %vm3758, %v3749, %v3751
    %v3760 = vsel %vm3758, %v3751, %v3753
    %v3761 = vsel %vm3758, %v3753, %v3755
    %v3762 = vsel %vm3758, %v3755, %v3757
    %3767 = vrot.lane.b32.xlu0 %v3670, 96
    %v3768 = vpop.permute.xlu0 %3767
    %3769 = vrot.lane.b32.xlu0 %v3662, 96
    %v3770 = vpop.permute.xlu0 %3769
    %3771 = vrot.lane.b32.xlu0 %v3663, 96
    %v3772 = vpop.permute.xlu0 %3771
    %3773 = vrot.lane.b32.xlu0 %v3664, 96
    %v3774 = vpop.permute.xlu0 %3773
    %3775 = vrot.lane.b32.xlu0 %v3671, 96
    %v3776 = vpop.permute.xlu0 %3775
    %v3777 = vsel %vm528, %v3768, %v3770
    %v3778 = vsel %vm528, %v3770, %v3772
    %v3779 = vsel %vm528, %v3772, %v3774
    %v3780 = vsel %vm528, %v3774, %v3776
    %3785 = vrot.lane.b32.xlu0 %v3670, 95
    %v3786 = vpop.permute.xlu0 %3785
    %3787 = vrot.lane.b32.xlu0 %v3662, 95
    %v3788 = vpop.permute.xlu0 %3787
    %3789 = vrot.lane.b32.xlu0 %v3663, 95
    %v3790 = vpop.permute.xlu0 %3789
    %3791 = vrot.lane.b32.xlu0 %v3664, 95
    %v3792 = vpop.permute.xlu0 %3791
    %3793 = vrot.lane.b32.xlu0 %v3671, 95
    %v3794 = vpop.permute.xlu0 %3793
    %vm3795 = vcmask 777216
    %v3796 = vsel %vm3795, %v3786, %v3788
    %v3797 = vsel %vm3795, %v3788, %v3790
    %v3798 = vsel %vm3795, %v3790, %v3792
    %v3799 = vsel %vm3795, %v3792, %v3794
    %3804 = vrot.lane.b32.xlu0 %v3670, 94
    %v3805 = vpop.permute.xlu0 %3804
    %3806 = vrot.lane.b32.xlu0 %v3662, 94
    %v3807 = vpop.permute.xlu0 %3806
    %3808 = vrot.lane.b32.xlu0 %v3663, 94
    %v3809 = vpop.permute.xlu0 %3808
    %3810 = vrot.lane.b32.xlu0 %v3664, 94
    %v3811 = vpop.permute.xlu0 %3810
    %3812 = vrot.lane.b32.xlu0 %v3671, 94
    %v3813 = vpop.permute.xlu0 %3812
    %vm3814 = vcmask 769024
    %v3815 = vsel %vm3814, %v3805, %v3807
    %v3816 = vsel %vm3814, %v3807, %v3809
    %v3817 = vsel %vm3814, %v3809, %v3811
    %v3818 = vsel %vm3814, %v3811, %v3813
    %v3823 = vpack.c.bf16 %v3684, %v3670
    %v3824 = vpack.c.bf16 %v3685, %v3662
    %v3825 = vpack.c.bf16 %v3686, %v3663
    %v3826 = vpack.c.bf16 %v3687, %v3664
    %v3827 = vpack.c.bf16 %v3721, %v3702
    %v3828 = vpack.c.bf16 %v3722, %v3703
    %v3829 = vpack.c.bf16 %v3723, %v3704
    %v3830 = vpack.c.bf16 %v3724, %v3705
    %v3831 = vpack.c.bf16 %v3759, %v3740
    %v3832 = vpack.c.bf16 %v3760, %v3741
    %v3833 = vpack.c.bf16 %v3761, %v3742
    %v3834 = vpack.c.bf16 %v3762, %v3743
    %v3835 = vpack.c.bf16 %v3796, %v3777
    %v3836 = vpack.c.bf16 %v3797, %v3778
    %v3837 = vpack.c.bf16 %v3798, %v3779
    %v3838 = vpack.c.bf16 %v3799, %v3780
    %v3839 = vpack.c.bf16 %v3815, %v3815
    %v3840 = vpack.c.bf16 %v3816, %v3816
    %v3841 = vpack.c.bf16 %v3817, %v3817
    %v3842 = vpack.c.bf16 %v3818, %v3818
    %v3843 = vld [vmem:[%s5] sm:$0xf]
    %v3844 = vld [vmem:[%s6] sm:$0xff]
    %3846 = vset.pattern.permute.xlu0 0
    %3847 = vperm.xlu0 %3846, %v3844
    %v3848 = vpop.permute.xlu0 %3847
    %v3851 = vsel %vm2019, %v3843, 0
    %v3854 = vsel %vm816, %v3839, 0
    %v3857 = vsel %vm816, %v3840, 0
    %v3860 = vsel %vm816, %v3841, 0
    %v3863 = vsel %vm816, %v3842, 0
    %3865 = vmatprep.subr.bf16.mxu0 0
    %3866 = vmatpush1.bf16.msra.mxu0 0
    %3867 = vmatprep.subr.bf16.mxu0 0
    %3868 = vmatpush1.bf16.msra.mxu0 0
    %3869 = vmatprep.subr.bf16.mxu0 0
    %3870 = vmatpush1.bf16.msra.mxu0 0
    %3871 = vmatprep.subr.bf16.mxu0 %v3857
    %3872 = vmatpush1.bf16.msra.mxu0 %v3854
    %3873 = vmatprep.subr.bf16.mxu0 %v3836
    %3874 = vmatpush1.bf16.msra.mxu0 %v3835
    %3875 = vmatprep.subr.bf16.mxu0 %v3832
    %3876 = vmatpush1.bf16.msra.mxu0 %v3831
    %3877 = vmatprep.subr.bf16.mxu0 %v3828
    %3878 = vmatpush1.bf16.msra.mxu0 %v3827
    %3879 = vmatprep.subr.bf16.mxu0 %v3824
    %3880 = vmatpush1.bf16.msra.mxu0 %v3823
    %3881 = vmatprep.subr.bf16.mxu0 0
    %3882 = vmatpush2.bf16.msra.mxu0 0
    %3883 = vmatprep.subr.bf16.mxu0 0
    %3884 = vmatpush2.bf16.msra.mxu0 0
    %3885 = vmatprep.subr.bf16.mxu0 0
    %3886 = vmatpush2.bf16.msra.mxu0 0
    %3887 = vmatprep.subr.bf16.mxu0 0
    %3888 = vmatpush2.bf16.msra.mxu0 0
    %3889 = vmatprep.subr.bf16.mxu0 0
    %3890 = vmatpush2.bf16.msra.mxu0 0
    %3891 = vmatprep.subr.bf16.mxu0 0
    %3892 = vmatpush2.bf16.msra.mxu0 0
    %3893 = vmatprep.subr.bf16.mxu0 0
    %3894 = vmatpush2.bf16.msra.mxu0 0
    %3895 = vmatprep.subr.bf16.mxu0 0
    %3896 = vmatpush2.bf16.msra.mxu0 0
    %3897 = vmatprep.mubr.bf16.mxu0 0
    %3898 = vmatmul.mubr.bf16.gmra.mxu0 %v3851
    %v3899 = vpop.f32.mrf.mxu0
    %v3900 = vadd.f32 %v3848, %v3899
    %v3901 = vpop.f32.mrf.mxu0
    %v3902 = vadd.f32 %v3848, %v3901
    %v3903 = vpop.f32.mrf.mxu0
    %v3904 = vpop.f32.mrf.mxu0
    %3905 = vdwg.mxu0
    %3906 = vmatprep.subr.bf16.mxu0 0
    %3907 = vmatpush1.bf16.msra.mxu0 0
    %3908 = vmatprep.subr.bf16.mxu0 0
    %3909 = vmatpush1.bf16.msra.mxu0 0
    %3910 = vmatprep.subr.bf16.mxu0 0
    %3911 = vmatpush1.bf16.msra.mxu0 0
    %3912 = vmatprep.subr.bf16.mxu0 %v3863
    %3913 = vmatpush1.bf16.msra.mxu0 %v3860
    %3914 = vmatprep.subr.bf16.mxu0 %v3838
    %3915 = vmatpush1.bf16.msra.mxu0 %v3837
    %3916 = vmatprep.subr.bf16.mxu0 %v3834
    %3917 = vmatpush1.bf16.msra.mxu0 %v3833
    %3918 = vmatprep.subr.bf16.mxu0 %v3830
    %3919 = vmatpush1.bf16.msra.mxu0 %v3829
    %3920 = vmatprep.subr.bf16.mxu0 %v3826
    %3921 = vmatpush1.bf16.msra.mxu0 %v3825
    %3922 = vmatprep.subr.bf16.mxu0 0
    %3923 = vmatpush2.bf16.msra.mxu0 0
    %3924 = vmatprep.subr.bf16.mxu0 0
    %3925 = vmatpush2.bf16.msra.mxu0 0
    %3926 = vmatprep.subr.bf16.mxu0 0
    %3927 = vmatpush2.bf16.msra.mxu0 0
    %3928 = vmatprep.subr.bf16.mxu0 0
    %3929 = vmatpush2.bf16.msra.mxu0 0
    %3930 = vmatprep.subr.bf16.mxu0 0
    %3931 = vmatpush2.bf16.msra.mxu0 0
    %3932 = vmatprep.subr.bf16.mxu0 0
    %3933 = vmatpush2.bf16.msra.mxu0 0
    %3934 = vmatprep.subr.bf16.mxu0 0
    %3935 = vmatpush2.bf16.msra.mxu0 0
    %3936 = vmatprep.subr.bf16.mxu0 0
    %3937 = vmatpush2.bf16.msra.mxu0 0
    %3938 = vmatprep.mubr.bf16.mxu0 0
    %3939 = vmatmul.mubr.bf16.gmra.mxu0 %v3851
    %v3940 = vpop.f32.mrf.mxu0
    %v3941 = vadd.f32 %v3848, %v3940
    %v3942 = vpop.f32.mrf.mxu0
    %v3943 = vadd.f32 %v3848, %v3942
    %v3944 = vpop.f32.mrf.mxu0
    %v3945 = vpop.f32.mrf.mxu0
    %3946 = vdwg.mxu0
    %v3947 = vmax.f32 %v3900, 0.0
    %v3948 = vmax.f32 %v3902, 0.0
    %v3949 = vmax.f32 %v3941, 0.0
    %v3950 = vmax.f32 %v3943, 0.0
    %v3952 = vlaneseq
    %v3953 = vshrl.u32 %v3952, 7
    %v3954 = vsub.s32 0, %v3953
    %v3955 = vrot.slane %v3648, %v3954
    %v3956 = vlaneseq
    %v3957 = vshrl.u32 %v3956, 7
    %v3958 = vsub.s32 1, %v3957
    %v3959 = vrot.slane %v3648, %v3958
    %v3960 = vlaneseq
    %v3961 = vshrl.u32 %v3960, 7
    %v3962 = vsub.s32 2, %v3961
    %v3963 = vrot.slane %v3648, %v3962
    %v3964 = vlaneseq
    %v3965 = vshrl.u32 %v3964, 7
    %v3966 = vsub.s32 3, %v3965
    %v3967 = vrot.slane %v3648, %v3966
    %v3972 = vmul.f32 %v3947, %v3955
    %v3973 = vmul.f32 %v3948, %v3959
    %v3974 = vmul.f32 %v3949, %v3963
    %v3975 = vmul.f32 %v3950, %v3967
    %3980 = vrot.lane.b32.xlu0 %v3972, 17
    %v3981 = vpop.permute.xlu0 %3980
    %3982 = vrot.lane.b32.xlu0 %v3973, 17
    %v3983 = vpop.permute.xlu0 %3982
    %3984 = vrot.lane.b32.xlu0 %v3974, 17
    %v3985 = vpop.permute.xlu0 %3984
    %3986 = vrot.lane.b32.xlu0 %v3975, 17
    %v3987 = vpop.permute.xlu0 %3986
    %v3988 = vsel %vm3661, %v3981, %v3983
    %v3989 = vsel %vm3661, %v3983, %v3985
    %v3990 = vsel %vm3661, %v3985, %v3987
    %v3996 = vsel %vm3661, 0.0, %v3981
    %v3997 = vsel %vm3661, %v3987, 0.0
    %4000 = vrot.lane.b32.xlu0 %v3996, 127
    %v4001 = vpop.permute.xlu0 %4000
    %4002 = vrot.lane.b32.xlu0 %v3988, 127
    %v4003 = vpop.permute.xlu0 %4002
    %4004 = vrot.lane.b32.xlu0 %v3989, 127
    %v4005 = vpop.permute.xlu0 %4004
    %4006 = vrot.lane.b32.xlu0 %v3990, 127
    %v4007 = vpop.permute.xlu0 %4006
    %4008 = vrot.lane.b32.xlu0 %v3997, 127
    %v4009 = vpop.permute.xlu0 %4008
    %v4010 = vsel %vm228, %v4001, %v4003
    %v4011 = vsel %vm228, %v4003, %v4005
    %v4012 = vsel %vm228, %v4005, %v4007
    %v4013 = vsel %vm228, %v4007, %v4009
    %4018 = vrot.lane.b32.xlu0 %v3996, 126
    %v4019 = vpop.permute.xlu0 %4018
    %4020 = vrot.lane.b32.xlu0 %v3988, 126
    %v4021 = vpop.permute.xlu0 %4020
    %4022 = vrot.lane.b32.xlu0 %v3989, 126
    %v4023 = vpop.permute.xlu0 %4022
    %4024 = vrot.lane.b32.xlu0 %v3990, 126
    %v4025 = vpop.permute.xlu0 %4024
    %4026 = vrot.lane.b32.xlu0 %v3997, 126
    %v4027 = vpop.permute.xlu0 %4026
    %v4028 = vsel %vm303, %v4019, %v4021
    %v4029 = vsel %vm303, %v4021, %v4023
    %v4030 = vsel %vm303, %v4023, %v4025
    %v4031 = vsel %vm303, %v4025, %v4027
    %4036 = vrot.lane.b32.xlu0 %v3996, 112
    %v4037 = vpop.permute.xlu0 %4036
    %4038 = vrot.lane.b32.xlu0 %v3988, 112
    %v4039 = vpop.permute.xlu0 %4038
    %4040 = vrot.lane.b32.xlu0 %v3989, 112
    %v4041 = vpop.permute.xlu0 %4040
    %4042 = vrot.lane.b32.xlu0 %v3990, 112
    %v4043 = vpop.permute.xlu0 %4042
    %4044 = vrot.lane.b32.xlu0 %v3997, 112
    %v4045 = vpop.permute.xlu0 %4044
    %v4046 = vsel %vm3720, %v4037, %v4039
    %v4047 = vsel %vm3720, %v4039, %v4041
    %v4048 = vsel %vm3720, %v4041, %v4043
    %v4049 = vsel %vm3720, %v4043, %v4045
    %4054 = vrot.lane.b32.xlu0 %v3996, 111
    %v4055 = vpop.permute.xlu0 %4054
    %4056 = vrot.lane.b32.xlu0 %v3988, 111
    %v4057 = vpop.permute.xlu0 %4056
    %4058 = vrot.lane.b32.xlu0 %v3989, 111
    %v4059 = vpop.permute.xlu0 %4058
    %4060 = vrot.lane.b32.xlu0 %v3990, 111
    %v4061 = vpop.permute.xlu0 %4060
    %4062 = vrot.lane.b32.xlu0 %v3997, 111
    %v4063 = vpop.permute.xlu0 %4062
    %v4064 = vsel %vm3739, %v4055, %v4057
    %v4065 = vsel %vm3739, %v4057, %v4059
    %v4066 = vsel %vm3739, %v4059, %v4061
    %v4067 = vsel %vm3739, %v4061, %v4063
    %4072 = vrot.lane.b32.xlu0 %v3996, 110
    %v4073 = vpop.permute.xlu0 %4072
    %4074 = vrot.lane.b32.xlu0 %v3988, 110
    %v4075 = vpop.permute.xlu0 %4074
    %4076 = vrot.lane.b32.xlu0 %v3989, 110
    %v4077 = vpop.permute.xlu0 %4076
    %4078 = vrot.lane.b32.xlu0 %v3990, 110
    %v4079 = vpop.permute.xlu0 %4078
    %4080 = vrot.lane.b32.xlu0 %v3997, 110
    %v4081 = vpop.permute.xlu0 %4080
    %v4082 = vsel %vm3758, %v4073, %v4075
    %v4083 = vsel %vm3758, %v4075, %v4077
    %v4084 = vsel %vm3758, %v4077, %v4079
    %v4085 = vsel %vm3758, %v4079, %v4081
    %4090 = vrot.lane.b32.xlu0 %v3996, 96
    %v4091 = vpop.permute.xlu0 %4090
    %4092 = vrot.lane.b32.xlu0 %v3988, 96
    %v4093 = vpop.permute.xlu0 %4092
    %4094 = vrot.lane.b32.xlu0 %v3989, 96
    %v4095 = vpop.permute.xlu0 %4094
    %4096 = vrot.lane.b32.xlu0 %v3990, 96
    %v4097 = vpop.permute.xlu0 %4096
    %4098 = vrot.lane.b32.xlu0 %v3997, 96
    %v4099 = vpop.permute.xlu0 %4098
    %v4100 = vsel %vm528, %v4091, %v4093
    %v4101 = vsel %vm528, %v4093, %v4095
    %v4102 = vsel %vm528, %v4095, %v4097
    %v4103 = vsel %vm528, %v4097, %v4099
    %4108 = vrot.lane.b32.xlu0 %v3996, 95
    %v4109 = vpop.permute.xlu0 %4108
    %4110 = vrot.lane.b32.xlu0 %v3988, 95
    %v4111 = vpop.permute.xlu0 %4110
    %4112 = vrot.lane.b32.xlu0 %v3989, 95
    %v4113 = vpop.permute.xlu0 %4112
    %4114 = vrot.lane.b32.xlu0 %v3990, 95
    %v4115 = vpop.permute.xlu0 %4114
    %4116 = vrot.lane.b32.xlu0 %v3997, 95
    %v4117 = vpop.permute.xlu0 %4116
    %v4118 = vsel %vm3795, %v4109, %v4111
    %v4119 = vsel %vm3795, %v4111, %v4113
    %v4120 = vsel %vm3795, %v4113, %v4115
    %v4121 = vsel %vm3795, %v4115, %v4117
    %4126 = vrot.lane.b32.xlu0 %v3996, 94
    %v4127 = vpop.permute.xlu0 %4126
    %4128 = vrot.lane.b32.xlu0 %v3988, 94
    %v4129 = vpop.permute.xlu0 %4128
    %4130 = vrot.lane.b32.xlu0 %v3989, 94
    %v4131 = vpop.permute.xlu0 %4130
    %4132 = vrot.lane.b32.xlu0 %v3990, 94
    %v4133 = vpop.permute.xlu0 %4132
    %4134 = vrot.lane.b32.xlu0 %v3997, 94
    %v4135 = vpop.permute.xlu0 %4134
    %v4136 = vsel %vm3814, %v4127, %v4129
    %v4137 = vsel %vm3814, %v4129, %v4131
    %v4138 = vsel %vm3814, %v4131, %v4133
    %v4139 = vsel %vm3814, %v4133, %v4135
    %v4144 = vpack.c.bf16 %v4010, %v3996
    %v4145 = vpack.c.bf16 %v4011, %v3988
    %v4146 = vpack.c.bf16 %v4012, %v3989
    %v4147 = vpack.c.bf16 %v4013, %v3990
    %v4148 = vpack.c.bf16 %v4046, %v4028
    %v4149 = vpack.c.bf16 %v4047, %v4029
    %v4150 = vpack.c.bf16 %v4048, %v4030
    %v4151 = vpack.c.bf16 %v4049, %v4031
    %v4152 = vpack.c.bf16 %v4082, %v4064
    %v4153 = vpack.c.bf16 %v4083, %v4065
    %v4154 = vpack.c.bf16 %v4084, %v4066
    %v4155 = vpack.c.bf16 %v4085, %v4067
    %v4156 = vpack.c.bf16 %v4118, %v4100
    %v4157 = vpack.c.bf16 %v4119, %v4101
    %v4158 = vpack.c.bf16 %v4120, %v4102
    %v4159 = vpack.c.bf16 %v4121, %v4103
    %v4160 = vpack.c.bf16 %v4136, %v4136
    %v4161 = vpack.c.bf16 %v4137, %v4137
    %v4162 = vpack.c.bf16 %v4138, %v4138
    %v4163 = vpack.c.bf16 %v4139, %v4139
    %v4164 = vld [vmem:[%s7] sm:$0xf]
    %v4165 = vld [vmem:[%s8] sm:$0xff]
    %4167 = vset.pattern.permute.xlu0 0
    %4168 = vperm.xlu0 %4167, %v4165
    %v4169 = vpop.permute.xlu0 %4168
    %v4172 = vsel %vm2019, %v4164, 0
    %v4175 = vsel %vm816, %v4160, 0
    %v4178 = vsel %vm816, %v4161, 0
    %v4181 = vsel %vm816, %v4162, 0
    %v4184 = vsel %vm816, %v4163, 0
    %4186 = vmatprep.subr.bf16.mxu0 0
    %4187 = vmatpush1.bf16.msra.mxu0 0
    %4188 = vmatprep.subr.bf16.mxu0 0
    %4189 = vmatpush1.bf16.msra.mxu0 0
    %4190 = vmatprep.subr.bf16.mxu0 0
    %4191 = vmatpush1.bf16.msra.mxu0 0
    %4192 = vmatprep.subr.bf16.mxu0 %v4178
    %4193 = vmatpush1.bf16.msra.mxu0 %v4175
    %4194 = vmatprep.subr.bf16.mxu0 %v4157
    %4195 = vmatpush1.bf16.msra.mxu0 %v4156
    %4196 = vmatprep.subr.bf16.mxu0 %v4153
    %4197 = vmatpush1.bf16.msra.mxu0 %v4152
    %4198 = vmatprep.subr.bf16.mxu0 %v4149
    %4199 = vmatpush1.bf16.msra.mxu0 %v4148
    %4200 = vmatprep.subr.bf16.mxu0 %v4145
    %4201 = vmatpush1.bf16.msra.mxu0 %v4144
    %4202 = vmatprep.subr.bf16.mxu0 0
    %4203 = vmatpush2.bf16.msra.mxu0 0
    %4204 = vmatprep.subr.bf16.mxu0 0
    %4205 = vmatpush2.bf16.msra.mxu0 0
    %4206 = vmatprep.subr.bf16.mxu0 0
    %4207 = vmatpush2.bf16.msra.mxu0 0
    %4208 = vmatprep.subr.bf16.mxu0 0
    %4209 = vmatpush2.bf16.msra.mxu0 0
    %4210 = vmatprep.subr.bf16.mxu0 0
    %4211 = vmatpush2.bf16.msra.mxu0 0
    %4212 = vmatprep.subr.bf16.mxu0 0
    %4213 = vmatpush2.bf16.msra.mxu0 0
    %4214 = vmatprep.subr.bf16.mxu0 0
    %4215 = vmatpush2.bf16.msra.mxu0 0
    %4216 = vmatprep.subr.bf16.mxu0 0
    %4217 = vmatpush2.bf16.msra.mxu0 0
    %4218 = vmatprep.mubr.bf16.mxu0 0
    %4219 = vmatmul.mubr.bf16.gmra.mxu0 %v4172
    %v4220 = vpop.f32.mrf.mxu0
    %v4221 = vadd.f32 %v4169, %v4220
    %v4222 = vpop.f32.mrf.mxu0
    %v4223 = vadd.f32 %v4169, %v4222
    %v4224 = vpop.f32.mrf.mxu0
    %v4225 = vpop.f32.mrf.mxu0
    %4226 = vdwg.mxu0
    %4227 = vmatprep.subr.bf16.mxu0 0
    %4228 = vmatpush1.bf16.msra.mxu0 0
    %4229 = vmatprep.subr.bf16.mxu0 0
    %4230 = vmatpush1.bf16.msra.mxu0 0
    %4231 = vmatprep.subr.bf16.mxu0 0
    %4232 = vmatpush1.bf16.msra.mxu0 0
    %4233 = vmatprep.subr.bf16.mxu0 %v4184
    %4234 = vmatpush1.bf16.msra.mxu0 %v4181
    %4235 = vmatprep.subr.bf16.mxu0 %v4159
    %4236 = vmatpush1.bf16.msra.mxu0 %v4158
    %4237 = vmatprep.subr.bf16.mxu0 %v4155
    %4238 = vmatpush1.bf16.msra.mxu0 %v4154
    %4239 = vmatprep.subr.bf16.mxu0 %v4151
    %4240 = vmatpush1.bf16.msra.mxu0 %v4150
    %4241 = vmatprep.subr.bf16.mxu0 %v4147
    %4242 = vmatpush1.bf16.msra.mxu0 %v4146
    %4243 = vmatprep.subr.bf16.mxu0 0
    %4244 = vmatpush2.bf16.msra.mxu0 0
    %4245 = vmatprep.subr.bf16.mxu0 0
    %4246 = vmatpush2.bf16.msra.mxu0 0
    %4247 = vmatprep.subr.bf16.mxu0 0
    %4248 = vmatpush2.bf16.msra.mxu0 0
    %4249 = vmatprep.subr.bf16.mxu0 0
    %4250 = vmatpush2.bf16.msra.mxu0 0
    %4251 = vmatprep.subr.bf16.mxu0 0
    %4252 = vmatpush2.bf16.msra.mxu0 0
    %4253 = vmatprep.subr.bf16.mxu0 0
    %4254 = vmatpush2.bf16.msra.mxu0 0
    %4255 = vmatprep.subr.bf16.mxu0 0
    %4256 = vmatpush2.bf16.msra.mxu0 0
    %4257 = vmatprep.subr.bf16.mxu0 0
    %4258 = vmatpush2.bf16.msra.mxu0 0
    %4259 = vmatprep.mubr.bf16.mxu0 0
    %4260 = vmatmul.mubr.bf16.gmra.mxu0 %v4172
    %v4261 = vpop.f32.mrf.mxu0
    %v4262 = vadd.f32 %v4169, %v4261
    %v4263 = vpop.f32.mrf.mxu0
    %v4264 = vadd.f32 %v4169, %v4263
    %v4265 = vpop.f32.mrf.mxu0
    %v4266 = vpop.f32.mrf.mxu0
    %4267 = vdwg.mxu0
    %v4268 = vld [vmem:[%s12] sm:$0xff]
    %v4269 = vld [vmem:[%s12 + $0x8] sm:$0xff]
    %v4270 = vld [vmem:[%s12 + $0x10] sm:$0xff]
    %v4271 = vld [vmem:[%s12 + $0x18] sm:$0xff]
    %v4272 = vld [vmem:[%s12 + $0x20] sm:$0xff]
    %v4273 = vld [vmem:[%s12 + $0x28] sm:$0xff]
    %v4274 = vld [vmem:[%s12 + $0x30] sm:$0xff]
    %v4275 = vld [vmem:[%s12 + $0x38] sm:$0xff]
    %v4276 = vld [vmem:[%s12 + $0x40] sm:$0xff]
    %v4277 = vld [vmem:[%s12 + $0x48] sm:$0xff]
    %v4278 = vld [vmem:[%s12 + $0x50] sm:$0xff]
    %v4279 = vld [vmem:[%s12 + $0x58] sm:$0xff]
    %v4280 = vld [vmem:[%s12 + $0x60] sm:$0xff]
    %v4281 = vld [vmem:[%s12 + $0x68] sm:$0xff]
    %v4282 = vld [vmem:[%s12 + $0x70] sm:$0xff]
    %v4283 = vld [vmem:[%s12 + $0x78] sm:$0xff]
    %v4284 = vld [vmem:[%s12 + $0x80] sm:$0xff]
    %v4285 = vld [vmem:[%s12 + $0x88] sm:$0xff]
    %v4286 = vld [vmem:[%s12 + $0x90] sm:$0xff]
    %v4287 = vld [vmem:[%s12 + $0x98] sm:$0xff]
    %v4288 = vld [vmem:[%s12 + $0xa0] sm:$0xff]
    %v4289 = vld [vmem:[%s12 + $0xa8] sm:$0xff]
    %v4290 = vld [vmem:[%s12 + $0xb0] sm:$0xff]
    %v4291 = vld [vmem:[%s12 + $0xb8] sm:$0xff]
    %v4292 = vld [vmem:[%s12 + $0xc0] sm:$0xff]
    %v4293 = vld [vmem:[%s12 + $0xc8] sm:$0xff]
    %v4294 = vld [vmem:[%s12 + $0xd0] sm:$0xff]
    %v4295 = vld [vmem:[%s12 + $0xd8] sm:$0xff]
    %v4296 = vld [vmem:[%s12 + $0xe0] sm:$0xff]
    %v4297 = vld [vmem:[%s12 + $0xe8] sm:$0xff]
    %v4298 = vld [vmem:[%s12 + $0xf0] sm:$0xff]
    %v4299 = vld [vmem:[%s12 + $0xf8] sm:$0xff]
    %4305 = vrot.lane.b32.xlu0 %v4221, 127
    %v4306 = vpop.permute.xlu0 %4305
    %4307 = vrot.lane.b32.xlu0 %v4223, 127
    %v4308 = vpop.permute.xlu0 %4307
    %4309 = vrot.lane.b32.xlu0 %v4262, 127
    %v4310 = vpop.permute.xlu0 %4309
    %4311 = vrot.lane.b32.xlu0 %v4264, 127
    %v4312 = vpop.permute.xlu0 %4311
    %4313 = vrot.lane.b32.xlu0 0.0, 127
    %v4314 = vpop.permute.xlu0 %4313
    %v4315 = vsel %vm228, %v4306, %v4308
    %v4316 = vsel %vm228, %v4308, %v4310
    %v4317 = vsel %vm228, %v4310, %v4312
    %v4318 = vsel %vm228, %v4312, %v4314
    %v4323 = vmax.f32 %v4221, %v4315
    %v4324 = vmax.f32 %v4223, %v4316
    %v4325 = vmax.f32 %v4262, %v4317
    %v4326 = vmax.f32 %v4264, %v4318
    %v4328 = vmax.f32 %v4314, 0.0
    %4334 = vrot.lane.b32.xlu0 %v4323, 112
    %v4335 = vpop.permute.xlu0 %4334
    %4336 = vrot.lane.b32.xlu0 %v4324, 112
    %v4337 = vpop.permute.xlu0 %4336
    %4338 = vrot.lane.b32.xlu0 %v4325, 112
    %v4339 = vpop.permute.xlu0 %4338
    %4340 = vrot.lane.b32.xlu0 %v4326, 112
    %v4341 = vpop.permute.xlu0 %4340
    %4342 = vrot.lane.b32.xlu0 %v4328, 112
    %v4343 = vpop.permute.xlu0 %4342
    %v4344 = vsel %vm3720, %v4335, %v4337
    %v4345 = vsel %vm3720, %v4337, %v4339
    %v4346 = vsel %vm3720, %v4339, %v4341
    %v4347 = vsel %vm3720, %v4341, %v4343
    %v4352 = vmax.f32 %v4323, %v4344
    %v4353 = vmax.f32 %v4324, %v4345
    %v4354 = vmax.f32 %v4325, %v4346
    %v4355 = vmax.f32 %v4326, %v4347
    %4356 = vmatprep.subr.mxu0 0.0
    %4357 = vmatpush1.msra.mxu0 %v4283
    %4358 = vmatprep.subr.mxu0 0.0
    %4359 = vmatpush1.msra.mxu0 %v4282
    %4360 = vmatprep.subr.mxu0 0.0
    %4361 = vmatpush1.msra.mxu0 %v4281
    %4362 = vmatprep.subr.mxu0 0.0
    %4363 = vmatpush1.msra.mxu0 %v4280
    %4364 = vmatprep.subr.mxu0 0.0
    %4365 = vmatpush1.msra.mxu0 %v4279
    %4366 = vmatprep.subr.mxu0 0.0
    %4367 = vmatpush1.msra.mxu0 %v4278
    %4368 = vmatprep.subr.mxu0 0.0
    %4369 = vmatpush1.msra.mxu0 %v4277
    %4370 = vmatprep.subr.mxu0 0.0
    %4371 = vmatpush1.msra.mxu0 %v4276
    %4372 = vmatprep.subr.mxu0 0.0
    %4373 = vmatpush1.msra.mxu0 %v4275
    %4374 = vmatprep.subr.mxu0 0.0
    %4375 = vmatpush1.msra.mxu0 %v4274
    %4376 = vmatprep.subr.mxu0 0.0
    %4377 = vmatpush1.msra.mxu0 %v4273
    %4378 = vmatprep.subr.mxu0 0.0
    %4379 = vmatpush1.msra.mxu0 %v4272
    %4380 = vmatprep.subr.mxu0 0.0
    %4381 = vmatpush1.msra.mxu0 %v4271
    %4382 = vmatprep.subr.mxu0 0.0
    %4383 = vmatpush1.msra.mxu0 %v4270
    %4384 = vmatprep.subr.mxu0 0.0
    %4385 = vmatpush1.msra.mxu0 %v4269
    %4386 = vmatprep.subr.mxu0 0.0
    %4387 = vmatpush1.msra.mxu0 %v4268
    %4388 = vmatprep.subr.mxu0 0.0
    %4389 = vmatpush2.msra.mxu0 %v4299
    %4390 = vmatprep.subr.mxu0 0.0
    %4391 = vmatpush2.msra.mxu0 %v4298
    %4392 = vmatprep.subr.mxu0 0.0
    %4393 = vmatpush2.msra.mxu0 %v4297
    %4394 = vmatprep.subr.mxu0 0.0
    %4395 = vmatpush2.msra.mxu0 %v4296
    %4396 = vmatprep.subr.mxu0 0.0
    %4397 = vmatpush2.msra.mxu0 %v4295
    %4398 = vmatprep.subr.mxu0 0.0
    %4399 = vmatpush2.msra.mxu0 %v4294
    %4400 = vmatprep.subr.mxu0 0.0
    %4401 = vmatpush2.msra.mxu0 %v4293
    %4402 = vmatprep.subr.mxu0 0.0
    %4403 = vmatpush2.msra.mxu0 %v4292
    %4404 = vmatprep.subr.mxu0 0.0
    %4405 = vmatpush2.msra.mxu0 %v4291
    %4406 = vmatprep.subr.mxu0 0.0
    %4407 = vmatpush2.msra.mxu0 %v4290
    %4408 = vmatprep.subr.mxu0 0.0
    %4409 = vmatpush2.msra.mxu0 %v4289
    %4410 = vmatprep.subr.mxu0 0.0
    %4411 = vmatpush2.msra.mxu0 %v4288
    %4412 = vmatprep.subr.mxu0 0.0
    %4413 = vmatpush2.msra.mxu0 %v4287
    %4414 = vmatprep.subr.mxu0 0.0
    %4415 = vmatpush2.msra.mxu0 %v4286
    %4416 = vmatprep.subr.mxu0 0.0
    %4417 = vmatpush2.msra.mxu0 %v4285
    %4418 = vmatprep.subr.mxu0 0.0
    %4419 = vmatpush2.msra.mxu0 %v4284
    %4420 = vmatprep.mubr.f32.mxu0 %v4353
    %4421 = vmatmul.mubr.f32.gmra.mxu0 %v4352
    %v4422 = vpop.f32.mrf.mxu0
    %v4423 = vadd.f32 0.0, %v4422
    %v4424 = vpop.f32.mrf.mxu0
    %4425 = vdwg.mxu0
    %4426 = vmatprep.subr.mxu0 0.0
    %4427 = vmatpush1.msra.mxu0 %v4283
    %4428 = vmatprep.subr.mxu0 0.0
    %4429 = vmatpush1.msra.mxu0 %v4282
    %4430 = vmatprep.subr.mxu0 0.0
    %4431 = vmatpush1.msra.mxu0 %v4281
    %4432 = vmatprep.subr.mxu0 0.0
    %4433 = vmatpush1.msra.mxu0 %v4280
    %4434 = vmatprep.subr.mxu0 0.0
    %4435 = vmatpush1.msra.mxu0 %v4279
    %4436 = vmatprep.subr.mxu0 0.0
    %4437 = vmatpush1.msra.mxu0 %v4278
    %4438 = vmatprep.subr.mxu0 0.0
    %4439 = vmatpush1.msra.mxu0 %v4277
    %4440 = vmatprep.subr.mxu0 0.0
    %4441 = vmatpush1.msra.mxu0 %v4276
    %4442 = vmatprep.subr.mxu0 0.0
    %4443 = vmatpush1.msra.mxu0 %v4275
    %4444 = vmatprep.subr.mxu0 0.0
    %4445 = vmatpush1.msra.mxu0 %v4274
    %4446 = vmatprep.subr.mxu0 0.0
    %4447 = vmatpush1.msra.mxu0 %v4273
    %4448 = vmatprep.subr.mxu0 0.0
    %4449 = vmatpush1.msra.mxu0 %v4272
    %4450 = vmatprep.subr.mxu0 0.0
    %4451 = vmatpush1.msra.mxu0 %v4271
    %4452 = vmatprep.subr.mxu0 0.0
    %4453 = vmatpush1.msra.mxu0 %v4270
    %4454 = vmatprep.subr.mxu0 0.0
    %4455 = vmatpush1.msra.mxu0 %v4269
    %4456 = vmatprep.subr.mxu0 0.0
    %4457 = vmatpush1.msra.mxu0 %v4268
    %4458 = vmatprep.subr.mxu0 0.0
    %4459 = vmatpush2.msra.mxu0 %v4299
    %4460 = vmatprep.subr.mxu0 0.0
    %4461 = vmatpush2.msra.mxu0 %v4298
    %4462 = vmatprep.subr.mxu0 0.0
    %4463 = vmatpush2.msra.mxu0 %v4297
    %4464 = vmatprep.subr.mxu0 0.0
    %4465 = vmatpush2.msra.mxu0 %v4296
    %4466 = vmatprep.subr.mxu0 0.0
    %4467 = vmatpush2.msra.mxu0 %v4295
    %4468 = vmatprep.subr.mxu0 0.0
    %4469 = vmatpush2.msra.mxu0 %v4294
    %4470 = vmatprep.subr.mxu0 0.0
    %4471 = vmatpush2.msra.mxu0 %v4293
    %4472 = vmatprep.subr.mxu0 0.0
    %4473 = vmatpush2.msra.mxu0 %v4292
    %4474 = vmatprep.subr.mxu0 0.0
    %4475 = vmatpush2.msra.mxu0 %v4291
    %4476 = vmatprep.subr.mxu0 0.0
    %4477 = vmatpush2.msra.mxu0 %v4290
    %4478 = vmatprep.subr.mxu0 0.0
    %4479 = vmatpush2.msra.mxu0 %v4289
    %4480 = vmatprep.subr.mxu0 0.0
    %4481 = vmatpush2.msra.mxu0 %v4288
    %4482 = vmatprep.subr.mxu0 0.0
    %4483 = vmatpush2.msra.mxu0 %v4287
    %4484 = vmatprep.subr.mxu0 0.0
    %4485 = vmatpush2.msra.mxu0 %v4286
    %4486 = vmatprep.subr.mxu0 0.0
    %4487 = vmatpush2.msra.mxu0 %v4285
    %4488 = vmatprep.subr.mxu0 0.0
    %4489 = vmatpush2.msra.mxu0 %v4284
    %4490 = vmatprep.mubr.f32.mxu0 %v4355
    %4491 = vmatmul.mubr.f32.gmra.mxu0 %v4354
    %v4492 = vpop.f32.mrf.mxu0
    %v4493 = vadd.f32 0.0, %v4492
    %v4494 = vpop.f32.mrf.mxu0
    %4495 = vdwg.mxu0
    %4497 = vrot.lane.b32.xlu0 %v4493, 49
    %v4498 = vpop.permute.xlu0 %4497
    %vm4500 = vcmask 400384
    %v4501 = vsel %vm4500, %v4423, %v4498
    %v4503 = vrot.slane %v4501, 1
    %4504 = vrot.lane.b32.xlu0 %v4503, 49
    %v4505 = vpop.permute.xlu0 %4504
    %v4507 = vrot.slane %v4501, 2
    %4508 = vrot.lane.b32.xlu0 %v4507, 98
    %v4509 = vpop.permute.xlu0 %4508
    %v4511 = vrot.slane %v4501, 3
    %4512 = vrot.lane.b32.xlu0 %v4511, 19
    %v4513 = vpop.permute.xlu0 %4512
    %v4515 = vrot.slane %v4501, 4
    %4516 = vrot.lane.b32.xlu0 %v4515, 68
    %v4517 = vpop.permute.xlu0 %4516
    %v4519 = vrot.slane %v4501, 5
    %4520 = vrot.lane.b32.xlu0 %v4519, 117
    %v4521 = vpop.permute.xlu0 %4520
    %v4523 = vrot.slane %v4501, 6
    %4524 = vrot.lane.b32.xlu0 %v4523, 38
    %v4525 = vpop.permute.xlu0 %4524
    %v4527 = vrot.slane %v4501, 7
    %4528 = vrot.lane.b32.xlu0 %v4527, 87
    %v4529 = vpop.permute.xlu0 %4528
    %v4531 = vsel %vm4500, %v4501, %v4505
    %v4532 = vsel %vm378, %v4531, %v4509
    %vm4533 = vcmask 154624
    %v4534 = vsel %vm4533, %v4509, %v4513
    %v4535 = vsel %vm603, %v4534, %v4517
    %vm4536 = vcmask 957440
    %v4537 = vsel %vm4536, %v4535, %v4521
    %vm4538 = vcmask 310272
    %v4539 = vsel %vm4538, %v4521, %v4525
    %vm4540 = vcmask 711680
    %v4541 = vsel %vm4540, %v4539, %v4529
    %4542 = vrot.lane.b32.xlu0 %v4501, 79
    %v4543 = vpop.permute.xlu0 %4542
    %4546 = vrot.lane.b32.xlu0 %v4507, 49
    %v4547 = vpop.permute.xlu0 %4546
    %4549 = vrot.lane.b32.xlu0 %v4511, 98
    %v4550 = vpop.permute.xlu0 %4549
    %4552 = vrot.lane.b32.xlu0 %v4515, 19
    %v4553 = vpop.permute.xlu0 %4552
    %4555 = vrot.lane.b32.xlu0 %v4519, 68
    %v4556 = vpop.permute.xlu0 %4555
    %4558 = vrot.lane.b32.xlu0 %v4523, 117
    %v4559 = vpop.permute.xlu0 %4558
    %4561 = vrot.lane.b32.xlu0 %v4527, 38
    %v4562 = vpop.permute.xlu0 %4561
    %v4564 = vsel %vm4500, %v4543, %v4503
    %v4565 = vsel %vm378, %v4564, %v4547
    %v4566 = vsel %vm4533, %v4547, %v4550
    %v4567 = vsel %vm603, %v4566, %v4553
    %v4568 = vsel %vm4536, %v4567, %v4556
    %v4569 = vsel %vm4538, %v4556, %v4559
    %v4570 = vsel %vm4540, %v4569, %v4562
    %v4574 = vrot.slane %v4565, 7
    %v4575 = vrot.slane %v4568, 7
    %v4576 = vrot.slane %v4570, 7
    %v4577 = vrot.slane %v4562, 7
    %v4582 = vsel %vm768, %v4532, %v4574
    %v4583 = vsel %vm768, %v4537, %v4575
    %v4584 = vsel %vm768, %v4541, %v4576
    %v4585 = vsel %vm768, %v4529, %v4577
    %v4586 = vld [vmem:[%s13] sm:$0xff]
    %v4587 = vld [vmem:[%s13 + $0x8] sm:$0xff]
    %v4588 = vld [vmem:[%s13 + $0x10] sm:$0xff]
    %v4589 = vld [vmem:[%s13 + $0x18] sm:$0xff]
    %v4590 = vld [vmem:[%s13 + $0x20] sm:$0xff]
    %v4591 = vld [vmem:[%s13 + $0x28] sm:$0xff]
    %v4592 = vld [vmem:[%s13 + $0x30] sm:$0xff]
    %v4593 = vld [vmem:[%s13 + $0x38] sm:$0xff]
    %v4594 = vld [vmem:[%s13 + $0x40] sm:$0xff]
    %v4595 = vld [vmem:[%s13 + $0x48] sm:$0xff]
    %v4596 = vld [vmem:[%s13 + $0x50] sm:$0xff]
    %v4597 = vld [vmem:[%s13 + $0x58] sm:$0xff]
    %v4598 = vld [vmem:[%s13 + $0x60] sm:$0xff]
    %v4599 = vld [vmem:[%s13 + $0x68] sm:$0xff]
    %v4600 = vld [vmem:[%s13 + $0x70] sm:$0xff]
    %v4601 = vld [vmem:[%s13 + $0x78] sm:$0xff]
    %v4602 = vld [vmem:[%s13 + $0x80] sm:$0xff]
    %v4603 = vld [vmem:[%s13 + $0x88] sm:$0xff]
    %v4604 = vld [vmem:[%s13 + $0x90] sm:$0xff]
    %v4605 = vld [vmem:[%s13 + $0x98] sm:$0xff]
    %v4606 = vld [vmem:[%s13 + $0xa0] sm:$0xff]
    %v4607 = vld [vmem:[%s13 + $0xa8] sm:$0xff]
    %v4608 = vld [vmem:[%s13 + $0xb0] sm:$0xff]
    %v4609 = vld [vmem:[%s13 + $0xb8] sm:$0xff]
    %v4610 = vld [vmem:[%s13 + $0xc0] sm:$0xff]
    %v4611 = vld [vmem:[%s13 + $0xc8] sm:$0xff]
    %v4612 = vld [vmem:[%s13 + $0xd0] sm:$0xff]
    %v4613 = vld [vmem:[%s13 + $0xd8] sm:$0xff]
    %v4614 = vld [vmem:[%s13 + $0xe0] sm:$0xff]
    %v4615 = vld [vmem:[%s13 + $0xe8] sm:$0xff]
    %v4616 = vld [vmem:[%s13 + $0xf0] sm:$0xff]
    %v4617 = vld [vmem:[%s13 + $0xf8] sm:$0xff]
    %v4618 = vld [vmem:[%s13 + $0x100] sm:$0xff]
    %v4619 = vld [vmem:[%s13 + $0x108] sm:$0xff]
    %v4620 = vld [vmem:[%s13 + $0x110] sm:$0xff]
    %v4621 = vld [vmem:[%s13 + $0x118] sm:$0xff]
    %v4622 = vld [vmem:[%s13 + $0x120] sm:$0xff]
    %v4623 = vld [vmem:[%s13 + $0x128] sm:$0xff]
    %v4624 = vld [vmem:[%s13 + $0x130] sm:$0xff]
    %v4625 = vld [vmem:[%s13 + $0x138] sm:$0xff]
    %v4626 = vld [vmem:[%s13 + $0x140] sm:$0xff]
    %v4627 = vld [vmem:[%s13 + $0x148] sm:$0xff]
    %v4628 = vld [vmem:[%s13 + $0x150] sm:$0xff]
    %v4629 = vld [vmem:[%s13 + $0x158] sm:$0xff]
    %v4630 = vld [vmem:[%s13 + $0x160] sm:$0xff]
    %v4631 = vld [vmem:[%s13 + $0x168] sm:$0xff]
    %v4632 = vld [vmem:[%s13 + $0x170] sm:$0xff]
    %v4633 = vld [vmem:[%s13 + $0x178] sm:$0xff]
    %v4634 = vld [vmem:[%s13 + $0x180] sm:$0xff]
    %v4635 = vld [vmem:[%s14] sm:$0x1]
    %v4637 = vlaneseq
    %v4638 = vshrl.u32 %v4637, 7
    %v4639 = vsub.s32 0, %v4638
    %v4640 = vrot.slane %v4635, %v4639
    %v4643 = vsel %vm2508, %v4585, 0
    %4645 = vmatprep.subr.mxu0 0.0
    %4646 = vmatpush1.msra.mxu0 %v4601
    %4647 = vmatprep.subr.mxu0 0.0
    %4648 = vmatpush1.msra.mxu0 %v4600
    %4649 = vmatprep.subr.mxu0 0.0
    %4650 = vmatpush1.msra.mxu0 %v4599
    %4651 = vmatprep.subr.mxu0 0.0
    %4652 = vmatpush1.msra.mxu0 %v4598
    %4653 = vmatprep.subr.mxu0 0.0
    %4654 = vmatpush1.msra.mxu0 %v4597
    %4655 = vmatprep.subr.mxu0 0.0
    %4656 = vmatpush1.msra.mxu0 %v4596
    %4657 = vmatprep.subr.mxu0 0.0
    %4658 = vmatpush1.msra.mxu0 %v4595
    %4659 = vmatprep.subr.mxu0 0.0
    %4660 = vmatpush1.msra.mxu0 %v4594
    %4661 = vmatprep.subr.mxu0 0.0
    %4662 = vmatpush1.msra.mxu0 %v4593
    %4663 = vmatprep.subr.mxu0 0.0
    %4664 = vmatpush1.msra.mxu0 %v4592
    %4665 = vmatprep.subr.mxu0 0.0
    %4666 = vmatpush1.msra.mxu0 %v4591
    %4667 = vmatprep.subr.mxu0 0.0
    %4668 = vmatpush1.msra.mxu0 %v4590
    %4669 = vmatprep.subr.mxu0 0.0
    %4670 = vmatpush1.msra.mxu0 %v4589
    %4671 = vmatprep.subr.mxu0 0.0
    %4672 = vmatpush1.msra.mxu0 %v4588
    %4673 = vmatprep.subr.mxu0 0.0
    %4674 = vmatpush1.msra.mxu0 %v4587
    %4675 = vmatprep.subr.mxu0 0.0
    %4676 = vmatpush1.msra.mxu0 %v4586
    %4677 = vmatprep.subr.mxu0 0.0
    %4678 = vmatpush2.msra.mxu0 %v4617
    %4679 = vmatprep.subr.mxu0 0.0
    %4680 = vmatpush2.msra.mxu0 %v4616
    %4681 = vmatprep.subr.mxu0 0.0
    %4682 = vmatpush2.msra.mxu0 %v4615
    %4683 = vmatprep.subr.mxu0 0.0
    %4684 = vmatpush2.msra.mxu0 %v4614
    %4685 = vmatprep.subr.mxu0 0.0
    %4686 = vmatpush2.msra.mxu0 %v4613
    %4687 = vmatprep.subr.mxu0 0.0
    %4688 = vmatpush2.msra.mxu0 %v4612
    %4689 = vmatprep.subr.mxu0 0.0
    %4690 = vmatpush2.msra.mxu0 %v4611
    %4691 = vmatprep.subr.mxu0 0.0
    %4692 = vmatpush2.msra.mxu0 %v4610
    %4693 = vmatprep.subr.mxu0 0.0
    %4694 = vmatpush2.msra.mxu0 %v4609
    %4695 = vmatprep.subr.mxu0 0.0
    %4696 = vmatpush2.msra.mxu0 %v4608
    %4697 = vmatprep.subr.mxu0 0.0
    %4698 = vmatpush2.msra.mxu0 %v4607
    %4699 = vmatprep.subr.mxu0 0.0
    %4700 = vmatpush2.msra.mxu0 %v4606
    %4701 = vmatprep.subr.mxu0 0.0
    %4702 = vmatpush2.msra.mxu0 %v4605
    %4703 = vmatprep.subr.mxu0 0.0
    %4704 = vmatpush2.msra.mxu0 %v4604
    %4705 = vmatprep.subr.mxu0 0.0
    %4706 = vmatpush2.msra.mxu0 %v4603
    %4707 = vmatprep.subr.mxu0 0.0
    %4708 = vmatpush2.msra.mxu0 %v4602
    %4709 = vmatprep.mubr.f32.mxu0 %v4583
    %4710 = vmatmul.mubr.f32.gmra.mxu0 %v4582
    %v4711 = vpop.f32.mrf.mxu0
    %v4712 = vadd.f32 %v4640, %v4711
    %v4713 = vpop.f32.mrf.mxu0
    %4714 = vdwg.mxu0
    %4715 = vmatprep.subr.mxu0 0.0
    %4716 = vmatpush1.msra.mxu0 %v4633
    %4717 = vmatprep.subr.mxu0 0.0
    %4718 = vmatpush1.msra.mxu0 %v4632
    %4719 = vmatprep.subr.mxu0 0.0
    %4720 = vmatpush1.msra.mxu0 %v4631
    %4721 = vmatprep.subr.mxu0 0.0
    %4722 = vmatpush1.msra.mxu0 %v4630
    %4723 = vmatprep.subr.mxu0 0.0
    %4724 = vmatpush1.msra.mxu0 %v4629
    %4725 = vmatprep.subr.mxu0 0.0
    %4726 = vmatpush1.msra.mxu0 %v4628
    %4727 = vmatprep.subr.mxu0 0.0
    %4728 = vmatpush1.msra.mxu0 %v4627
    %4729 = vmatprep.subr.mxu0 0.0
    %4730 = vmatpush1.msra.mxu0 %v4626
    %4731 = vmatprep.subr.mxu0 0.0
    %4732 = vmatpush1.msra.mxu0 %v4625
    %4733 = vmatprep.subr.mxu0 0.0
    %4734 = vmatpush1.msra.mxu0 %v4624
    %4735 = vmatprep.subr.mxu0 0.0
    %4736 = vmatpush1.msra.mxu0 %v4623
    %4737 = vmatprep.subr.mxu0 0.0
    %4738 = vmatpush1.msra.mxu0 %v4622
    %4739 = vmatprep.subr.mxu0 0.0
    %4740 = vmatpush1.msra.mxu0 %v4621
    %4741 = vmatprep.subr.mxu0 0.0
    %4742 = vmatpush1.msra.mxu0 %v4620
    %4743 = vmatprep.subr.mxu0 0.0
    %4744 = vmatpush1.msra.mxu0 %v4619
    %4745 = vmatprep.subr.mxu0 0.0
    %4746 = vmatpush1.msra.mxu0 %v4618
    %4747 = vmatprep.subr.mxu0 0.0
    %4748 = vmatpush2.msra.mxu0 0.0
    %4749 = vmatprep.subr.mxu0 0.0
    %4750 = vmatpush2.msra.mxu0 0.0
    %4751 = vmatprep.subr.mxu0 0.0
    %4752 = vmatpush2.msra.mxu0 0.0
    %4753 = vmatprep.subr.mxu0 0.0
    %4754 = vmatpush2.msra.mxu0 0.0
    %4755 = vmatprep.subr.mxu0 0.0
    %4756 = vmatpush2.msra.mxu0 0.0
    %4757 = vmatprep.subr.mxu0 0.0
    %4758 = vmatpush2.msra.mxu0 0.0
    %4759 = vmatprep.subr.mxu0 0.0
    %4760 = vmatpush2.msra.mxu0 0.0
    %4761 = vmatprep.subr.mxu0 0.0
    %4762 = vmatpush2.msra.mxu0 0.0
    %4763 = vmatprep.subr.mxu0 0.0
    %4764 = vmatpush2.msra.mxu0 0.0
    %4765 = vmatprep.subr.mxu0 0.0
    %4766 = vmatpush2.msra.mxu0 0.0
    %4767 = vmatprep.subr.mxu0 0.0
    %4768 = vmatpush2.msra.mxu0 0.0
    %4769 = vmatprep.subr.mxu0 0.0
    %4770 = vmatpush2.msra.mxu0 0.0
    %4771 = vmatprep.subr.mxu0 0.0
    %4772 = vmatpush2.msra.mxu0 0.0
    %4773 = vmatprep.subr.mxu0 0.0
    %4774 = vmatpush2.msra.mxu0 0.0
    %4775 = vmatprep.subr.mxu0 0.0
    %4776 = vmatpush2.msra.mxu0 0.0
    %4777 = vmatprep.subr.mxu0 0.0
    %4778 = vmatpush2.msra.mxu0 %v4634
    %4779 = vmatprep.mubr.f32.mxu0 %v4643
    %4780 = vmatmul.mubr.f32.gmra.mxu0 %v4584
    %v4781 = vpop.f32.mrf.mxu0
    %v4782 = vadd.f32 %v4712, %v4781
    %v4783 = vpop.f32.mrf.mxu0
    %4784 = vdwg.mxu0
    %vm4785 = vcmask 74752
    %4786 = vst.msk [vmem:[#allocation2] sm:$0x3] %vm4785, %v4782
    // Predicated region
    $region62: #{mnist_model_v1_forward.1} parent=1 // pred_check
      _
    $region63: #{mnist_model_v1_forward.1} parent=1 // pred_check_branch
      %4788 = sbr.rel (0) target = $region65
    $region64: #{mnist_model_v1_forward.1} parent=1 // pred_region
      %s4790 = ssub.s32 32, 32
      %4791 = vsyncadd [#allocation3], %s4790
      %s4793 = sshll.u32 [#allocation2], 4
      %s4794 = int_to_ptr.vmem [resolvable:$true] %s4793
      %4796 = dma.vmem_to_hbm [thread:$0]  %s4794, 32, %s15, [#allocation3]
    $region65: #{mnist_model_v1_forward.1} parent=1 // pred_fallthru
      _
    // Predicated region
    $region66: #{mnist_model_v1_forward.1} parent=1 // pred_check
      _
    $region67: #{mnist_model_v1_forward.1} parent=1 // pred_check_branch
      %4798 = sbr.rel (0) target = $region69
    $region68: #{mnist_model_v1_forward.1} parent=1 // pred_region
      %4799 = dma.done [#allocation3], 32
    $region69: #{mnist_model_v1_forward.1} parent=1 // pred_fallthru
      _
    %4800 = vsyncpa [#allocation3], 1

</llo_original>
